<compile_context>
chip_gen: v7x
topology: tpu7x:2x2x1
jax: 0.10.0
libtpu: 0.0.40
codegen_flags: <defaults>
</compile_context>

<pallas_src>
import functools
import math

import jax
import jax.numpy as jnp
from jax import lax
from jax.experimental import pallas as pl
from jax.experimental.pallas import tpu as pltpu

_LANE = 128


def conv2d_ad_kernel(x_ref, w_ref, out_ref, *, H, W, C):
    """One grid step == one image: fused 3x3 conv as 9 shifted MXU matmuls.

    x_ref  : (1, H+2, W+2, C)  zero-padded NHWC image tile (VMEM)
    w_ref  : (9, C, Op)        folded weights, (kh,kw)-major (VMEM, resident)
    out_ref: (1, H, W, Op)     output tile (Op == Cout, or Cout padded to 128 when cheap)
    """
    acc = None
    for kh in range(3):
        for kw in range(3):
            # Static shifted window -> (H*W, C); merge of leading dims keeps the minor
            # (lane) dim untouched, so the reshape is a cheap relayout.
            xs = x_ref[0, kh:kh + H, kw:kw + W, :].reshape(H * W, C)
            contrib = jnp.dot(xs, w_ref[kh * 3 + kw],
                              preferred_element_type=jnp.float32)
            acc = contrib if acc is None else acc + contrib
    out_ref[0] = acc.reshape(H, W, acc.shape[-1]).astype(out_ref.dtype)


def conv2d_ad_forward(x_nchw, weight_oihw, theta=0.7, compute_dtype=jnp.bfloat16):
    """Conv2d_ad.forward for kernel_size=3, stride=1, padding=1, groups=1, bias=False."""
    N, C, H, W = x_nchw.shape
    O, Cw, kh, kw = weight_oihw.shape
    assert (kh, kw) == (3, 3) and Cw == C, "module uses 3x3, stride=1, pad=1, groups=1"

    # Lane-dense stores only when the padding is cheap (<= 12.5% extra HBM write bytes).
    Ofull = pl.cdiv(O, _LANE) * _LANE
    Opad = Ofull if (Ofull - O) * 8 <= O else O

    # ---- glue: fold the two linear branches into one effective 3x3 kernel -------
    kdiff = jnp.sum(weight_oihw, axis=(2, 3))                        # (O, C)
    w_eff = weight_oihw - theta * kdiff[:, :, None, None] / 9.0      # (O, C, 3, 3)
    w_eff = jnp.transpose(w_eff, (2, 3, 1, 0)).reshape(9, C, O)      # (kh,kw)-major, c then o
    if Opad != O:
        w_eff = jnp.pad(w_eff, ((0, 0), (0, 0), (0, Opad - O)))      # cheap lane padding
    w_eff = w_eff.astype(compute_dtype)

    # NCHW -> NHWC once, zero-pad the spatial halo once (channels land in lanes).
    x_pad = jnp.pad(jnp.transpose(x_nchw, (0, 2, 3, 1)),
                    ((0, 0), (1, 1), (1, 1), (0, 0))).astype(compute_dtype)

    # VMEM budget: double-buffered x/out blocks + resident weights + f32 accumulator.
    itb = jnp.dtype(compute_dtype).itemsize
    otb = jnp.dtype(x_nchw.dtype).itemsize
    est = (2 * (H + 2) * (W + 2) * C * itb
           + 2 * H * W * Opad * otb
           + 9 * C * Opad * itb
           + H * W * Opad * 4
           + (4 << 20))
    vmem_limit = int(min(max(est, 16 * 1024 * 1024), 32 * 1024 * 1024))

    out = pl.pallas_call(
        functools.partial(conv2d_ad_kernel, H=H, W=W, C=C),
        out_shape=jax.ShapeDtypeStruct((N, H, W, Opad), x_nchw.dtype),
        grid_spec=pltpu.PrefetchScalarGridSpec(
            num_scalar_prefetch=0,
            grid=(N,),                                               # images independent
            in_specs=[
                pl.BlockSpec((1, H + 2, W + 2, C), lambda n: (n, 0, 0, 0)),
                pl.BlockSpec((9, C, Opad), lambda n: (0, 0, 0)),     # weights resident
            ],
            out_specs=pl.BlockSpec((1, H, W, Opad), lambda n: (n, 0, 0, 0)),
        ),
        compiler_params=pltpu.CompilerParams(
            dimension_semantics=("parallel",),                       # megacore over images
            vmem_limit_bytes=vmem_limit,
        ),
    )(x_pad, w_eff)

    if Opad != O:
        out = out[..., :O]                                           # drop lane padding
    return jnp.transpose(out, (0, 3, 1, 2))                          # NHWC -> NCHW (interface)


def conv2d_ad_reference(x, weight, theta):
    """Pure-JAX reference mirroring the PyTorch forward (NCHW)."""
    dn = ("NCHW", "OIHW", "NCHW")
    out_normal = lax.conv_general_dilated(
        x, weight, window_strides=(1, 1), padding=((1, 1), (1, 1)), dimension_numbers=dn
    )
    x_sum = lax.reduce_window(
        x, 0.0, lax.add, (1, 1, 3, 3), (1, 1, 1, 1),
        ((0, 0), (0, 0), (1, 1), (1, 1)),
    )
    x_avg = x_sum / 9.0   # AvgPool2d(3, stride=1, pad=1), count_include_pad=True
    kdiff = jnp.sum(weight, axis=(2, 3))[:, :, None, None]
    out_diff = lax.conv_general_dilated(
        x_avg, kdiff, window_strides=(1, 1), padding="VALID", dimension_numbers=dn
    )
    return out_normal - theta * out_diff


if __name__ == "__main__":
    key = jax.random.PRNGKey(0)
    kx, kwt = jax.random.split(key)

    N, Cin, H, W, Cout = 2, 4, 16, 16, 8
    theta = 0.7

    x = jax.random.normal(kx, (N, Cin, H, W), dtype=jnp.float32)
    # Deterministic Conv2d-style init (kaiming-uniform bound), bias=False.
    bound = 1.0 / math.sqrt(Cin * 3 * 3)
    weight = jax.random.uniform(
        kwt, (Cout, Cin, 3, 3), minval=-bound, maxval=bound, dtype=jnp.float32
    )

    ref = conv2d_ad_reference(x, weight, theta)

    # f32 compute path: tight agreement with the reference.
    out_f32 = jax.block_until_ready(
        conv2d_ad_forward(x, weight, theta=theta, compute_dtype=jnp.float32))
    assert out_f32.shape == ref.shape == (N, Cout, H, W), (out_f32.shape, ref.shape)
    err32 = float(jnp.max(jnp.abs(out_f32 - ref)))
    assert jnp.allclose(out_f32, ref, atol=1e-4, rtol=1e-4), err32

    # bf16 compute path (default, halves HBM traffic); f32 accumulation, looser tolerance.
    out_bf16 = jax.block_until_ready(conv2d_ad_forward(x, weight, theta=theta))
    err16 = float(jnp.max(jnp.abs(out_bf16 - ref)))
    assert jnp.allclose(out_bf16, ref, atol=5e-2, rtol=5e-2), err16

    print("KERNEL_OK")
</pallas_src>

<mosaic_0001>
module attributes {stable_mosaic.version = 11 : i64} {
  func.func @conv2d_ad_kernel(%arg0: i32, %arg1: memref<1x18x18x4xf32, #tpu.memory_space<vmem>>, %arg2: memref<9x4x8xf32, #tpu.memory_space<vmem>>, %arg3: memref<1x16x16x8xf32, #tpu.memory_space<vmem>>) attributes {dimension_semantics = [#tpu.dimension_semantics<parallel>], iteration_bounds = array<i64: 2>, scalar_prefetch = 0 : i64, scratch_operands = 0 : i64, tpu.core_type = #tpu.core_type<tc>, window_params = [{transform_indices = @transform_0, window_bounds = array<i64: 1, 18, 18, 4>}, {pipeline_mode = #tpu.pipeline_mode<synchronous>, transform_indices = @transform_1, window_bounds = array<i64: 9, 4, 8>}, {transform_indices = @transform_2, window_bounds = array<i64: 1, 16, 16, 8>}]} {
    %c0 = arith.constant 0 : index
    %c0_0 = arith.constant 0 : index
    %c0_1 = arith.constant 0 : index
    %c0_2 = arith.constant 0 : index
    %0 = vector.load %arg1[%c0, %c0_0, %c0_1, %c0_2] : memref<1x18x18x4xf32, #tpu.memory_space<vmem>>, vector<1x16x16x4xf32>
    %1 = vector.shape_cast %0 : vector<1x16x16x4xf32> to vector<16x16x4xf32>
    %2 = vector.shape_cast %1 : vector<16x16x4xf32> to vector<256x4xf32>
    %c0_3 = arith.constant 0 : index
    %c0_4 = arith.constant 0 : index
    %c0_5 = arith.constant 0 : index
    %3 = vector.load %arg2[%c0_3, %c0_4, %c0_5] : memref<9x4x8xf32, #tpu.memory_space<vmem>>, vector<1x4x8xf32>
    %4 = vector.shape_cast %3 : vector<1x4x8xf32> to vector<4x8xf32>
    %cst = arith.constant dense<0.000000e+00> : vector<256x8xf32>
    %5 = tpu.matmul %2, %4, %cst {dimension_numbers = #tpu.dot_dimension_numbers<[1], [0], [0], [1], [0, 0, 1, 1], [], []>} : vector<256x4xf32>, vector<4x8xf32>, vector<256x8xf32> -> vector<256x8xf32>
    %c0_6 = arith.constant 0 : index
    %c0_7 = arith.constant 0 : index
    %c1 = arith.constant 1 : index
    %c0_8 = arith.constant 0 : index
    %6 = vector.load %arg1[%c0_6, %c0_7, %c1, %c0_8] : memref<1x18x18x4xf32, #tpu.memory_space<vmem>>, vector<1x16x16x4xf32>
    %7 = vector.shape_cast %6 : vector<1x16x16x4xf32> to vector<16x16x4xf32>
    %8 = vector.shape_cast %7 : vector<16x16x4xf32> to vector<256x4xf32>
    %c1_9 = arith.constant 1 : index
    %c0_10 = arith.constant 0 : index
    %c0_11 = arith.constant 0 : index
    %9 = vector.load %arg2[%c1_9, %c0_10, %c0_11] : memref<9x4x8xf32, #tpu.memory_space<vmem>>, vector<1x4x8xf32>
    %10 = vector.shape_cast %9 : vector<1x4x8xf32> to vector<4x8xf32>
    %cst_12 = arith.constant dense<0.000000e+00> : vector<256x8xf32>
    %11 = tpu.matmul %8, %10, %cst_12 {dimension_numbers = #tpu.dot_dimension_numbers<[1], [0], [0], [1], [0, 0, 1, 1], [], []>} : vector<256x4xf32>, vector<4x8xf32>, vector<256x8xf32> -> vector<256x8xf32>
    %12 = arith.addf %5, %11 : vector<256x8xf32>
    %c0_13 = arith.constant 0 : index
    %c0_14 = arith.constant 0 : index
    %c2 = arith.constant 2 : index
    %c0_15 = arith.constant 0 : index
    %13 = vector.load %arg1[%c0_13, %c0_14, %c2, %c0_15] : memref<1x18x18x4xf32, #tpu.memory_space<vmem>>, vector<1x16x16x4xf32>
    %14 = vector.shape_cast %13 : vector<1x16x16x4xf32> to vector<16x16x4xf32>
    %15 = vector.shape_cast %14 : vector<16x16x4xf32> to vector<256x4xf32>
    %c2_16 = arith.constant 2 : index
    %c0_17 = arith.constant 0 : index
    %c0_18 = arith.constant 0 : index
    %16 = vector.load %arg2[%c2_16, %c0_17, %c0_18] : memref<9x4x8xf32, #tpu.memory_space<vmem>>, vector<1x4x8xf32>
    %17 = vector.shape_cast %16 : vector<1x4x8xf32> to vector<4x8xf32>
    %cst_19 = arith.constant dense<0.000000e+00> : vector<256x8xf32>
    %18 = tpu.matmul %15, %17, %cst_19 {dimension_numbers = #tpu.dot_dimension_numbers<[1], [0], [0], [1], [0, 0, 1, 1], [], []>} : vector<256x4xf32>, vector<4x8xf32>, vector<256x8xf32> -> vector<256x8xf32>
    %19 = arith.addf %12, %18 : vector<256x8xf32>
    %c0_20 = arith.constant 0 : index
    %c1_21 = arith.constant 1 : index
    %c0_22 = arith.constant 0 : index
    %c0_23 = arith.constant 0 : index
    %20 = vector.load %arg1[%c0_20, %c1_21, %c0_22, %c0_23] : memref<1x18x18x4xf32, #tpu.memory_space<vmem>>, vector<1x16x16x4xf32>
    %21 = vector.shape_cast %20 : vector<1x16x16x4xf32> to vector<16x16x4xf32>
    %22 = vector.shape_cast %21 : vector<16x16x4xf32> to vector<256x4xf32>
    %c3 = arith.constant 3 : index
    %c0_24 = arith.constant 0 : index
    %c0_25 = arith.constant 0 : index
    %23 = vector.load %arg2[%c3, %c0_24, %c0_25] : memref<9x4x8xf32, #tpu.memory_space<vmem>>, vector<1x4x8xf32>
    %24 = vector.shape_cast %23 : vector<1x4x8xf32> to vector<4x8xf32>
    %cst_26 = arith.constant dense<0.000000e+00> : vector<256x8xf32>
    %25 = tpu.matmul %22, %24, %cst_26 {dimension_numbers = #tpu.dot_dimension_numbers<[1], [0], [0], [1], [0, 0, 1, 1], [], []>} : vector<256x4xf32>, vector<4x8xf32>, vector<256x8xf32> -> vector<256x8xf32>
    %26 = arith.addf %19, %25 : vector<256x8xf32>
    %c0_27 = arith.constant 0 : index
    %c1_28 = arith.constant 1 : index
    %c1_29 = arith.constant 1 : index
    %c0_30 = arith.constant 0 : index
    %27 = vector.load %arg1[%c0_27, %c1_28, %c1_29, %c0_30] : memref<1x18x18x4xf32, #tpu.memory_space<vmem>>, vector<1x16x16x4xf32>
    %28 = vector.shape_cast %27 : vector<1x16x16x4xf32> to vector<16x16x4xf32>
    %29 = vector.shape_cast %28 : vector<16x16x4xf32> to vector<256x4xf32>
    %c4 = arith.constant 4 : index
    %c0_31 = arith.constant 0 : index
    %c0_32 = arith.constant 0 : index
    %30 = vector.load %arg2[%c4, %c0_31, %c0_32] : memref<9x4x8xf32, #tpu.memory_space<vmem>>, vector<1x4x8xf32>
    %31 = vector.shape_cast %30 : vector<1x4x8xf32> to vector<4x8xf32>
    %cst_33 = arith.constant dense<0.000000e+00> : vector<256x8xf32>
    %32 = tpu.matmul %29, %31, %cst_33 {dimension_numbers = #tpu.dot_dimension_numbers<[1], [0], [0], [1], [0, 0, 1, 1], [], []>} : vector<256x4xf32>, vector<4x8xf32>, vector<256x8xf32> -> vector<256x8xf32>
    %33 = arith.addf %26, %32 : vector<256x8xf32>
    %c0_34 = arith.constant 0 : index
    %c1_35 = arith.constant 1 : index
    %c2_36 = arith.constant 2 : index
    %c0_37 = arith.constant 0 : index
    %34 = vector.load %arg1[%c0_34, %c1_35, %c2_36, %c0_37] : memref<1x18x18x4xf32, #tpu.memory_space<vmem>>, vector<1x16x16x4xf32>
    %35 = vector.shape_cast %34 : vector<1x16x16x4xf32> to vector<16x16x4xf32>
    %36 = vector.shape_cast %35 : vector<16x16x4xf32> to vector<256x4xf32>
    %c5 = arith.constant 5 : index
    %c0_38 = arith.constant 0 : index
    %c0_39 = arith.constant 0 : index
    %37 = vector.load %arg2[%c5, %c0_38, %c0_39] : memref<9x4x8xf32, #tpu.memory_space<vmem>>, vector<1x4x8xf32>
    %38 = vector.shape_cast %37 : vector<1x4x8xf32> to vector<4x8xf32>
    %cst_40 = arith.constant dense<0.000000e+00> : vector<256x8xf32>
    %39 = tpu.matmul %36, %38, %cst_40 {dimension_numbers = #tpu.dot_dimension_numbers<[1], [0], [0], [1], [0, 0, 1, 1], [], []>} : vector<256x4xf32>, vector<4x8xf32>, vector<256x8xf32> -> vector<256x8xf32>
    %40 = arith.addf %33, %39 : vector<256x8xf32>
    %c0_41 = arith.constant 0 : index
    %c2_42 = arith.constant 2 : index
    %c0_43 = arith.constant 0 : index
    %c0_44 = arith.constant 0 : index
    %41 = vector.load %arg1[%c0_41, %c2_42, %c0_43, %c0_44] : memref<1x18x18x4xf32, #tpu.memory_space<vmem>>, vector<1x16x16x4xf32>
    %42 = vector.shape_cast %41 : vector<1x16x16x4xf32> to vector<16x16x4xf32>
    %43 = vector.shape_cast %42 : vector<16x16x4xf32> to vector<256x4xf32>
    %c6 = arith.constant 6 : index
    %c0_45 = arith.constant 0 : index
    %c0_46 = arith.constant 0 : index
    %44 = vector.load %arg2[%c6, %c0_45, %c0_46] : memref<9x4x8xf32, #tpu.memory_space<vmem>>, vector<1x4x8xf32>
    %45 = vector.shape_cast %44 : vector<1x4x8xf32> to vector<4x8xf32>
    %cst_47 = arith.constant dense<0.000000e+00> : vector<256x8xf32>
    %46 = tpu.matmul %43, %45, %cst_47 {dimension_numbers = #tpu.dot_dimension_numbers<[1], [0], [0], [1], [0, 0, 1, 1], [], []>} : vector<256x4xf32>, vector<4x8xf32>, vector<256x8xf32> -> vector<256x8xf32>
    %47 = arith.addf %40, %46 : vector<256x8xf32>
    %c0_48 = arith.constant 0 : index
    %c2_49 = arith.constant 2 : index
    %c1_50 = arith.constant 1 : index
    %c0_51 = arith.constant 0 : index
    %48 = vector.load %arg1[%c0_48, %c2_49, %c1_50, %c0_51] : memref<1x18x18x4xf32, #tpu.memory_space<vmem>>, vector<1x16x16x4xf32>
    %49 = vector.shape_cast %48 : vector<1x16x16x4xf32> to vector<16x16x4xf32>
    %50 = vector.shape_cast %49 : vector<16x16x4xf32> to vector<256x4xf32>
    %c7 = arith.constant 7 : index
    %c0_52 = arith.constant 0 : index
    %c0_53 = arith.constant 0 : index
    %51 = vector.load %arg2[%c7, %c0_52, %c0_53] : memref<9x4x8xf32, #tpu.memory_space<vmem>>, vector<1x4x8xf32>
    %52 = vector.shape_cast %51 : vector<1x4x8xf32> to vector<4x8xf32>
    %cst_54 = arith.constant dense<0.000000e+00> : vector<256x8xf32>
    %53 = tpu.matmul %50, %52, %cst_54 {dimension_numbers = #tpu.dot_dimension_numbers<[1], [0], [0], [1], [0, 0, 1, 1], [], []>} : vector<256x4xf32>, vector<4x8xf32>, vector<256x8xf32> -> vector<256x8xf32>
    %54 = arith.addf %47, %53 : vector<256x8xf32>
    %c0_55 = arith.constant 0 : index
    %c2_56 = arith.constant 2 : index
    %c2_57 = arith.constant 2 : index
    %c0_58 = arith.constant 0 : index
    %55 = vector.load %arg1[%c0_55, %c2_56, %c2_57, %c0_58] : memref<1x18x18x4xf32, #tpu.memory_space<vmem>>, vector<1x16x16x4xf32>
    %56 = vector.shape_cast %55 : vector<1x16x16x4xf32> to vector<16x16x4xf32>
    %57 = vector.shape_cast %56 : vector<16x16x4xf32> to vector<256x4xf32>
    %c8 = arith.constant 8 : index
    %c0_59 = arith.constant 0 : index
    %c0_60 = arith.constant 0 : index
    %58 = vector.load %arg2[%c8, %c0_59, %c0_60] : memref<9x4x8xf32, #tpu.memory_space<vmem>>, vector<1x4x8xf32>
    %59 = vector.shape_cast %58 : vector<1x4x8xf32> to vector<4x8xf32>
    %cst_61 = arith.constant dense<0.000000e+00> : vector<256x8xf32>
    %60 = tpu.matmul %57, %59, %cst_61 {dimension_numbers = #tpu.dot_dimension_numbers<[1], [0], [0], [1], [0, 0, 1, 1], [], []>} : vector<256x4xf32>, vector<4x8xf32>, vector<256x8xf32> -> vector<256x8xf32>
    %61 = arith.addf %54, %60 : vector<256x8xf32>
    %62 = vector.shape_cast %61 : vector<256x8xf32> to vector<16x16x8xf32>
    %c0_62 = arith.constant 0 : index
    %c0_63 = arith.constant 0 : index
    %c0_64 = arith.constant 0 : index
    %c0_65 = arith.constant 0 : index
    %63 = vector.load %arg3[%c0_62, %c0_63, %c0_64, %c0_65] : memref<1x16x16x8xf32, #tpu.memory_space<vmem>>, vector<1x16x16x8xf32>
    %64 = vector.shape_cast %63 : vector<1x16x16x8xf32> to vector<16x16x8xf32>
    %65 = vector.shape_cast %62 : vector<16x16x8xf32> to vector<1x16x16x8xf32>
    tpu.vector_store %arg3[%c0_62, %c0_63, %c0_64, %c0_65], %65 {strides = array<i32>} : memref<1x16x16x8xf32, #tpu.memory_space<vmem>>, vector<1x16x16x8xf32>,
    return
  }
  func.func @transform_0(%arg0: i32) -> (i32, i32, i32, i32) {
    %c0_i32 = arith.constant 0 : i32
    %c0_i32_0 = arith.constant 0 : i32
    %c0_i32_1 = arith.constant 0 : i32
    %c0_i32_2 = arith.constant 0 : i32
    return %arg0, %c0_i32, %c0_i32_0, %c0_i32_1 : i32, i32, i32, i32
  }
  func.func @transform_1(%arg0: i32) -> (i32, i32, i32) {
    %c0_i32 = arith.constant 0 : i32
    %c0_i32_0 = arith.constant 0 : i32
    %c0_i32_1 = arith.constant 0 : i32
    %c0_i32_2 = arith.constant 0 : i32
    return %c0_i32, %c0_i32_0, %c0_i32_1 : i32, i32, i32
  }
  func.func @transform_2(%arg0: i32) -> (i32, i32, i32, i32) {
    %c0_i32 = arith.constant 0 : i32
    %c0_i32_0 = arith.constant 0 : i32
    %c0_i32_1 = arith.constant 0 : i32
    %c0_i32_2 = arith.constant 0 : i32
    return %arg0, %c0_i32, %c0_i32_0, %c0_i32_1 : i32, i32, i32, i32
  }
}

</mosaic_0001>

<llo_original>
// kernel: tpu_custom_call.1
$region0: #{tpu_custom_call.1}
  #allocation0 [shape = 'u32[]', space=smem, size = 0x4, offset = 0x4, fixed_abs, tag = 'smem constant byte address 0x4 - core index']
  #allocation1 [shape = 'u32[144,128]{1,0:T(1,128)}', space=vmem, size = 0x12000, scoped, tag = 'internal scratch']
  %s0 = inlined_call_operand.vmem [shape: f32[2,18,18,4], index: 0, kind: input, shape index: {}]
  %s1 = inlined_call_operand.vmem [shape: f32[9,4,8], index: 1, kind: input, shape index: {}]
  %s2 = inlined_call_operand.vmem [shape: f32[2,16,16,8], index: 2, kind: output, shape index: {}]
  %s3 = sld [smem:[#allocation0]]
  $region41: #{tpu_custom_call.1} parent=0
    _
  %s5 = ssub.s32 1, %s3
  %s6 = scalar_select 0, %s5, %s3
  loop: start=0, step=1, limit=4
  $region2: #{tpu_custom_call.1} parent=0 // loop_pre_header
    _
  $region3: #{tpu_custom_call.1} parent=0 // loop_header
    %s8 = sphi 0, %s12
    %p9 = scmp.ge.s32.totalorder %s8, 4
    %s18 = sphi 0, %s20
    %s21 = sphi 0, %s18
    %s22 = sphi 0, %s21
    %s38 = sphi 0, %s22
    %s42 = sphi 0, %s42
    %s44 = sphi 0, %s42
    %s45 = sphi 0, %s44
    %s59 = sphi 0, %s45
    %s65 = sphi 0, %s67
    %s68 = sphi 0, %s65
    %s69 = sphi 0, %s68
    %s85 = sphi 0, %s69
  $region4: #{tpu_custom_call.1} parent=0 // loop_header_branch
    %11 = sbr.rel (%p9) target = $region8
  $region5: #{tpu_custom_call.1} parent=0 // loop_body
    %s13 = ssub.s32 %s8, 1
    %s14 = ssub.s32 %s8, 2
    %s15 = sadd.s32 %s8, 1
    %s16 = ssub.s32 %s8, %s15
    %p17 = scmp.eq.s32.totalorder %s16, 0
    %s19 = sadd.s32 %s18, 1
    %s20 = scalar_select %p17, %s18, %s19
    %p23 = pneg %p17
    %p24 = scmp.eq.s32.totalorder %s8, 1
    %p25 = por %p23, %p24
    %p26 = scmp.ne.s32.totalorder %s18, %s21
    %p27 = scmp.eq.s32.totalorder %s8, 0
    %p28 = por %p26, %p27
    %p29 = scmp.ne.s32.totalorder %s18, %s21
    %p30 = scmp.eq.s32.totalorder %s13, 1
    %p31 = por %p29, %p30
    %p32 = scmp.ne.s32.totalorder %s21, %s22
    %p33 = scmp.eq.s32.totalorder %s13, 0
    %p34 = por %p32, %p33
    %p35 = scmp.ne.s32.totalorder %s21, %s22
    %p36 = scmp.eq.s32.totalorder %s14, 1
    %p37 = por %p35, %p36
    %p39 = scmp.ne.s32.totalorder %s22, %s38
    %p40 = scmp.eq.s32.totalorder %s14, 0
    %p41 = por %p39, %p40
    %s43 = sadd.s32 %s42, 1
    %p46 = scmp.eq.s32.totalorder %s8, 1
    %p47 = scmp.ne.s32.totalorder %s42, %s44
    %p48 = scmp.eq.s32.totalorder %s8, 0
    %p49 = por %p47, %p48
    %p50 = scmp.ne.s32.totalorder %s42, %s44
    %p51 = scmp.eq.s32.totalorder %s13, 1
    %p52 = por %p50, %p51
    %p53 = scmp.ne.s32.totalorder %s44, %s45
    %p54 = scmp.eq.s32.totalorder %s13, 0
    %p55 = por %p53, %p54
    %p56 = scmp.ne.s32.totalorder %s44, %s45
    %p57 = scmp.eq.s32.totalorder %s14, 1
    %p58 = por %p56, %p57
    %p60 = scmp.ne.s32.totalorder %s45, %s59
    %p61 = scmp.eq.s32.totalorder %s14, 0
    %p62 = por %p60, %p61
    %s63 = ssub.s32 %s8, %s15
    %p64 = scmp.eq.s32.totalorder %s63, 0
    %s66 = sadd.s32 %s65, 1
    %s67 = scalar_select %p64, %s65, %s66
    %p70 = pneg %p64
    %p71 = scmp.eq.s32.totalorder %s8, 1
    %p72 = por %p70, %p71
    %p73 = scmp.ne.s32.totalorder %s65, %s68
    %p74 = scmp.eq.s32.totalorder %s8, 0
    %p75 = por %p73, %p74
    %p76 = scmp.ne.s32.totalorder %s65, %s68
    %p77 = scmp.eq.s32.totalorder %s13, 1
    %p78 = por %p76, %p77
    %p79 = scmp.ne.s32.totalorder %s68, %s69
    %p80 = scmp.eq.s32.totalorder %s13, 0
    %p81 = por %p79, %p80
    %p82 = scmp.ne.s32.totalorder %s68, %s69
    %p83 = scmp.eq.s32.totalorder %s14, 1
    %p84 = por %p82, %p83
    %p86 = scmp.ne.s32.totalorder %s69, %s85
    %p87 = scmp.eq.s32.totalorder %s14, 0
    %p88 = por %p86, %p87
    %p89 = scmp.le.s32.totalorder 1, %s8
    %p90 = scmp.lt.s32.totalorder %s8, 3
    %p91 = pnand %p89, %p90
    %p92 = pneg %p91
    // Predicated region
    $region9: #{tpu_custom_call.1} parent=5 // pred_check
      _
    $region10: #{tpu_custom_call.1} parent=5 // pred_check_branch
      %94 = sbr.rel (%p91) target = $region12
    $region11: #{tpu_custom_call.1} parent=5 // pred_region
      %s95 = ssub.s32 %s8, 1
      // Predicated region
      $region13: #{tpu_custom_call.1} parent=11 // pred_check
        %p96 = pneg %p55
      $region14: #{tpu_custom_call.1} parent=11 // pred_check_branch
        %98 = sbr.rel (%p96) target = $region16
      $region15: #{tpu_custom_call.1} parent=11 // pred_region
        _
      $region16: #{tpu_custom_call.1} parent=11 // pred_fallthru
        _
    $region12: #{tpu_custom_call.1} parent=5 // pred_fallthru
      _
    %p99 = scmp.lt.s32.totalorder %s8, 2
    // Predicated region
    $region17: #{tpu_custom_call.1} parent=5 // pred_check
      %p100 = pneg %p99
    $region18: #{tpu_custom_call.1} parent=5 // pred_check_branch
      %102 = sbr.rel (%p100) target = $region20
    $region19: #{tpu_custom_call.1} parent=5 // pred_region
      // Predicated region
      $region21: #{tpu_custom_call.1} parent=19 // pred_check
        %p103 = pneg %p28
      $region22: #{tpu_custom_call.1} parent=19 // pred_check_branch
        %105 = sbr.rel (%p103) target = $region24
      $region23: #{tpu_custom_call.1} parent=19 // pred_region
        %p106 = scmp.lt.s32.totalorder %s8, 1
        %s107 = scalar_select %p106, %s8, 1
        %s108 = smul.addr %s107, 54
        %s109 = smul.addr %s108, 8
        %s110 = scalar_lea.vmem %s0, %s109
      $region24: #{tpu_custom_call.1} parent=19 // pred_fallthru
        _
    $region20: #{tpu_custom_call.1} parent=5 // pred_fallthru
      _
    %p111 = scmp.le.s32.totalorder 1, %s8
    %p112 = scmp.lt.s32.totalorder %s8, 3
    %p113 = pnand %p111, %p112
    %p114 = pneg %p113
    // Predicated region
    $region25: #{tpu_custom_call.1} parent=5 // pred_check
      _
    $region26: #{tpu_custom_call.1} parent=5 // pred_check_branch
      %116 = sbr.rel (%p113) target = $region28
    $region27: #{tpu_custom_call.1} parent=5 // pred_region
      %s117 = ssub.s32 %s8, 1
      %p118 = scmp.lt.s32.totalorder %s13, 1
      %s119 = scalar_select %p118, %s13, 1
      %s120 = smul.addr %s119, 54
      %s121 = smul.addr %s120, 8
      %s122 = scalar_lea.vmem %s0, %s121
      %p123 = pneg %p34
      %p124 = pneg %p31
      %p125 = pneg %p55
      %p126 = pneg %p52
      %p127 = pneg %p81
      %p128 = pneg %p78
      %p129 = scmp.lt.s32.totalorder %s13, 1
      %s130 = scalar_select %p129, %s13, 1
      %s131 = smul.addr %s130, 32
      %s132 = smul.addr %s131, 8
      %s133 = scalar_lea.vmem %s2, %s132
      %p134 = scmp.lt.s32.totalorder %s13, 1
      %s135 = scalar_select %p134, %s13, 1
      %s136 = smul.addr %s135, 54
      %s137 = smul.addr %s136, 8
      %s138 = scalar_lea.vmem %s0, %s137
      %p139 = scmp.lt.s32.totalorder %s13, 1
      %s140 = scalar_select %p139, %s13, 1
      %s141 = smul.addr %s140, 32
      %s142 = smul.addr %s141, 8
      %s143 = scalar_lea.vmem %s2, %s142
      %v144 = vld [vmem:[%s138] sm:$0xff]
      %v145 = vld [vmem:[%s138 + $0x8] sm:$0xff]
      %v146 = vld [vmem:[%s138 + $0x18] sm:$0xff]
      %v147 = vld [vmem:[%s138 + $0x20] sm:$0xff]
      %v148 = vld [vmem:[%s138 + $0x30] sm:$0xff]
      %v149 = vld [vmem:[%s138 + $0x38] sm:$0xff]
      %v150 = vld [vmem:[%s138 + $0x48] sm:$0xff]
      %v151 = vld [vmem:[%s138 + $0x50] sm:$0xff]
      %v152 = vld [vmem:[%s138 + $0x60] sm:$0xff]
      %v153 = vld [vmem:[%s138 + $0x68] sm:$0xff]
      %v154 = vld [vmem:[%s138 + $0x78] sm:$0xff]
      %v155 = vld [vmem:[%s138 + $0x80] sm:$0xff]
      %v156 = vld [vmem:[%s138 + $0x90] sm:$0xff]
      %v157 = vld [vmem:[%s138 + $0x98] sm:$0xff]
      %v158 = vld [vmem:[%s138 + $0xa8] sm:$0xff]
      %v159 = vld [vmem:[%s138 + $0xb0] sm:$0xff]
      %v160 = vld [vmem:[%s138 + $0xc0] sm:$0xff]
      %v161 = vld [vmem:[%s138 + $0xc8] sm:$0xff]
      %v162 = vld [vmem:[%s138 + $0xd8] sm:$0xff]
      %v163 = vld [vmem:[%s138 + $0xe0] sm:$0xff]
      %v164 = vld [vmem:[%s138 + $0xf0] sm:$0xff]
      %v165 = vld [vmem:[%s138 + $0xf8] sm:$0xff]
      %v166 = vld [vmem:[%s138 + $0x108] sm:$0xff]
      %v167 = vld [vmem:[%s138 + $0x110] sm:$0xff]
      %v168 = vld [vmem:[%s138 + $0x120] sm:$0xff]
      %v169 = vld [vmem:[%s138 + $0x128] sm:$0xff]
      %v170 = vld [vmem:[%s138 + $0x138] sm:$0xff]
      %v171 = vld [vmem:[%s138 + $0x140] sm:$0xff]
      %v172 = vld [vmem:[%s138 + $0x150] sm:$0xff]
      %v173 = vld [vmem:[%s138 + $0x158] sm:$0xff]
      %v174 = vld [vmem:[%s138 + $0x168] sm:$0xff]
      %v175 = vld [vmem:[%s138 + $0x170] sm:$0xff]
      %v176 = vld [vmem:[%s1] sm:$0xf]
      %v177 = vld [vmem:[%s138 + $0x1] sm:$0xff]
      %v178 = vld [vmem:[%s138 + $0x9] sm:$0xff]
      %v179 = vld [vmem:[%s138 + $0x19] sm:$0xff]
      %v180 = vld [vmem:[%s138 + $0x21] sm:$0xff]
      %v181 = vld [vmem:[%s138 + $0x31] sm:$0xff]
      %v182 = vld [vmem:[%s138 + $0x39] sm:$0xff]
      %v183 = vld [vmem:[%s138 + $0x49] sm:$0xff]
      %v184 = vld [vmem:[%s138 + $0x51] sm:$0xff]
      %v185 = vld [vmem:[%s138 + $0x61] sm:$0xff]
      %v186 = vld [vmem:[%s138 + $0x69] sm:$0xff]
      %v187 = vld [vmem:[%s138 + $0x79] sm:$0xff]
      %v188 = vld [vmem:[%s138 + $0x81] sm:$0xff]
      %v189 = vld [vmem:[%s138 + $0x91] sm:$0xff]
      %v190 = vld [vmem:[%s138 + $0x99] sm:$0xff]
      %v191 = vld [vmem:[%s138 + $0xa9] sm:$0xff]
      %v192 = vld [vmem:[%s138 + $0xb1] sm:$0xff]
      %v193 = vld [vmem:[%s138 + $0xc1] sm:$0xff]
      %v194 = vld [vmem:[%s138 + $0xc9] sm:$0xff]
      %v195 = vld [vmem:[%s138 + $0xd9] sm:$0xff]
      %v196 = vld [vmem:[%s138 + $0xe1] sm:$0xff]
      %v197 = vld [vmem:[%s138 + $0xf1] sm:$0xff]
      %v198 = vld [vmem:[%s138 + $0xf9] sm:$0xff]
      %v199 = vld [vmem:[%s138 + $0x109] sm:$0xff]
      %v200 = vld [vmem:[%s138 + $0x111] sm:$0xff]
      %v201 = vld [vmem:[%s138 + $0x121] sm:$0xff]
      %v202 = vld [vmem:[%s138 + $0x129] sm:$0xff]
      %v203 = vld [vmem:[%s138 + $0x139] sm:$0xff]
      %v204 = vld [vmem:[%s138 + $0x141] sm:$0xff]
      %v205 = vld [vmem:[%s138 + $0x151] sm:$0xff]
      %v206 = vld [vmem:[%s138 + $0x159] sm:$0xff]
      %v207 = vld [vmem:[%s138 + $0x169] sm:$0xff]
      %v208 = vld [vmem:[%s138 + $0x171] sm:$0xff]
      %s209 = scalar_lea.vmem %s1, 4
      %v210 = vld [vmem:[%s209] sm:$0xf]
      %vm211 = vcmask 31744
      %v213 = vsel %vm211, %v177, 0
      %v216 = vsel %vm211, %v178, 0
      %v219 = vsel %vm211, %v179, 0
      %v222 = vsel %vm211, %v180, 0
      %v225 = vsel %vm211, %v181, 0
      %v228 = vsel %vm211, %v182, 0
      %v231 = vsel %vm211, %v183, 0
      %v234 = vsel %vm211, %v184, 0
      %v237 = vsel %vm211, %v185, 0
      %v240 = vsel %vm211, %v186, 0
      %v243 = vsel %vm211, %v187, 0
      %v246 = vsel %vm211, %v188, 0
      %v249 = vsel %vm211, %v189, 0
      %v252 = vsel %vm211, %v190, 0
      %v255 = vsel %vm211, %v191, 0
      %v258 = vsel %vm211, %v192, 0
      %v261 = vsel %vm211, %v193, 0
      %v264 = vsel %vm211, %v194, 0
      %v267 = vsel %vm211, %v195, 0
      %v270 = vsel %vm211, %v196, 0
      %v273 = vsel %vm211, %v197, 0
      %v276 = vsel %vm211, %v198, 0
      %v279 = vsel %vm211, %v199, 0
      %v282 = vsel %vm211, %v200, 0
      %v285 = vsel %vm211, %v201, 0
      %v288 = vsel %vm211, %v202, 0
      %v291 = vsel %vm211, %v203, 0
      %v294 = vsel %vm211, %v204, 0
      %v297 = vsel %vm211, %v205, 0
      %v300 = vsel %vm211, %v206, 0
      %v303 = vsel %vm211, %v207, 0
      %v306 = vsel %vm211, %v208, 0
      %vm308 = vcmask 1043456
      %v310 = vsel %vm308, %v210, 0
      %312 = vmatprep.subr.mxu0 0.0
      %313 = vmatpush1.msra.mxu0 %v310
      %314 = vmatprep.subr.mxu0 0.0
      %315 = vmatpush1.msra.mxu0 0.0
      %316 = vmatprep.subr.mxu0 0.0
      %317 = vmatpush1.msra.mxu0 0.0
      %318 = vmatprep.subr.mxu0 0.0
      %319 = vmatpush1.msra.mxu0 0.0
      %320 = vmatprep.subr.mxu0 0.0
      %321 = vmatpush1.msra.mxu0 0.0
      %322 = vmatprep.subr.mxu0 0.0
      %323 = vmatpush1.msra.mxu0 0.0
      %324 = vmatprep.subr.mxu0 0.0
      %325 = vmatpush1.msra.mxu0 0.0
      %326 = vmatprep.subr.mxu0 0.0
      %327 = vmatpush1.msra.mxu0 0.0
      %328 = vmatprep.subr.mxu0 0.0
      %329 = vmatpush1.msra.mxu0 0.0
      %330 = vmatprep.subr.mxu0 0.0
      %331 = vmatpush1.msra.mxu0 0.0
      %332 = vmatprep.subr.mxu0 0.0
      %333 = vmatpush1.msra.mxu0 0.0
      %334 = vmatprep.subr.mxu0 0.0
      %335 = vmatpush1.msra.mxu0 0.0
      %336 = vmatprep.subr.mxu0 0.0
      %337 = vmatpush1.msra.mxu0 0.0
      %338 = vmatprep.subr.mxu0 0.0
      %339 = vmatpush1.msra.mxu0 0.0
      %340 = vmatprep.subr.mxu0 0.0
      %341 = vmatpush1.msra.mxu0 0.0
      %342 = vmatprep.subr.mxu0 0.0
      %343 = vmatpush1.msra.mxu0 0.0
      %344 = vmatprep.subr.mxu0 0.0
      %345 = vmatpush1.msra.mxu0 0.0
      %346 = vmatprep.subr.mxu0 0.0
      %347 = vmatpush1.msra.mxu0 0.0
      %348 = vmatprep.subr.mxu0 0.0
      %349 = vmatpush1.msra.mxu0 0.0
      %350 = vmatprep.subr.mxu0 0.0
      %351 = vmatpush1.msra.mxu0 0.0
      %352 = vmatprep.subr.mxu0 0.0
      %353 = vmatpush1.msra.mxu0 0.0
      %354 = vmatprep.subr.mxu0 0.0
      %355 = vmatpush1.msra.mxu0 0.0
      %356 = vmatprep.subr.mxu0 0.0
      %357 = vmatpush1.msra.mxu0 0.0
      %358 = vmatprep.subr.mxu0 0.0
      %359 = vmatpush1.msra.mxu0 0.0
      %360 = vmatprep.subr.mxu0 0.0
      %361 = vmatpush1.msra.mxu0 0.0
      %362 = vmatprep.subr.mxu0 0.0
      %363 = vmatpush1.msra.mxu0 0.0
      %364 = vmatprep.subr.mxu0 0.0
      %365 = vmatpush1.msra.mxu0 0.0
      %366 = vmatprep.subr.mxu0 0.0
      %367 = vmatpush1.msra.mxu0 0.0
      %368 = vmatprep.subr.mxu0 0.0
      %369 = vmatpush1.msra.mxu0 0.0
      %370 = vmatprep.subr.mxu0 0.0
      %371 = vmatpush1.msra.mxu0 0.0
      %372 = vmatprep.subr.mxu0 0.0
      %373 = vmatpush1.msra.mxu0 0.0
      %374 = vmatprep.subr.mxu0 0.0
      %375 = vmatpush1.msra.mxu0 0.0
      %376 = vmatprep.mubr.f32.mxu0 0.0
      %377 = vmatmul.mubr.f32.gmra.mrb[0].mxu0 %v213
      %v378 = vpop.f32.mrb[0].mxu0
      %v379 = vadd.f32 0.0, %v378
      %v380 = vpop.f32.mrb[0].mxu0
      %381 = vmatprep.mubr.f32.mxu0 0.0
      %382 = vmatmul.mubr.f32.gmra.mrb[0].mxu0 %v216
      %v383 = vpop.f32.mrb[0].mxu0
      %v384 = vadd.f32 0.0, %v383
      %v385 = vpop.f32.mrb[0].mxu0
      %386 = vmatprep.mubr.f32.mxu0 0.0
      %387 = vmatmul.mubr.f32.gmra.mrb[0].mxu0 %v219
      %v388 = vpop.f32.mrb[0].mxu0
      %v389 = vadd.f32 0.0, %v388
      %v390 = vpop.f32.mrb[0].mxu0
      %391 = vmatprep.mubr.f32.mxu0 0.0
      %392 = vmatmul.mubr.f32.gmra.mrb[0].mxu0 %v222
      %v393 = vpop.f32.mrb[0].mxu0
      %v394 = vadd.f32 0.0, %v393
      %v395 = vpop.f32.mrb[0].mxu0
      %396 = vmatprep.mubr.f32.mxu0 0.0
      %397 = vmatmul.mubr.f32.gmra.mrb[0].mxu0 %v225
      %v398 = vpop.f32.mrb[0].mxu0
      %v399 = vadd.f32 0.0, %v398
      %v400 = vpop.f32.mrb[0].mxu0
      %401 = vmatprep.mubr.f32.mxu0 0.0
      %402 = vmatmul.mubr.f32.gmra.mrb[0].mxu0 %v228
      %v403 = vpop.f32.mrb[0].mxu0
      %v404 = vadd.f32 0.0, %v403
      %v405 = vpop.f32.mrb[0].mxu0
      %406 = vmatprep.mubr.f32.mxu0 0.0
      %407 = vmatmul.mubr.f32.gmra.mrb[0].mxu0 %v231
      %v408 = vpop.f32.mrb[0].mxu0
      %v409 = vadd.f32 0.0, %v408
      %v410 = vpop.f32.mrb[0].mxu0
      %411 = vmatprep.mubr.f32.mxu0 0.0
      %412 = vmatmul.mubr.f32.gmra.mrb[0].mxu0 %v234
      %v413 = vpop.f32.mrb[0].mxu0
      %v414 = vadd.f32 0.0, %v413
      %v415 = vpop.f32.mrb[0].mxu0
      %416 = vmatprep.mubr.f32.mxu0 0.0
      %417 = vmatmul.mubr.f32.gmra.mrb[0].mxu0 %v237
      %v418 = vpop.f32.mrb[0].mxu0
      %v419 = vadd.f32 0.0, %v418
      %v420 = vpop.f32.mrb[0].mxu0
      %421 = vmatprep.mubr.f32.mxu0 0.0
      %422 = vmatmul.mubr.f32.gmra.mrb[0].mxu0 %v240
      %v423 = vpop.f32.mrb[0].mxu0
      %v424 = vadd.f32 0.0, %v423
      %v425 = vpop.f32.mrb[0].mxu0
      %426 = vmatprep.mubr.f32.mxu0 0.0
      %427 = vmatmul.mubr.f32.gmra.mrb[0].mxu0 %v243
      %v428 = vpop.f32.mrb[0].mxu0
      %v429 = vadd.f32 0.0, %v428
      %v430 = vpop.f32.mrb[0].mxu0
      %431 = vmatprep.mubr.f32.mxu0 0.0
      %432 = vmatmul.mubr.f32.gmra.mrb[0].mxu0 %v246
      %v433 = vpop.f32.mrb[0].mxu0
      %v434 = vadd.f32 0.0, %v433
      %v435 = vpop.f32.mrb[0].mxu0
      %436 = vmatprep.mubr.f32.mxu0 0.0
      %437 = vmatmul.mubr.f32.gmra.mrb[0].mxu0 %v249
      %v438 = vpop.f32.mrb[0].mxu0
      %v439 = vadd.f32 0.0, %v438
      %v440 = vpop.f32.mrb[0].mxu0
      %441 = vmatprep.mubr.f32.mxu0 0.0
      %442 = vmatmul.mubr.f32.gmra.mrb[0].mxu0 %v252
      %v443 = vpop.f32.mrb[0].mxu0
      %v444 = vadd.f32 0.0, %v443
      %v445 = vpop.f32.mrb[0].mxu0
      %446 = vmatprep.mubr.f32.mxu0 0.0
      %447 = vmatmul.mubr.f32.gmra.mrb[0].mxu0 %v255
      %v448 = vpop.f32.mrb[0].mxu0
      %v449 = vadd.f32 0.0, %v448
      %v450 = vpop.f32.mrb[0].mxu0
      %451 = vmatprep.mubr.f32.mxu0 0.0
      %452 = vmatmul.mubr.f32.gmra.mrb[0].mxu0 %v258
      %v453 = vpop.f32.mrb[0].mxu0
      %v454 = vadd.f32 0.0, %v453
      %v455 = vpop.f32.mrb[0].mxu0
      %456 = vmatprep.mubr.f32.mxu0 0.0
      %457 = vmatmul.mubr.f32.gmra.mrb[0].mxu0 %v261
      %v458 = vpop.f32.mrb[0].mxu0
      %v459 = vadd.f32 0.0, %v458
      %v460 = vpop.f32.mrb[0].mxu0
      %461 = vmatprep.mubr.f32.mxu0 0.0
      %462 = vmatmul.mubr.f32.gmra.mrb[0].mxu0 %v264
      %v463 = vpop.f32.mrb[0].mxu0
      %v464 = vadd.f32 0.0, %v463
      %v465 = vpop.f32.mrb[0].mxu0
      %466 = vmatprep.mubr.f32.mxu0 0.0
      %467 = vmatmul.mubr.f32.gmra.mrb[0].mxu0 %v267
      %v468 = vpop.f32.mrb[0].mxu0
      %v469 = vadd.f32 0.0, %v468
      %v470 = vpop.f32.mrb[0].mxu0
      %471 = vmatprep.mubr.f32.mxu0 0.0
      %472 = vmatmul.mubr.f32.gmra.mrb[0].mxu0 %v270
      %v473 = vpop.f32.mrb[0].mxu0
      %v474 = vadd.f32 0.0, %v473
      %v475 = vpop.f32.mrb[0].mxu0
      %476 = vmatprep.mubr.f32.mxu0 0.0
      %477 = vmatmul.mubr.f32.gmra.mrb[0].mxu0 %v273
      %v478 = vpop.f32.mrb[0].mxu0
      %v479 = vadd.f32 0.0, %v478
      %v480 = vpop.f32.mrb[0].mxu0
      %481 = vmatprep.mubr.f32.mxu0 0.0
      %482 = vmatmul.mubr.f32.gmra.mrb[0].mxu0 %v276
      %v483 = vpop.f32.mrb[0].mxu0
      %v484 = vadd.f32 0.0, %v483
      %v485 = vpop.f32.mrb[0].mxu0
      %486 = vmatprep.mubr.f32.mxu0 0.0
      %487 = vmatmul.mubr.f32.gmra.mrb[0].mxu0 %v279
      %v488 = vpop.f32.mrb[0].mxu0
      %v489 = vadd.f32 0.0, %v488
      %v490 = vpop.f32.mrb[0].mxu0
      %491 = vmatprep.mubr.f32.mxu0 0.0
      %492 = vmatmul.mubr.f32.gmra.mrb[0].mxu0 %v282
      %v493 = vpop.f32.mrb[0].mxu0
      %v494 = vadd.f32 0.0, %v493
      %v495 = vpop.f32.mrb[0].mxu0
      %496 = vmatprep.mubr.f32.mxu0 0.0
      %497 = vmatmul.mubr.f32.gmra.mrb[0].mxu0 %v285
      %v498 = vpop.f32.mrb[0].mxu0
      %v499 = vadd.f32 0.0, %v498
      %v500 = vpop.f32.mrb[0].mxu0
      %501 = vmatprep.mubr.f32.mxu0 0.0
      %502 = vmatmul.mubr.f32.gmra.mrb[0].mxu0 %v288
      %v503 = vpop.f32.mrb[0].mxu0
      %v504 = vadd.f32 0.0, %v503
      %v505 = vpop.f32.mrb[0].mxu0
      %506 = vmatprep.mubr.f32.mxu0 0.0
      %507 = vmatmul.mubr.f32.gmra.mrb[0].mxu0 %v291
      %v508 = vpop.f32.mrb[0].mxu0
      %v509 = vadd.f32 0.0, %v508
      %v510 = vpop.f32.mrb[0].mxu0
      %511 = vmatprep.mubr.f32.mxu0 0.0
      %512 = vmatmul.mubr.f32.gmra.mrb[0].mxu0 %v294
      %v513 = vpop.f32.mrb[0].mxu0
      %v514 = vadd.f32 0.0, %v513
      %v515 = vpop.f32.mrb[0].mxu0
      %516 = vmatprep.mubr.f32.mxu0 0.0
      %517 = vmatmul.mubr.f32.gmra.mrb[0].mxu0 %v297
      %v518 = vpop.f32.mrb[0].mxu0
      %v519 = vadd.f32 0.0, %v518
      %v520 = vpop.f32.mrb[0].mxu0
      %521 = vmatprep.mubr.f32.mxu0 0.0
      %522 = vmatmul.mubr.f32.gmra.mrb[0].mxu0 %v300
      %v523 = vpop.f32.mrb[0].mxu0
      %v524 = vadd.f32 0.0, %v523
      %v525 = vpop.f32.mrb[0].mxu0
      %526 = vmatprep.mubr.f32.mxu0 0.0
      %527 = vmatmul.mubr.f32.gmra.mrb[0].mxu0 %v303
      %v528 = vpop.f32.mrb[0].mxu0
      %v529 = vadd.f32 0.0, %v528
      %v530 = vpop.f32.mrb[0].mxu0
      %531 = vmatprep.mubr.f32.mxu0 0.0
      %532 = vmatmul.mubr.f32.gmra.mrb[0].mxu0 %v306
      %v533 = vpop.f32.mrb[0].mxu0
      %v534 = vadd.f32 0.0, %v533
      %v535 = vpop.f32.mrb[0].mxu0
      %536 = vdwg.mxu0
      %v538 = vsel %vm211, %v144, 0
      %v541 = vsel %vm211, %v145, 0
      %v544 = vsel %vm211, %v146, 0
      %v547 = vsel %vm211, %v147, 0
      %v550 = vsel %vm211, %v148, 0
      %v553 = vsel %vm211, %v149, 0
      %v556 = vsel %vm211, %v150, 0
      %v559 = vsel %vm211, %v151, 0
      %v562 = vsel %vm211, %v152, 0
      %v565 = vsel %vm211, %v153, 0
      %v568 = vsel %vm211, %v154, 0
      %v571 = vsel %vm211, %v155, 0
      %v574 = vsel %vm211, %v156, 0
      %v577 = vsel %vm211, %v157, 0
      %v580 = vsel %vm211, %v158, 0
      %v583 = vsel %vm211, %v159, 0
      %v586 = vsel %vm211, %v160, 0
      %v589 = vsel %vm211, %v161, 0
      %v592 = vsel %vm211, %v162, 0
      %v595 = vsel %vm211, %v163, 0
      %v598 = vsel %vm211, %v164, 0
      %v601 = vsel %vm211, %v165, 0
      %v604 = vsel %vm211, %v166, 0
      %v607 = vsel %vm211, %v167, 0
      %v610 = vsel %vm211, %v168, 0
      %v613 = vsel %vm211, %v169, 0
      %v616 = vsel %vm211, %v170, 0
      %v619 = vsel %vm211, %v171, 0
      %v622 = vsel %vm211, %v172, 0
      %v625 = vsel %vm211, %v173, 0
      %v628 = vsel %vm211, %v174, 0
      %v631 = vsel %vm211, %v175, 0
      %v634 = vsel %vm308, %v176, 0
      %636 = vmatprep.subr.mxu0 0.0
      %637 = vmatpush1.msra.mxu0 %v634
      %638 = vmatprep.subr.mxu0 0.0
      %639 = vmatpush1.msra.mxu0 0.0
      %640 = vmatprep.subr.mxu0 0.0
      %641 = vmatpush1.msra.mxu0 0.0
      %642 = vmatprep.subr.mxu0 0.0
      %643 = vmatpush1.msra.mxu0 0.0
      %644 = vmatprep.subr.mxu0 0.0
      %645 = vmatpush1.msra.mxu0 0.0
      %646 = vmatprep.subr.mxu0 0.0
      %647 = vmatpush1.msra.mxu0 0.0
      %648 = vmatprep.subr.mxu0 0.0
      %649 = vmatpush1.msra.mxu0 0.0
      %650 = vmatprep.subr.mxu0 0.0
      %651 = vmatpush1.msra.mxu0 0.0
      %652 = vmatprep.subr.mxu0 0.0
      %653 = vmatpush1.msra.mxu0 0.0
      %654 = vmatprep.subr.mxu0 0.0
      %655 = vmatpush1.msra.mxu0 0.0
      %656 = vmatprep.subr.mxu0 0.0
      %657 = vmatpush1.msra.mxu0 0.0
      %658 = vmatprep.subr.mxu0 0.0
      %659 = vmatpush1.msra.mxu0 0.0
      %660 = vmatprep.subr.mxu0 0.0
      %661 = vmatpush1.msra.mxu0 0.0
      %662 = vmatprep.subr.mxu0 0.0
      %663 = vmatpush1.msra.mxu0 0.0
      %664 = vmatprep.subr.mxu0 0.0
      %665 = vmatpush1.msra.mxu0 0.0
      %666 = vmatprep.subr.mxu0 0.0
      %667 = vmatpush1.msra.mxu0 0.0
      %668 = vmatprep.subr.mxu0 0.0
      %669 = vmatpush1.msra.mxu0 0.0
      %670 = vmatprep.subr.mxu0 0.0
      %671 = vmatpush1.msra.mxu0 0.0
      %672 = vmatprep.subr.mxu0 0.0
      %673 = vmatpush1.msra.mxu0 0.0
      %674 = vmatprep.subr.mxu0 0.0
      %675 = vmatpush1.msra.mxu0 0.0
      %676 = vmatprep.subr.mxu0 0.0
      %677 = vmatpush1.msra.mxu0 0.0
      %678 = vmatprep.subr.mxu0 0.0
      %679 = vmatpush1.msra.mxu0 0.0
      %680 = vmatprep.subr.mxu0 0.0
      %681 = vmatpush1.msra.mxu0 0.0
      %682 = vmatprep.subr.mxu0 0.0
      %683 = vmatpush1.msra.mxu0 0.0
      %684 = vmatprep.subr.mxu0 0.0
      %685 = vmatpush1.msra.mxu0 0.0
      %686 = vmatprep.subr.mxu0 0.0
      %687 = vmatpush1.msra.mxu0 0.0
      %688 = vmatprep.subr.mxu0 0.0
      %689 = vmatpush1.msra.mxu0 0.0
      %690 = vmatprep.subr.mxu0 0.0
      %691 = vmatpush1.msra.mxu0 0.0
      %692 = vmatprep.subr.mxu0 0.0
      %693 = vmatpush1.msra.mxu0 0.0
      %694 = vmatprep.subr.mxu0 0.0
      %695 = vmatpush1.msra.mxu0 0.0
      %696 = vmatprep.subr.mxu0 0.0
      %697 = vmatpush1.msra.mxu0 0.0
      %698 = vmatprep.subr.mxu0 0.0
      %699 = vmatpush1.msra.mxu0 0.0
      %700 = vmatprep.mubr.f32.mxu0 0.0
      %701 = vmatmul.mubr.f32.gmra.mrb[0].mxu0 %v538
      %v702 = vpop.f32.mrb[0].mxu0
      %v703 = vadd.f32 %v379, %v702
      %v704 = vpop.f32.mrb[0].mxu0
      %705 = vmatprep.mubr.f32.mxu0 0.0
      %706 = vmatmul.mubr.f32.gmra.mrb[0].mxu0 %v541
      %v707 = vpop.f32.mrb[0].mxu0
      %v708 = vadd.f32 %v384, %v707
      %v709 = vpop.f32.mrb[0].mxu0
      %710 = vmatprep.mubr.f32.mxu0 0.0
      %711 = vmatmul.mubr.f32.gmra.mrb[0].mxu0 %v544
      %v712 = vpop.f32.mrb[0].mxu0
      %v713 = vadd.f32 %v389, %v712
      %v714 = vpop.f32.mrb[0].mxu0
      %715 = vmatprep.mubr.f32.mxu0 0.0
      %716 = vmatmul.mubr.f32.gmra.mrb[0].mxu0 %v547
      %v717 = vpop.f32.mrb[0].mxu0
      %v718 = vadd.f32 %v394, %v717
      %v719 = vpop.f32.mrb[0].mxu0
      %720 = vmatprep.mubr.f32.mxu0 0.0
      %721 = vmatmul.mubr.f32.gmra.mrb[0].mxu0 %v550
      %v722 = vpop.f32.mrb[0].mxu0
      %v723 = vadd.f32 %v399, %v722
      %v724 = vpop.f32.mrb[0].mxu0
      %725 = vmatprep.mubr.f32.mxu0 0.0
      %726 = vmatmul.mubr.f32.gmra.mrb[0].mxu0 %v553
      %v727 = vpop.f32.mrb[0].mxu0
      %v728 = vadd.f32 %v404, %v727
      %v729 = vpop.f32.mrb[0].mxu0
      %730 = vmatprep.mubr.f32.mxu0 0.0
      %731 = vmatmul.mubr.f32.gmra.mrb[0].mxu0 %v556
      %v732 = vpop.f32.mrb[0].mxu0
      %v733 = vadd.f32 %v409, %v732
      %v734 = vpop.f32.mrb[0].mxu0
      %735 = vmatprep.mubr.f32.mxu0 0.0
      %736 = vmatmul.mubr.f32.gmra.mrb[0].mxu0 %v559
      %v737 = vpop.f32.mrb[0].mxu0
      %v738 = vadd.f32 %v414, %v737
      %v739 = vpop.f32.mrb[0].mxu0
      %740 = vmatprep.mubr.f32.mxu0 0.0
      %741 = vmatmul.mubr.f32.gmra.mrb[0].mxu0 %v562
      %v742 = vpop.f32.mrb[0].mxu0
      %v743 = vadd.f32 %v419, %v742
      %v744 = vpop.f32.mrb[0].mxu0
      %745 = vmatprep.mubr.f32.mxu0 0.0
      %746 = vmatmul.mubr.f32.gmra.mrb[0].mxu0 %v565
      %v747 = vpop.f32.mrb[0].mxu0
      %v748 = vadd.f32 %v424, %v747
      %v749 = vpop.f32.mrb[0].mxu0
      %750 = vmatprep.mubr.f32.mxu0 0.0
      %751 = vmatmul.mubr.f32.gmra.mrb[0].mxu0 %v568
      %v752 = vpop.f32.mrb[0].mxu0
      %v753 = vadd.f32 %v429, %v752
      %v754 = vpop.f32.mrb[0].mxu0
      %755 = vmatprep.mubr.f32.mxu0 0.0
      %756 = vmatmul.mubr.f32.gmra.mrb[0].mxu0 %v571
      %v757 = vpop.f32.mrb[0].mxu0
      %v758 = vadd.f32 %v434, %v757
      %v759 = vpop.f32.mrb[0].mxu0
      %760 = vmatprep.mubr.f32.mxu0 0.0
      %761 = vmatmul.mubr.f32.gmra.mrb[0].mxu0 %v574
      %v762 = vpop.f32.mrb[0].mxu0
      %v763 = vadd.f32 %v439, %v762
      %v764 = vpop.f32.mrb[0].mxu0
      %765 = vmatprep.mubr.f32.mxu0 0.0
      %766 = vmatmul.mubr.f32.gmra.mrb[0].mxu0 %v577
      %v767 = vpop.f32.mrb[0].mxu0
      %v768 = vadd.f32 %v444, %v767
      %v769 = vpop.f32.mrb[0].mxu0
      %770 = vmatprep.mubr.f32.mxu0 0.0
      %771 = vmatmul.mubr.f32.gmra.mrb[0].mxu0 %v580
      %v772 = vpop.f32.mrb[0].mxu0
      %v773 = vadd.f32 %v449, %v772
      %v774 = vpop.f32.mrb[0].mxu0
      %775 = vmatprep.mubr.f32.mxu0 0.0
      %776 = vmatmul.mubr.f32.gmra.mrb[0].mxu0 %v583
      %v777 = vpop.f32.mrb[0].mxu0
      %v778 = vadd.f32 %v454, %v777
      %v779 = vpop.f32.mrb[0].mxu0
      %780 = vmatprep.mubr.f32.mxu0 0.0
      %781 = vmatmul.mubr.f32.gmra.mrb[0].mxu0 %v586
      %v782 = vpop.f32.mrb[0].mxu0
      %v783 = vadd.f32 %v459, %v782
      %v784 = vpop.f32.mrb[0].mxu0
      %785 = vmatprep.mubr.f32.mxu0 0.0
      %786 = vmatmul.mubr.f32.gmra.mrb[0].mxu0 %v589
      %v787 = vpop.f32.mrb[0].mxu0
      %v788 = vadd.f32 %v464, %v787
      %v789 = vpop.f32.mrb[0].mxu0
      %790 = vmatprep.mubr.f32.mxu0 0.0
      %791 = vmatmul.mubr.f32.gmra.mrb[0].mxu0 %v592
      %v792 = vpop.f32.mrb[0].mxu0
      %v793 = vadd.f32 %v469, %v792
      %v794 = vpop.f32.mrb[0].mxu0
      %795 = vmatprep.mubr.f32.mxu0 0.0
      %796 = vmatmul.mubr.f32.gmra.mrb[0].mxu0 %v595
      %v797 = vpop.f32.mrb[0].mxu0
      %v798 = vadd.f32 %v474, %v797
      %v799 = vpop.f32.mrb[0].mxu0
      %800 = vmatprep.mubr.f32.mxu0 0.0
      %801 = vmatmul.mubr.f32.gmra.mrb[0].mxu0 %v598
      %v802 = vpop.f32.mrb[0].mxu0
      %v803 = vadd.f32 %v479, %v802
      %v804 = vpop.f32.mrb[0].mxu0
      %805 = vmatprep.mubr.f32.mxu0 0.0
      %806 = vmatmul.mubr.f32.gmra.mrb[0].mxu0 %v601
      %v807 = vpop.f32.mrb[0].mxu0
      %v808 = vadd.f32 %v484, %v807
      %v809 = vpop.f32.mrb[0].mxu0
      %810 = vmatprep.mubr.f32.mxu0 0.0
      %811 = vmatmul.mubr.f32.gmra.mrb[0].mxu0 %v604
      %v812 = vpop.f32.mrb[0].mxu0
      %v813 = vadd.f32 %v489, %v812
      %v814 = vpop.f32.mrb[0].mxu0
      %815 = vmatprep.mubr.f32.mxu0 0.0
      %816 = vmatmul.mubr.f32.gmra.mrb[0].mxu0 %v607
      %v817 = vpop.f32.mrb[0].mxu0
      %v818 = vadd.f32 %v494, %v817
      %v819 = vpop.f32.mrb[0].mxu0
      %820 = vmatprep.mubr.f32.mxu0 0.0
      %821 = vmatmul.mubr.f32.gmra.mrb[0].mxu0 %v610
      %v822 = vpop.f32.mrb[0].mxu0
      %v823 = vadd.f32 %v499, %v822
      %v824 = vpop.f32.mrb[0].mxu0
      %825 = vmatprep.mubr.f32.mxu0 0.0
      %826 = vmatmul.mubr.f32.gmra.mrb[0].mxu0 %v613
      %v827 = vpop.f32.mrb[0].mxu0
      %v828 = vadd.f32 %v504, %v827
      %v829 = vpop.f32.mrb[0].mxu0
      %830 = vmatprep.mubr.f32.mxu0 0.0
      %831 = vmatmul.mubr.f32.gmra.mrb[0].mxu0 %v616
      %v832 = vpop.f32.mrb[0].mxu0
      %v833 = vadd.f32 %v509, %v832
      %v834 = vpop.f32.mrb[0].mxu0
      %835 = vmatprep.mubr.f32.mxu0 0.0
      %836 = vmatmul.mubr.f32.gmra.mrb[0].mxu0 %v619
      %v837 = vpop.f32.mrb[0].mxu0
      %v838 = vadd.f32 %v514, %v837
      %v839 = vpop.f32.mrb[0].mxu0
      %840 = vmatprep.mubr.f32.mxu0 0.0
      %841 = vmatmul.mubr.f32.gmra.mrb[0].mxu0 %v622
      %v842 = vpop.f32.mrb[0].mxu0
      %v843 = vadd.f32 %v519, %v842
      %v844 = vpop.f32.mrb[0].mxu0
      %845 = vmatprep.mubr.f32.mxu0 0.0
      %846 = vmatmul.mubr.f32.gmra.mrb[0].mxu0 %v625
      %v847 = vpop.f32.mrb[0].mxu0
      %v848 = vadd.f32 %v524, %v847
      %v849 = vpop.f32.mrb[0].mxu0
      %850 = vmatprep.mubr.f32.mxu0 0.0
      %851 = vmatmul.mubr.f32.gmra.mrb[0].mxu0 %v628
      %v852 = vpop.f32.mrb[0].mxu0
      %v853 = vadd.f32 %v529, %v852
      %v854 = vpop.f32.mrb[0].mxu0
      %855 = vmatprep.mubr.f32.mxu0 0.0
      %856 = vmatmul.mubr.f32.gmra.mrb[0].mxu0 %v631
      %v857 = vpop.f32.mrb[0].mxu0
      %v858 = vadd.f32 %v534, %v857
      %v859 = vpop.f32.mrb[0].mxu0
      %860 = vdwg.mxu0
      %v861 = vld [vmem:[%s138 + $0x2] sm:$0xff]
      %v862 = vld [vmem:[%s138 + $0xa] sm:$0xff]
      %v863 = vld [vmem:[%s138 + $0x1a] sm:$0xff]
      %v864 = vld [vmem:[%s138 + $0x22] sm:$0xff]
      %v865 = vld [vmem:[%s138 + $0x32] sm:$0xff]
      %v866 = vld [vmem:[%s138 + $0x3a] sm:$0xff]
      %v867 = vld [vmem:[%s138 + $0x4a] sm:$0xff]
      %v868 = vld [vmem:[%s138 + $0x52] sm:$0xff]
      %v869 = vld [vmem:[%s138 + $0x62] sm:$0xff]
      %v870 = vld [vmem:[%s138 + $0x6a] sm:$0xff]
      %v871 = vld [vmem:[%s138 + $0x7a] sm:$0xff]
      %v872 = vld [vmem:[%s138 + $0x82] sm:$0xff]
      %v873 = vld [vmem:[%s138 + $0x92] sm:$0xff]
      %v874 = vld [vmem:[%s138 + $0x9a] sm:$0xff]
      %v875 = vld [vmem:[%s138 + $0xaa] sm:$0xff]
      %v876 = vld [vmem:[%s138 + $0xb2] sm:$0xff]
      %v877 = vld [vmem:[%s138 + $0xc2] sm:$0xff]
      %v878 = vld [vmem:[%s138 + $0xca] sm:$0xff]
      %v879 = vld [vmem:[%s138 + $0xda] sm:$0xff]
      %v880 = vld [vmem:[%s138 + $0xe2] sm:$0xff]
      %v881 = vld [vmem:[%s138 + $0xf2] sm:$0xff]
      %v882 = vld [vmem:[%s138 + $0xfa] sm:$0xff]
      %v883 = vld [vmem:[%s138 + $0x10a] sm:$0xff]
      %v884 = vld [vmem:[%s138 + $0x112] sm:$0xff]
      %v885 = vld [vmem:[%s138 + $0x122] sm:$0xff]
      %v886 = vld [vmem:[%s138 + $0x12a] sm:$0xff]
      %v887 = vld [vmem:[%s138 + $0x13a] sm:$0xff]
      %v888 = vld [vmem:[%s138 + $0x142] sm:$0xff]
      %v889 = vld [vmem:[%s138 + $0x152] sm:$0xff]
      %v890 = vld [vmem:[%s138 + $0x15a] sm:$0xff]
      %v891 = vld [vmem:[%s138 + $0x16a] sm:$0xff]
      %v892 = vld [vmem:[%s138 + $0x172] sm:$0xff]
      %s893 = scalar_lea.vmem %s1, 8
      %v894 = vld [vmem:[%s893] sm:$0xf]
      %v896 = vsel %vm211, %v861, 0
      %v899 = vsel %vm211, %v862, 0
      %v902 = vsel %vm211, %v863, 0
      %v905 = vsel %vm211, %v864, 0
      %v908 = vsel %vm211, %v865, 0
      %v911 = vsel %vm211, %v866, 0
      %v914 = vsel %vm211, %v867, 0
      %v917 = vsel %vm211, %v868, 0
      %v920 = vsel %vm211, %v869, 0
      %v923 = vsel %vm211, %v870, 0
      %v926 = vsel %vm211, %v871, 0
      %v929 = vsel %vm211, %v872, 0
      %v932 = vsel %vm211, %v873, 0
      %v935 = vsel %vm211, %v874, 0
      %v938 = vsel %vm211, %v875, 0
      %v941 = vsel %vm211, %v876, 0
      %v944 = vsel %vm211, %v877, 0
      %v947 = vsel %vm211, %v878, 0
      %v950 = vsel %vm211, %v879, 0
      %v953 = vsel %vm211, %v880, 0
      %v956 = vsel %vm211, %v881, 0
      %v959 = vsel %vm211, %v882, 0
      %v962 = vsel %vm211, %v883, 0
      %v965 = vsel %vm211, %v884, 0
      %v968 = vsel %vm211, %v885, 0
      %v971 = vsel %vm211, %v886, 0
      %v974 = vsel %vm211, %v887, 0
      %v977 = vsel %vm211, %v888, 0
      %v980 = vsel %vm211, %v889, 0
      %v983 = vsel %vm211, %v890, 0
      %v986 = vsel %vm211, %v891, 0
      %v989 = vsel %vm211, %v892, 0
      %v992 = vsel %vm308, %v894, 0
      %994 = vmatprep.subr.mxu0 0.0
      %995 = vmatpush1.msra.mxu0 %v992
      %996 = vmatprep.subr.mxu0 0.0
      %997 = vmatpush1.msra.mxu0 0.0
      %998 = vmatprep.subr.mxu0 0.0
      %999 = vmatpush1.msra.mxu0 0.0
      %1000 = vmatprep.subr.mxu0 0.0
      %1001 = vmatpush1.msra.mxu0 0.0
      %1002 = vmatprep.subr.mxu0 0.0
      %1003 = vmatpush1.msra.mxu0 0.0
      %1004 = vmatprep.subr.mxu0 0.0
      %1005 = vmatpush1.msra.mxu0 0.0
      %1006 = vmatprep.subr.mxu0 0.0
      %1007 = vmatpush1.msra.mxu0 0.0
      %1008 = vmatprep.subr.mxu0 0.0
      %1009 = vmatpush1.msra.mxu0 0.0
      %1010 = vmatprep.subr.mxu0 0.0
      %1011 = vmatpush1.msra.mxu0 0.0
      %1012 = vmatprep.subr.mxu0 0.0
      %1013 = vmatpush1.msra.mxu0 0.0
      %1014 = vmatprep.subr.mxu0 0.0
      %1015 = vmatpush1.msra.mxu0 0.0
      %1016 = vmatprep.subr.mxu0 0.0
      %1017 = vmatpush1.msra.mxu0 0.0
      %1018 = vmatprep.subr.mxu0 0.0
      %1019 = vmatpush1.msra.mxu0 0.0
      %1020 = vmatprep.subr.mxu0 0.0
      %1021 = vmatpush1.msra.mxu0 0.0
      %1022 = vmatprep.subr.mxu0 0.0
      %1023 = vmatpush1.msra.mxu0 0.0
      %1024 = vmatprep.subr.mxu0 0.0
      %1025 = vmatpush1.msra.mxu0 0.0
      %1026 = vmatprep.subr.mxu0 0.0
      %1027 = vmatpush1.msra.mxu0 0.0
      %1028 = vmatprep.subr.mxu0 0.0
      %1029 = vmatpush1.msra.mxu0 0.0
      %1030 = vmatprep.subr.mxu0 0.0
      %1031 = vmatpush1.msra.mxu0 0.0
      %1032 = vmatprep.subr.mxu0 0.0
      %1033 = vmatpush1.msra.mxu0 0.0
      %1034 = vmatprep.subr.mxu0 0.0
      %1035 = vmatpush1.msra.mxu0 0.0
      %1036 = vmatprep.subr.mxu0 0.0
      %1037 = vmatpush1.msra.mxu0 0.0
      %1038 = vmatprep.subr.mxu0 0.0
      %1039 = vmatpush1.msra.mxu0 0.0
      %1040 = vmatprep.subr.mxu0 0.0
      %1041 = vmatpush1.msra.mxu0 0.0
      %1042 = vmatprep.subr.mxu0 0.0
      %1043 = vmatpush1.msra.mxu0 0.0
      %1044 = vmatprep.subr.mxu0 0.0
      %1045 = vmatpush1.msra.mxu0 0.0
      %1046 = vmatprep.subr.mxu0 0.0
      %1047 = vmatpush1.msra.mxu0 0.0
      %1048 = vmatprep.subr.mxu0 0.0
      %1049 = vmatpush1.msra.mxu0 0.0
      %1050 = vmatprep.subr.mxu0 0.0
      %1051 = vmatpush1.msra.mxu0 0.0
      %1052 = vmatprep.subr.mxu0 0.0
      %1053 = vmatpush1.msra.mxu0 0.0
      %1054 = vmatprep.subr.mxu0 0.0
      %1055 = vmatpush1.msra.mxu0 0.0
      %1056 = vmatprep.subr.mxu0 0.0
      %1057 = vmatpush1.msra.mxu0 0.0
      %1058 = vmatprep.mubr.f32.mxu0 0.0
      %1059 = vmatmul.mubr.f32.gmra.mrb[0].mxu0 %v896
      %v1060 = vpop.f32.mrb[0].mxu0
      %v1061 = vadd.f32 0.0, %v1060
      %v1062 = vpop.f32.mrb[0].mxu0
      %1063 = vmatprep.mubr.f32.mxu0 0.0
      %1064 = vmatmul.mubr.f32.gmra.mrb[0].mxu0 %v899
      %v1065 = vpop.f32.mrb[0].mxu0
      %v1066 = vadd.f32 0.0, %v1065
      %v1067 = vpop.f32.mrb[0].mxu0
      %1068 = vmatprep.mubr.f32.mxu0 0.0
      %1069 = vmatmul.mubr.f32.gmra.mrb[0].mxu0 %v902
      %v1070 = vpop.f32.mrb[0].mxu0
      %v1071 = vadd.f32 0.0, %v1070
      %v1072 = vpop.f32.mrb[0].mxu0
      %1073 = vmatprep.mubr.f32.mxu0 0.0
      %1074 = vmatmul.mubr.f32.gmra.mrb[0].mxu0 %v905
      %v1075 = vpop.f32.mrb[0].mxu0
      %v1076 = vadd.f32 0.0, %v1075
      %v1077 = vpop.f32.mrb[0].mxu0
      %1078 = vmatprep.mubr.f32.mxu0 0.0
      %1079 = vmatmul.mubr.f32.gmra.mrb[0].mxu0 %v908
      %v1080 = vpop.f32.mrb[0].mxu0
      %v1081 = vadd.f32 0.0, %v1080
      %v1082 = vpop.f32.mrb[0].mxu0
      %1083 = vmatprep.mubr.f32.mxu0 0.0
      %1084 = vmatmul.mubr.f32.gmra.mrb[0].mxu0 %v911
      %v1085 = vpop.f32.mrb[0].mxu0
      %v1086 = vadd.f32 0.0, %v1085
      %v1087 = vpop.f32.mrb[0].mxu0
      %1088 = vmatprep.mubr.f32.mxu0 0.0
      %1089 = vmatmul.mubr.f32.gmra.mrb[0].mxu0 %v914
      %v1090 = vpop.f32.mrb[0].mxu0
      %v1091 = vadd.f32 0.0, %v1090
      %v1092 = vpop.f32.mrb[0].mxu0
      %1093 = vmatprep.mubr.f32.mxu0 0.0
      %1094 = vmatmul.mubr.f32.gmra.mrb[0].mxu0 %v917
      %v1095 = vpop.f32.mrb[0].mxu0
      %v1096 = vadd.f32 0.0, %v1095
      %v1097 = vpop.f32.mrb[0].mxu0
      %1098 = vmatprep.mubr.f32.mxu0 0.0
      %1099 = vmatmul.mubr.f32.gmra.mrb[0].mxu0 %v920
      %v1100 = vpop.f32.mrb[0].mxu0
      %v1101 = vadd.f32 0.0, %v1100
      %v1102 = vpop.f32.mrb[0].mxu0
      %1103 = vmatprep.mubr.f32.mxu0 0.0
      %1104 = vmatmul.mubr.f32.gmra.mrb[0].mxu0 %v923
      %v1105 = vpop.f32.mrb[0].mxu0
      %v1106 = vadd.f32 0.0, %v1105
      %v1107 = vpop.f32.mrb[0].mxu0
      %1108 = vmatprep.mubr.f32.mxu0 0.0
      %1109 = vmatmul.mubr.f32.gmra.mrb[0].mxu0 %v926
      %v1110 = vpop.f32.mrb[0].mxu0
      %v1111 = vadd.f32 0.0, %v1110
      %v1112 = vpop.f32.mrb[0].mxu0
      %1113 = vmatprep.mubr.f32.mxu0 0.0
      %1114 = vmatmul.mubr.f32.gmra.mrb[0].mxu0 %v929
      %v1115 = vpop.f32.mrb[0].mxu0
      %v1116 = vadd.f32 0.0, %v1115
      %v1117 = vpop.f32.mrb[0].mxu0
      %1118 = vmatprep.mubr.f32.mxu0 0.0
      %1119 = vmatmul.mubr.f32.gmra.mrb[0].mxu0 %v932
      %v1120 = vpop.f32.mrb[0].mxu0
      %v1121 = vadd.f32 0.0, %v1120
      %v1122 = vpop.f32.mrb[0].mxu0
      %1123 = vmatprep.mubr.f32.mxu0 0.0
      %1124 = vmatmul.mubr.f32.gmra.mrb[0].mxu0 %v935
      %v1125 = vpop.f32.mrb[0].mxu0
      %v1126 = vadd.f32 0.0, %v1125
      %v1127 = vpop.f32.mrb[0].mxu0
      %1128 = vmatprep.mubr.f32.mxu0 0.0
      %1129 = vmatmul.mubr.f32.gmra.mrb[0].mxu0 %v938
      %v1130 = vpop.f32.mrb[0].mxu0
      %v1131 = vadd.f32 0.0, %v1130
      %v1132 = vpop.f32.mrb[0].mxu0
      %1133 = vmatprep.mubr.f32.mxu0 0.0
      %1134 = vmatmul.mubr.f32.gmra.mrb[0].mxu0 %v941
      %v1135 = vpop.f32.mrb[0].mxu0
      %v1136 = vadd.f32 0.0, %v1135
      %v1137 = vpop.f32.mrb[0].mxu0
      %1138 = vmatprep.mubr.f32.mxu0 0.0
      %1139 = vmatmul.mubr.f32.gmra.mrb[0].mxu0 %v944
      %v1140 = vpop.f32.mrb[0].mxu0
      %v1141 = vadd.f32 0.0, %v1140
      %v1142 = vpop.f32.mrb[0].mxu0
      %1143 = vmatprep.mubr.f32.mxu0 0.0
      %1144 = vmatmul.mubr.f32.gmra.mrb[0].mxu0 %v947
      %v1145 = vpop.f32.mrb[0].mxu0
      %v1146 = vadd.f32 0.0, %v1145
      %v1147 = vpop.f32.mrb[0].mxu0
      %1148 = vmatprep.mubr.f32.mxu0 0.0
      %1149 = vmatmul.mubr.f32.gmra.mrb[0].mxu0 %v950
      %v1150 = vpop.f32.mrb[0].mxu0
      %v1151 = vadd.f32 0.0, %v1150
      %v1152 = vpop.f32.mrb[0].mxu0
      %1153 = vmatprep.mubr.f32.mxu0 0.0
      %1154 = vmatmul.mubr.f32.gmra.mrb[0].mxu0 %v953
      %v1155 = vpop.f32.mrb[0].mxu0
      %v1156 = vadd.f32 0.0, %v1155
      %v1157 = vpop.f32.mrb[0].mxu0
      %1158 = vmatprep.mubr.f32.mxu0 0.0
      %1159 = vmatmul.mubr.f32.gmra.mrb[0].mxu0 %v956
      %v1160 = vpop.f32.mrb[0].mxu0
      %v1161 = vadd.f32 0.0, %v1160
      %v1162 = vpop.f32.mrb[0].mxu0
      %1163 = vmatprep.mubr.f32.mxu0 0.0
      %1164 = vmatmul.mubr.f32.gmra.mrb[0].mxu0 %v959
      %v1165 = vpop.f32.mrb[0].mxu0
      %v1166 = vadd.f32 0.0, %v1165
      %v1167 = vpop.f32.mrb[0].mxu0
      %1168 = vmatprep.mubr.f32.mxu0 0.0
      %1169 = vmatmul.mubr.f32.gmra.mrb[0].mxu0 %v962
      %v1170 = vpop.f32.mrb[0].mxu0
      %v1171 = vadd.f32 0.0, %v1170
      %v1172 = vpop.f32.mrb[0].mxu0
      %1173 = vmatprep.mubr.f32.mxu0 0.0
      %1174 = vmatmul.mubr.f32.gmra.mrb[0].mxu0 %v965
      %v1175 = vpop.f32.mrb[0].mxu0
      %v1176 = vadd.f32 0.0, %v1175
      %v1177 = vpop.f32.mrb[0].mxu0
      %1178 = vmatprep.mubr.f32.mxu0 0.0
      %1179 = vmatmul.mubr.f32.gmra.mrb[0].mxu0 %v968
      %v1180 = vpop.f32.mrb[0].mxu0
      %v1181 = vadd.f32 0.0, %v1180
      %v1182 = vpop.f32.mrb[0].mxu0
      %1183 = vmatprep.mubr.f32.mxu0 0.0
      %1184 = vmatmul.mubr.f32.gmra.mrb[0].mxu0 %v971
      %v1185 = vpop.f32.mrb[0].mxu0
      %v1186 = vadd.f32 0.0, %v1185
      %v1187 = vpop.f32.mrb[0].mxu0
      %1188 = vmatprep.mubr.f32.mxu0 0.0
      %1189 = vmatmul.mubr.f32.gmra.mrb[0].mxu0 %v974
      %v1190 = vpop.f32.mrb[0].mxu0
      %v1191 = vadd.f32 0.0, %v1190
      %v1192 = vpop.f32.mrb[0].mxu0
      %1193 = vmatprep.mubr.f32.mxu0 0.0
      %1194 = vmatmul.mubr.f32.gmra.mrb[0].mxu0 %v977
      %v1195 = vpop.f32.mrb[0].mxu0
      %v1196 = vadd.f32 0.0, %v1195
      %v1197 = vpop.f32.mrb[0].mxu0
      %1198 = vmatprep.mubr.f32.mxu0 0.0
      %1199 = vmatmul.mubr.f32.gmra.mrb[0].mxu0 %v980
      %v1200 = vpop.f32.mrb[0].mxu0
      %v1201 = vadd.f32 0.0, %v1200
      %v1202 = vpop.f32.mrb[0].mxu0
      %1203 = vmatprep.mubr.f32.mxu0 0.0
      %1204 = vmatmul.mubr.f32.gmra.mrb[0].mxu0 %v983
      %v1205 = vpop.f32.mrb[0].mxu0
      %v1206 = vadd.f32 0.0, %v1205
      %v1207 = vpop.f32.mrb[0].mxu0
      %1208 = vmatprep.mubr.f32.mxu0 0.0
      %1209 = vmatmul.mubr.f32.gmra.mrb[0].mxu0 %v986
      %v1210 = vpop.f32.mrb[0].mxu0
      %v1211 = vadd.f32 0.0, %v1210
      %v1212 = vpop.f32.mrb[0].mxu0
      %1213 = vmatprep.mubr.f32.mxu0 0.0
      %1214 = vmatmul.mubr.f32.gmra.mrb[0].mxu0 %v989
      %v1215 = vpop.f32.mrb[0].mxu0
      %v1216 = vadd.f32 0.0, %v1215
      %v1217 = vpop.f32.mrb[0].mxu0
      %1218 = vdwg.mxu0
      %v1219 = vadd.f32 %v703, %v1061
      %v1220 = vadd.f32 %v708, %v1066
      %v1221 = vadd.f32 %v713, %v1071
      %v1222 = vadd.f32 %v718, %v1076
      %v1223 = vadd.f32 %v723, %v1081
      %v1224 = vadd.f32 %v728, %v1086
      %v1225 = vadd.f32 %v733, %v1091
      %v1226 = vadd.f32 %v738, %v1096
      %v1227 = vadd.f32 %v743, %v1101
      %v1228 = vadd.f32 %v748, %v1106
      %v1229 = vadd.f32 %v753, %v1111
      %v1230 = vadd.f32 %v758, %v1116
      %v1231 = vadd.f32 %v763, %v1121
      %v1232 = vadd.f32 %v768, %v1126
      %v1233 = vadd.f32 %v773, %v1131
      %v1234 = vadd.f32 %v778, %v1136
      %v1235 = vadd.f32 %v783, %v1141
      %v1236 = vadd.f32 %v788, %v1146
      %v1237 = vadd.f32 %v793, %v1151
      %v1238 = vadd.f32 %v798, %v1156
      %v1239 = vadd.f32 %v803, %v1161
      %v1240 = vadd.f32 %v808, %v1166
      %v1241 = vadd.f32 %v813, %v1171
      %v1242 = vadd.f32 %v818, %v1176
      %v1243 = vadd.f32 %v823, %v1181
      %v1244 = vadd.f32 %v828, %v1186
      %v1245 = vadd.f32 %v833, %v1191
      %v1246 = vadd.f32 %v838, %v1196
      %v1247 = vadd.f32 %v843, %v1201
      %v1248 = vadd.f32 %v848, %v1206
      %v1249 = vadd.f32 %v853, %v1211
      %v1250 = vadd.f32 %v858, %v1216
      %s1251 = scalar_lea.vmem %s138, 24
      %v1252 = vld [vmem:[%s1251] sm:$0xff]
      %v1253 = vld [vmem:[%s1251 + $0x8] sm:$0xff]
      %v1254 = vld [vmem:[%s1251 + $0x18] sm:$0xff]
      %v1255 = vld [vmem:[%s1251 + $0x20] sm:$0xff]
      %v1256 = vld [vmem:[%s1251 + $0x30] sm:$0xff]
      %v1257 = vld [vmem:[%s1251 + $0x38] sm:$0xff]
      %v1258 = vld [vmem:[%s1251 + $0x48] sm:$0xff]
      %v1259 = vld [vmem:[%s1251 + $0x50] sm:$0xff]
      %v1260 = vld [vmem:[%s1251 + $0x60] sm:$0xff]
      %v1261 = vld [vmem:[%s1251 + $0x68] sm:$0xff]
      %v1262 = vld [vmem:[%s1251 + $0x78] sm:$0xff]
      %v1263 = vld [vmem:[%s1251 + $0x80] sm:$0xff]
      %v1264 = vld [vmem:[%s1251 + $0x90] sm:$0xff]
      %v1265 = vld [vmem:[%s1251 + $0x98] sm:$0xff]
      %v1266 = vld [vmem:[%s1251 + $0xa8] sm:$0xff]
      %v1267 = vld [vmem:[%s1251 + $0xb0] sm:$0xff]
      %v1268 = vld [vmem:[%s1251 + $0xc0] sm:$0xff]
      %v1269 = vld [vmem:[%s1251 + $0xc8] sm:$0xff]
      %v1270 = vld [vmem:[%s1251 + $0xd8] sm:$0xff]
      %v1271 = vld [vmem:[%s1251 + $0xe0] sm:$0xff]
      %v1272 = vld [vmem:[%s1251 + $0xf0] sm:$0xff]
      %v1273 = vld [vmem:[%s1251 + $0xf8] sm:$0xff]
      %v1274 = vld [vmem:[%s1251 + $0x108] sm:$0xff]
      %v1275 = vld [vmem:[%s1251 + $0x110] sm:$0xff]
      %v1276 = vld [vmem:[%s1251 + $0x120] sm:$0xff]
      %v1277 = vld [vmem:[%s1251 + $0x128] sm:$0xff]
      %v1278 = vld [vmem:[%s1251 + $0x138] sm:$0xff]
      %v1279 = vld [vmem:[%s1251 + $0x140] sm:$0xff]
      %v1280 = vld [vmem:[%s1251 + $0x150] sm:$0xff]
      %v1281 = vld [vmem:[%s1251 + $0x158] sm:$0xff]
      %v1282 = vld [vmem:[%s1251 + $0x168] sm:$0xff]
      %v1283 = vld [vmem:[%s1251 + $0x170] sm:$0xff]
      %s1284 = scalar_lea.vmem %s1, 12
      %v1285 = vld [vmem:[%s1284] sm:$0xf]
      %v1287 = vsel %vm211, %v1252, 0
      %v1290 = vsel %vm211, %v1253, 0
      %v1293 = vsel %vm211, %v1254, 0
      %v1296 = vsel %vm211, %v1255, 0
      %v1299 = vsel %vm211, %v1256, 0
      %v1302 = vsel %vm211, %v1257, 0
      %v1305 = vsel %vm211, %v1258, 0
      %v1308 = vsel %vm211, %v1259, 0
      %v1311 = vsel %vm211, %v1260, 0
      %v1314 = vsel %vm211, %v1261, 0
      %v1317 = vsel %vm211, %v1262, 0
      %v1320 = vsel %vm211, %v1263, 0
      %v1323 = vsel %vm211, %v1264, 0
      %v1326 = vsel %vm211, %v1265, 0
      %v1329 = vsel %vm211, %v1266, 0
      %v1332 = vsel %vm211, %v1267, 0
      %v1335 = vsel %vm211, %v1268, 0
      %v1338 = vsel %vm211, %v1269, 0
      %v1341 = vsel %vm211, %v1270, 0
      %v1344 = vsel %vm211, %v1271, 0
      %v1347 = vsel %vm211, %v1272, 0
      %v1350 = vsel %vm211, %v1273, 0
      %v1353 = vsel %vm211, %v1274, 0
      %v1356 = vsel %vm211, %v1275, 0
      %v1359 = vsel %vm211, %v1276, 0
      %v1362 = vsel %vm211, %v1277, 0
      %v1365 = vsel %vm211, %v1278, 0
      %v1368 = vsel %vm211, %v1279, 0
      %v1371 = vsel %vm211, %v1280, 0
      %v1374 = vsel %vm211, %v1281, 0
      %v1377 = vsel %vm211, %v1282, 0
      %v1380 = vsel %vm211, %v1283, 0
      %v1383 = vsel %vm308, %v1285, 0
      %1385 = vmatprep.subr.mxu0 0.0
      %1386 = vmatpush1.msra.mxu0 %v1383
      %1387 = vmatprep.subr.mxu0 0.0
      %1388 = vmatpush1.msra.mxu0 0.0
      %1389 = vmatprep.subr.mxu0 0.0
      %1390 = vmatpush1.msra.mxu0 0.0
      %1391 = vmatprep.subr.mxu0 0.0
      %1392 = vmatpush1.msra.mxu0 0.0
      %1393 = vmatprep.subr.mxu0 0.0
      %1394 = vmatpush1.msra.mxu0 0.0
      %1395 = vmatprep.subr.mxu0 0.0
      %1396 = vmatpush1.msra.mxu0 0.0
      %1397 = vmatprep.subr.mxu0 0.0
      %1398 = vmatpush1.msra.mxu0 0.0
      %1399 = vmatprep.subr.mxu0 0.0
      %1400 = vmatpush1.msra.mxu0 0.0
      %1401 = vmatprep.subr.mxu0 0.0
      %1402 = vmatpush1.msra.mxu0 0.0
      %1403 = vmatprep.subr.mxu0 0.0
      %1404 = vmatpush1.msra.mxu0 0.0
      %1405 = vmatprep.subr.mxu0 0.0
      %1406 = vmatpush1.msra.mxu0 0.0
      %1407 = vmatprep.subr.mxu0 0.0
      %1408 = vmatpush1.msra.mxu0 0.0
      %1409 = vmatprep.subr.mxu0 0.0
      %1410 = vmatpush1.msra.mxu0 0.0
      %1411 = vmatprep.subr.mxu0 0.0
      %1412 = vmatpush1.msra.mxu0 0.0
      %1413 = vmatprep.subr.mxu0 0.0
      %1414 = vmatpush1.msra.mxu0 0.0
      %1415 = vmatprep.subr.mxu0 0.0
      %1416 = vmatpush1.msra.mxu0 0.0
      %1417 = vmatprep.subr.mxu0 0.0
      %1418 = vmatpush1.msra.mxu0 0.0
      %1419 = vmatprep.subr.mxu0 0.0
      %1420 = vmatpush1.msra.mxu0 0.0
      %1421 = vmatprep.subr.mxu0 0.0
      %1422 = vmatpush1.msra.mxu0 0.0
      %1423 = vmatprep.subr.mxu0 0.0
      %1424 = vmatpush1.msra.mxu0 0.0
      %1425 = vmatprep.subr.mxu0 0.0
      %1426 = vmatpush1.msra.mxu0 0.0
      %1427 = vmatprep.subr.mxu0 0.0
      %1428 = vmatpush1.msra.mxu0 0.0
      %1429 = vmatprep.subr.mxu0 0.0
      %1430 = vmatpush1.msra.mxu0 0.0
      %1431 = vmatprep.subr.mxu0 0.0
      %1432 = vmatpush1.msra.mxu0 0.0
      %1433 = vmatprep.subr.mxu0 0.0
      %1434 = vmatpush1.msra.mxu0 0.0
      %1435 = vmatprep.subr.mxu0 0.0
      %1436 = vmatpush1.msra.mxu0 0.0
      %1437 = vmatprep.subr.mxu0 0.0
      %1438 = vmatpush1.msra.mxu0 0.0
      %1439 = vmatprep.subr.mxu0 0.0
      %1440 = vmatpush1.msra.mxu0 0.0
      %1441 = vmatprep.subr.mxu0 0.0
      %1442 = vmatpush1.msra.mxu0 0.0
      %1443 = vmatprep.subr.mxu0 0.0
      %1444 = vmatpush1.msra.mxu0 0.0
      %1445 = vmatprep.subr.mxu0 0.0
      %1446 = vmatpush1.msra.mxu0 0.0
      %1447 = vmatprep.subr.mxu0 0.0
      %1448 = vmatpush1.msra.mxu0 0.0
      %1449 = vmatprep.mubr.f32.mxu0 0.0
      %1450 = vmatmul.mubr.f32.gmra.mrb[0].mxu0 %v1287
      %v1451 = vpop.f32.mrb[0].mxu0
      %v1452 = vadd.f32 0.0, %v1451
      %v1453 = vpop.f32.mrb[0].mxu0
      %1454 = vmatprep.mubr.f32.mxu0 0.0
      %1455 = vmatmul.mubr.f32.gmra.mrb[0].mxu0 %v1290
      %v1456 = vpop.f32.mrb[0].mxu0
      %v1457 = vadd.f32 0.0, %v1456
      %v1458 = vpop.f32.mrb[0].mxu0
      %1459 = vmatprep.mubr.f32.mxu0 0.0
      %1460 = vmatmul.mubr.f32.gmra.mrb[0].mxu0 %v1293
      %v1461 = vpop.f32.mrb[0].mxu0
      %v1462 = vadd.f32 0.0, %v1461
      %v1463 = vpop.f32.mrb[0].mxu0
      %1464 = vmatprep.mubr.f32.mxu0 0.0
      %1465 = vmatmul.mubr.f32.gmra.mrb[0].mxu0 %v1296
      %v1466 = vpop.f32.mrb[0].mxu0
      %v1467 = vadd.f32 0.0, %v1466
      %v1468 = vpop.f32.mrb[0].mxu0
      %1469 = vmatprep.mubr.f32.mxu0 0.0
      %1470 = vmatmul.mubr.f32.gmra.mrb[0].mxu0 %v1299
      %v1471 = vpop.f32.mrb[0].mxu0
      %v1472 = vadd.f32 0.0, %v1471
      %v1473 = vpop.f32.mrb[0].mxu0
      %1474 = vmatprep.mubr.f32.mxu0 0.0
      %1475 = vmatmul.mubr.f32.gmra.mrb[0].mxu0 %v1302
      %v1476 = vpop.f32.mrb[0].mxu0
      %v1477 = vadd.f32 0.0, %v1476
      %v1478 = vpop.f32.mrb[0].mxu0
      %1479 = vmatprep.mubr.f32.mxu0 0.0
      %1480 = vmatmul.mubr.f32.gmra.mrb[0].mxu0 %v1305
      %v1481 = vpop.f32.mrb[0].mxu0
      %v1482 = vadd.f32 0.0, %v1481
      %v1483 = vpop.f32.mrb[0].mxu0
      %1484 = vmatprep.mubr.f32.mxu0 0.0
      %1485 = vmatmul.mubr.f32.gmra.mrb[0].mxu0 %v1308
      %v1486 = vpop.f32.mrb[0].mxu0
      %v1487 = vadd.f32 0.0, %v1486
      %v1488 = vpop.f32.mrb[0].mxu0
      %1489 = vmatprep.mubr.f32.mxu0 0.0
      %1490 = vmatmul.mubr.f32.gmra.mrb[0].mxu0 %v1311
      %v1491 = vpop.f32.mrb[0].mxu0
      %v1492 = vadd.f32 0.0, %v1491
      %v1493 = vpop.f32.mrb[0].mxu0
      %1494 = vmatprep.mubr.f32.mxu0 0.0
      %1495 = vmatmul.mubr.f32.gmra.mrb[0].mxu0 %v1314
      %v1496 = vpop.f32.mrb[0].mxu0
      %v1497 = vadd.f32 0.0, %v1496
      %v1498 = vpop.f32.mrb[0].mxu0
      %1499 = vmatprep.mubr.f32.mxu0 0.0
      %1500 = vmatmul.mubr.f32.gmra.mrb[0].mxu0 %v1317
      %v1501 = vpop.f32.mrb[0].mxu0
      %v1502 = vadd.f32 0.0, %v1501
      %v1503 = vpop.f32.mrb[0].mxu0
      %1504 = vmatprep.mubr.f32.mxu0 0.0
      %1505 = vmatmul.mubr.f32.gmra.mrb[0].mxu0 %v1320
      %v1506 = vpop.f32.mrb[0].mxu0
      %v1507 = vadd.f32 0.0, %v1506
      %v1508 = vpop.f32.mrb[0].mxu0
      %1509 = vmatprep.mubr.f32.mxu0 0.0
      %1510 = vmatmul.mubr.f32.gmra.mrb[0].mxu0 %v1323
      %v1511 = vpop.f32.mrb[0].mxu0
      %v1512 = vadd.f32 0.0, %v1511
      %v1513 = vpop.f32.mrb[0].mxu0
      %1514 = vmatprep.mubr.f32.mxu0 0.0
      %1515 = vmatmul.mubr.f32.gmra.mrb[0].mxu0 %v1326
      %v1516 = vpop.f32.mrb[0].mxu0
      %v1517 = vadd.f32 0.0, %v1516
      %v1518 = vpop.f32.mrb[0].mxu0
      %1519 = vmatprep.mubr.f32.mxu0 0.0
      %1520 = vmatmul.mubr.f32.gmra.mrb[0].mxu0 %v1329
      %v1521 = vpop.f32.mrb[0].mxu0
      %v1522 = vadd.f32 0.0, %v1521
      %v1523 = vpop.f32.mrb[0].mxu0
      %1524 = vmatprep.mubr.f32.mxu0 0.0
      %1525 = vmatmul.mubr.f32.gmra.mrb[0].mxu0 %v1332
      %v1526 = vpop.f32.mrb[0].mxu0
      %v1527 = vadd.f32 0.0, %v1526
      %v1528 = vpop.f32.mrb[0].mxu0
      %1529 = vmatprep.mubr.f32.mxu0 0.0
      %1530 = vmatmul.mubr.f32.gmra.mrb[0].mxu0 %v1335
      %v1531 = vpop.f32.mrb[0].mxu0
      %v1532 = vadd.f32 0.0, %v1531
      %v1533 = vpop.f32.mrb[0].mxu0
      %1534 = vmatprep.mubr.f32.mxu0 0.0
      %1535 = vmatmul.mubr.f32.gmra.mrb[0].mxu0 %v1338
      %v1536 = vpop.f32.mrb[0].mxu0
      %v1537 = vadd.f32 0.0, %v1536
      %v1538 = vpop.f32.mrb[0].mxu0
      %1539 = vmatprep.mubr.f32.mxu0 0.0
      %1540 = vmatmul.mubr.f32.gmra.mrb[0].mxu0 %v1341
      %v1541 = vpop.f32.mrb[0].mxu0
      %v1542 = vadd.f32 0.0, %v1541
      %v1543 = vpop.f32.mrb[0].mxu0
      %1544 = vmatprep.mubr.f32.mxu0 0.0
      %1545 = vmatmul.mubr.f32.gmra.mrb[0].mxu0 %v1344
      %v1546 = vpop.f32.mrb[0].mxu0
      %v1547 = vadd.f32 0.0, %v1546
      %v1548 = vpop.f32.mrb[0].mxu0
      %1549 = vmatprep.mubr.f32.mxu0 0.0
      %1550 = vmatmul.mubr.f32.gmra.mrb[0].mxu0 %v1347
      %v1551 = vpop.f32.mrb[0].mxu0
      %v1552 = vadd.f32 0.0, %v1551
      %v1553 = vpop.f32.mrb[0].mxu0
      %1554 = vmatprep.mubr.f32.mxu0 0.0
      %1555 = vmatmul.mubr.f32.gmra.mrb[0].mxu0 %v1350
      %v1556 = vpop.f32.mrb[0].mxu0
      %v1557 = vadd.f32 0.0, %v1556
      %v1558 = vpop.f32.mrb[0].mxu0
      %1559 = vmatprep.mubr.f32.mxu0 0.0
      %1560 = vmatmul.mubr.f32.gmra.mrb[0].mxu0 %v1353
      %v1561 = vpop.f32.mrb[0].mxu0
      %v1562 = vadd.f32 0.0, %v1561
      %v1563 = vpop.f32.mrb[0].mxu0
      %1564 = vmatprep.mubr.f32.mxu0 0.0
      %1565 = vmatmul.mubr.f32.gmra.mrb[0].mxu0 %v1356
      %v1566 = vpop.f32.mrb[0].mxu0
      %v1567 = vadd.f32 0.0, %v1566
      %v1568 = vpop.f32.mrb[0].mxu0
      %1569 = vmatprep.mubr.f32.mxu0 0.0
      %1570 = vmatmul.mubr.f32.gmra.mrb[0].mxu0 %v1359
      %v1571 = vpop.f32.mrb[0].mxu0
      %v1572 = vadd.f32 0.0, %v1571
      %v1573 = vpop.f32.mrb[0].mxu0
      %1574 = vmatprep.mubr.f32.mxu0 0.0
      %1575 = vmatmul.mubr.f32.gmra.mrb[0].mxu0 %v1362
      %v1576 = vpop.f32.mrb[0].mxu0
      %v1577 = vadd.f32 0.0, %v1576
      %v1578 = vpop.f32.mrb[0].mxu0
      %1579 = vmatprep.mubr.f32.mxu0 0.0
      %1580 = vmatmul.mubr.f32.gmra.mrb[0].mxu0 %v1365
      %v1581 = vpop.f32.mrb[0].mxu0
      %v1582 = vadd.f32 0.0, %v1581
      %v1583 = vpop.f32.mrb[0].mxu0
      %1584 = vmatprep.mubr.f32.mxu0 0.0
      %1585 = vmatmul.mubr.f32.gmra.mrb[0].mxu0 %v1368
      %v1586 = vpop.f32.mrb[0].mxu0
      %v1587 = vadd.f32 0.0, %v1586
      %v1588 = vpop.f32.mrb[0].mxu0
      %1589 = vmatprep.mubr.f32.mxu0 0.0
      %1590 = vmatmul.mubr.f32.gmra.mrb[0].mxu0 %v1371
      %v1591 = vpop.f32.mrb[0].mxu0
      %v1592 = vadd.f32 0.0, %v1591
      %v1593 = vpop.f32.mrb[0].mxu0
      %1594 = vmatprep.mubr.f32.mxu0 0.0
      %1595 = vmatmul.mubr.f32.gmra.mrb[0].mxu0 %v1374
      %v1596 = vpop.f32.mrb[0].mxu0
      %v1597 = vadd.f32 0.0, %v1596
      %v1598 = vpop.f32.mrb[0].mxu0
      %1599 = vmatprep.mubr.f32.mxu0 0.0
      %1600 = vmatmul.mubr.f32.gmra.mrb[0].mxu0 %v1377
      %v1601 = vpop.f32.mrb[0].mxu0
      %v1602 = vadd.f32 0.0, %v1601
      %v1603 = vpop.f32.mrb[0].mxu0
      %1604 = vmatprep.mubr.f32.mxu0 0.0
      %1605 = vmatmul.mubr.f32.gmra.mrb[0].mxu0 %v1380
      %v1606 = vpop.f32.mrb[0].mxu0
      %v1607 = vadd.f32 0.0, %v1606
      %v1608 = vpop.f32.mrb[0].mxu0
      %1609 = vdwg.mxu0
      %v1610 = vadd.f32 %v1219, %v1452
      %v1611 = vadd.f32 %v1220, %v1457
      %v1612 = vadd.f32 %v1221, %v1462
      %v1613 = vadd.f32 %v1222, %v1467
      %v1614 = vadd.f32 %v1223, %v1472
      %v1615 = vadd.f32 %v1224, %v1477
      %v1616 = vadd.f32 %v1225, %v1482
      %v1617 = vadd.f32 %v1226, %v1487
      %v1618 = vadd.f32 %v1227, %v1492
      %v1619 = vadd.f32 %v1228, %v1497
      %v1620 = vadd.f32 %v1229, %v1502
      %v1621 = vadd.f32 %v1230, %v1507
      %v1622 = vadd.f32 %v1231, %v1512
      %v1623 = vadd.f32 %v1232, %v1517
      %v1624 = vadd.f32 %v1233, %v1522
      %v1625 = vadd.f32 %v1234, %v1527
      %v1626 = vadd.f32 %v1235, %v1532
      %v1627 = vadd.f32 %v1236, %v1537
      %v1628 = vadd.f32 %v1237, %v1542
      %v1629 = vadd.f32 %v1238, %v1547
      %v1630 = vadd.f32 %v1239, %v1552
      %v1631 = vadd.f32 %v1240, %v1557
      %v1632 = vadd.f32 %v1241, %v1562
      %v1633 = vadd.f32 %v1242, %v1567
      %v1634 = vadd.f32 %v1243, %v1572
      %v1635 = vadd.f32 %v1244, %v1577
      %v1636 = vadd.f32 %v1245, %v1582
      %v1637 = vadd.f32 %v1246, %v1587
      %v1638 = vadd.f32 %v1247, %v1592
      %v1639 = vadd.f32 %v1248, %v1597
      %v1640 = vadd.f32 %v1249, %v1602
      %v1641 = vadd.f32 %v1250, %v1607
      %v1642 = vld [vmem:[%s1251 + $0x1] sm:$0xff]
      %v1643 = vld [vmem:[%s1251 + $0x9] sm:$0xff]
      %v1644 = vld [vmem:[%s1251 + $0x19] sm:$0xff]
      %v1645 = vld [vmem:[%s1251 + $0x21] sm:$0xff]
      %v1646 = vld [vmem:[%s1251 + $0x31] sm:$0xff]
      %v1647 = vld [vmem:[%s1251 + $0x39] sm:$0xff]
      %v1648 = vld [vmem:[%s1251 + $0x49] sm:$0xff]
      %v1649 = vld [vmem:[%s1251 + $0x51] sm:$0xff]
      %v1650 = vld [vmem:[%s1251 + $0x61] sm:$0xff]
      %v1651 = vld [vmem:[%s1251 + $0x69] sm:$0xff]
      %v1652 = vld [vmem:[%s1251 + $0x79] sm:$0xff]
      %v1653 = vld [vmem:[%s1251 + $0x81] sm:$0xff]
      %v1654 = vld [vmem:[%s1251 + $0x91] sm:$0xff]
      %v1655 = vld [vmem:[%s1251 + $0x99] sm:$0xff]
      %v1656 = vld [vmem:[%s1251 + $0xa9] sm:$0xff]
      %v1657 = vld [vmem:[%s1251 + $0xb1] sm:$0xff]
      %v1658 = vld [vmem:[%s1251 + $0xc1] sm:$0xff]
      %v1659 = vld [vmem:[%s1251 + $0xc9] sm:$0xff]
      %v1660 = vld [vmem:[%s1251 + $0xd9] sm:$0xff]
      %v1661 = vld [vmem:[%s1251 + $0xe1] sm:$0xff]
      %v1662 = vld [vmem:[%s1251 + $0xf1] sm:$0xff]
      %v1663 = vld [vmem:[%s1251 + $0xf9] sm:$0xff]
      %v1664 = vld [vmem:[%s1251 + $0x109] sm:$0xff]
      %v1665 = vld [vmem:[%s1251 + $0x111] sm:$0xff]
      %v1666 = vld [vmem:[%s1251 + $0x121] sm:$0xff]
      %v1667 = vld [vmem:[%s1251 + $0x129] sm:$0xff]
      %v1668 = vld [vmem:[%s1251 + $0x139] sm:$0xff]
      %v1669 = vld [vmem:[%s1251 + $0x141] sm:$0xff]
      %v1670 = vld [vmem:[%s1251 + $0x151] sm:$0xff]
      %v1671 = vld [vmem:[%s1251 + $0x159] sm:$0xff]
      %v1672 = vld [vmem:[%s1251 + $0x169] sm:$0xff]
      %v1673 = vld [vmem:[%s1251 + $0x171] sm:$0xff]
      %s1674 = scalar_lea.vmem %s1, 16
      %v1675 = vld [vmem:[%s1674] sm:$0xf]
      %v1677 = vsel %vm211, %v1642, 0
      %v1680 = vsel %vm211, %v1643, 0
      %v1683 = vsel %vm211, %v1644, 0
      %v1686 = vsel %vm211, %v1645, 0
      %v1689 = vsel %vm211, %v1646, 0
      %v1692 = vsel %vm211, %v1647, 0
      %v1695 = vsel %vm211, %v1648, 0
      %v1698 = vsel %vm211, %v1649, 0
      %v1701 = vsel %vm211, %v1650, 0
      %v1704 = vsel %vm211, %v1651, 0
      %v1707 = vsel %vm211, %v1652, 0
      %v1710 = vsel %vm211, %v1653, 0
      %v1713 = vsel %vm211, %v1654, 0
      %v1716 = vsel %vm211, %v1655, 0
      %v1719 = vsel %vm211, %v1656, 0
      %v1722 = vsel %vm211, %v1657, 0
      %v1725 = vsel %vm211, %v1658, 0
      %v1728 = vsel %vm211, %v1659, 0
      %v1731 = vsel %vm211, %v1660, 0
      %v1734 = vsel %vm211, %v1661, 0
      %v1737 = vsel %vm211, %v1662, 0
      %v1740 = vsel %vm211, %v1663, 0
      %v1743 = vsel %vm211, %v1664, 0
      %v1746 = vsel %vm211, %v1665, 0
      %v1749 = vsel %vm211, %v1666, 0
      %v1752 = vsel %vm211, %v1667, 0
      %v1755 = vsel %vm211, %v1668, 0
      %v1758 = vsel %vm211, %v1669, 0
      %v1761 = vsel %vm211, %v1670, 0
      %v1764 = vsel %vm211, %v1671, 0
      %v1767 = vsel %vm211, %v1672, 0
      %v1770 = vsel %vm211, %v1673, 0
      %v1773 = vsel %vm308, %v1675, 0
      %1775 = vmatprep.subr.mxu0 0.0
      %1776 = vmatpush1.msra.mxu0 %v1773
      %1777 = vmatprep.subr.mxu0 0.0
      %1778 = vmatpush1.msra.mxu0 0.0
      %1779 = vmatprep.subr.mxu0 0.0
      %1780 = vmatpush1.msra.mxu0 0.0
      %1781 = vmatprep.subr.mxu0 0.0
      %1782 = vmatpush1.msra.mxu0 0.0
      %1783 = vmatprep.subr.mxu0 0.0
      %1784 = vmatpush1.msra.mxu0 0.0
      %1785 = vmatprep.subr.mxu0 0.0
      %1786 = vmatpush1.msra.mxu0 0.0
      %1787 = vmatprep.subr.mxu0 0.0
      %1788 = vmatpush1.msra.mxu0 0.0
      %1789 = vmatprep.subr.mxu0 0.0
      %1790 = vmatpush1.msra.mxu0 0.0
      %1791 = vmatprep.subr.mxu0 0.0
      %1792 = vmatpush1.msra.mxu0 0.0
      %1793 = vmatprep.subr.mxu0 0.0
      %1794 = vmatpush1.msra.mxu0 0.0
      %1795 = vmatprep.subr.mxu0 0.0
      %1796 = vmatpush1.msra.mxu0 0.0
      %1797 = vmatprep.subr.mxu0 0.0
      %1798 = vmatpush1.msra.mxu0 0.0
      %1799 = vmatprep.subr.mxu0 0.0
      %1800 = vmatpush1.msra.mxu0 0.0
      %1801 = vmatprep.subr.mxu0 0.0
      %1802 = vmatpush1.msra.mxu0 0.0
      %1803 = vmatprep.subr.mxu0 0.0
      %1804 = vmatpush1.msra.mxu0 0.0
      %1805 = vmatprep.subr.mxu0 0.0
      %1806 = vmatpush1.msra.mxu0 0.0
      %1807 = vmatprep.subr.mxu0 0.0
      %1808 = vmatpush1.msra.mxu0 0.0
      %1809 = vmatprep.subr.mxu0 0.0
      %1810 = vmatpush1.msra.mxu0 0.0
      %1811 = vmatprep.subr.mxu0 0.0
      %1812 = vmatpush1.msra.mxu0 0.0
      %1813 = vmatprep.subr.mxu0 0.0
      %1814 = vmatpush1.msra.mxu0 0.0
      %1815 = vmatprep.subr.mxu0 0.0
      %1816 = vmatpush1.msra.mxu0 0.0
      %1817 = vmatprep.subr.mxu0 0.0
      %1818 = vmatpush1.msra.mxu0 0.0
      %1819 = vmatprep.subr.mxu0 0.0
      %1820 = vmatpush1.msra.mxu0 0.0
      %1821 = vmatprep.subr.mxu0 0.0
      %1822 = vmatpush1.msra.mxu0 0.0
      %1823 = vmatprep.subr.mxu0 0.0
      %1824 = vmatpush1.msra.mxu0 0.0
      %1825 = vmatprep.subr.mxu0 0.0
      %1826 = vmatpush1.msra.mxu0 0.0
      %1827 = vmatprep.subr.mxu0 0.0
      %1828 = vmatpush1.msra.mxu0 0.0
      %1829 = vmatprep.subr.mxu0 0.0
      %1830 = vmatpush1.msra.mxu0 0.0
      %1831 = vmatprep.subr.mxu0 0.0
      %1832 = vmatpush1.msra.mxu0 0.0
      %1833 = vmatprep.subr.mxu0 0.0
      %1834 = vmatpush1.msra.mxu0 0.0
      %1835 = vmatprep.subr.mxu0 0.0
      %1836 = vmatpush1.msra.mxu0 0.0
      %1837 = vmatprep.subr.mxu0 0.0
      %1838 = vmatpush1.msra.mxu0 0.0
      %1839 = vmatprep.mubr.f32.mxu0 0.0
      %1840 = vmatmul.mubr.f32.gmra.mrb[0].mxu0 %v1677
      %v1841 = vpop.f32.mrb[0].mxu0
      %v1842 = vadd.f32 0.0, %v1841
      %v1843 = vpop.f32.mrb[0].mxu0
      %1844 = vmatprep.mubr.f32.mxu0 0.0
      %1845 = vmatmul.mubr.f32.gmra.mrb[0].mxu0 %v1680
      %v1846 = vpop.f32.mrb[0].mxu0
      %v1847 = vadd.f32 0.0, %v1846
      %v1848 = vpop.f32.mrb[0].mxu0
      %1849 = vmatprep.mubr.f32.mxu0 0.0
      %1850 = vmatmul.mubr.f32.gmra.mrb[0].mxu0 %v1683
      %v1851 = vpop.f32.mrb[0].mxu0
      %v1852 = vadd.f32 0.0, %v1851
      %v1853 = vpop.f32.mrb[0].mxu0
      %1854 = vmatprep.mubr.f32.mxu0 0.0
      %1855 = vmatmul.mubr.f32.gmra.mrb[0].mxu0 %v1686
      %v1856 = vpop.f32.mrb[0].mxu0
      %v1857 = vadd.f32 0.0, %v1856
      %v1858 = vpop.f32.mrb[0].mxu0
      %1859 = vmatprep.mubr.f32.mxu0 0.0
      %1860 = vmatmul.mubr.f32.gmra.mrb[0].mxu0 %v1689
      %v1861 = vpop.f32.mrb[0].mxu0
      %v1862 = vadd.f32 0.0, %v1861
      %v1863 = vpop.f32.mrb[0].mxu0
      %1864 = vmatprep.mubr.f32.mxu0 0.0
      %1865 = vmatmul.mubr.f32.gmra.mrb[0].mxu0 %v1692
      %v1866 = vpop.f32.mrb[0].mxu0
      %v1867 = vadd.f32 0.0, %v1866
      %v1868 = vpop.f32.mrb[0].mxu0
      %1869 = vmatprep.mubr.f32.mxu0 0.0
      %1870 = vmatmul.mubr.f32.gmra.mrb[0].mxu0 %v1695
      %v1871 = vpop.f32.mrb[0].mxu0
      %v1872 = vadd.f32 0.0, %v1871
      %v1873 = vpop.f32.mrb[0].mxu0
      %1874 = vmatprep.mubr.f32.mxu0 0.0
      %1875 = vmatmul.mubr.f32.gmra.mrb[0].mxu0 %v1698
      %v1876 = vpop.f32.mrb[0].mxu0
      %v1877 = vadd.f32 0.0, %v1876
      %v1878 = vpop.f32.mrb[0].mxu0
      %1879 = vmatprep.mubr.f32.mxu0 0.0
      %1880 = vmatmul.mubr.f32.gmra.mrb[0].mxu0 %v1701
      %v1881 = vpop.f32.mrb[0].mxu0
      %v1882 = vadd.f32 0.0, %v1881
      %v1883 = vpop.f32.mrb[0].mxu0
      %1884 = vmatprep.mubr.f32.mxu0 0.0
      %1885 = vmatmul.mubr.f32.gmra.mrb[0].mxu0 %v1704
      %v1886 = vpop.f32.mrb[0].mxu0
      %v1887 = vadd.f32 0.0, %v1886
      %v1888 = vpop.f32.mrb[0].mxu0
      %1889 = vmatprep.mubr.f32.mxu0 0.0
      %1890 = vmatmul.mubr.f32.gmra.mrb[0].mxu0 %v1707
      %v1891 = vpop.f32.mrb[0].mxu0
      %v1892 = vadd.f32 0.0, %v1891
      %v1893 = vpop.f32.mrb[0].mxu0
      %1894 = vmatprep.mubr.f32.mxu0 0.0
      %1895 = vmatmul.mubr.f32.gmra.mrb[0].mxu0 %v1710
      %v1896 = vpop.f32.mrb[0].mxu0
      %v1897 = vadd.f32 0.0, %v1896
      %v1898 = vpop.f32.mrb[0].mxu0
      %1899 = vmatprep.mubr.f32.mxu0 0.0
      %1900 = vmatmul.mubr.f32.gmra.mrb[0].mxu0 %v1713
      %v1901 = vpop.f32.mrb[0].mxu0
      %v1902 = vadd.f32 0.0, %v1901
      %v1903 = vpop.f32.mrb[0].mxu0
      %1904 = vmatprep.mubr.f32.mxu0 0.0
      %1905 = vmatmul.mubr.f32.gmra.mrb[0].mxu0 %v1716
      %v1906 = vpop.f32.mrb[0].mxu0
      %v1907 = vadd.f32 0.0, %v1906
      %v1908 = vpop.f32.mrb[0].mxu0
      %1909 = vmatprep.mubr.f32.mxu0 0.0
      %1910 = vmatmul.mubr.f32.gmra.mrb[0].mxu0 %v1719
      %v1911 = vpop.f32.mrb[0].mxu0
      %v1912 = vadd.f32 0.0, %v1911
      %v1913 = vpop.f32.mrb[0].mxu0
      %1914 = vmatprep.mubr.f32.mxu0 0.0
      %1915 = vmatmul.mubr.f32.gmra.mrb[0].mxu0 %v1722
      %v1916 = vpop.f32.mrb[0].mxu0
      %v1917 = vadd.f32 0.0, %v1916
      %v1918 = vpop.f32.mrb[0].mxu0
      %1919 = vmatprep.mubr.f32.mxu0 0.0
      %1920 = vmatmul.mubr.f32.gmra.mrb[0].mxu0 %v1725
      %v1921 = vpop.f32.mrb[0].mxu0
      %v1922 = vadd.f32 0.0, %v1921
      %v1923 = vpop.f32.mrb[0].mxu0
      %1924 = vmatprep.mubr.f32.mxu0 0.0
      %1925 = vmatmul.mubr.f32.gmra.mrb[0].mxu0 %v1728
      %v1926 = vpop.f32.mrb[0].mxu0
      %v1927 = vadd.f32 0.0, %v1926
      %v1928 = vpop.f32.mrb[0].mxu0
      %1929 = vmatprep.mubr.f32.mxu0 0.0
      %1930 = vmatmul.mubr.f32.gmra.mrb[0].mxu0 %v1731
      %v1931 = vpop.f32.mrb[0].mxu0
      %v1932 = vadd.f32 0.0, %v1931
      %v1933 = vpop.f32.mrb[0].mxu0
      %1934 = vmatprep.mubr.f32.mxu0 0.0
      %1935 = vmatmul.mubr.f32.gmra.mrb[0].mxu0 %v1734
      %v1936 = vpop.f32.mrb[0].mxu0
      %v1937 = vadd.f32 0.0, %v1936
      %v1938 = vpop.f32.mrb[0].mxu0
      %1939 = vmatprep.mubr.f32.mxu0 0.0
      %1940 = vmatmul.mubr.f32.gmra.mrb[0].mxu0 %v1737
      %v1941 = vpop.f32.mrb[0].mxu0
      %v1942 = vadd.f32 0.0, %v1941
      %v1943 = vpop.f32.mrb[0].mxu0
      %1944 = vmatprep.mubr.f32.mxu0 0.0
      %1945 = vmatmul.mubr.f32.gmra.mrb[0].mxu0 %v1740
      %v1946 = vpop.f32.mrb[0].mxu0
      %v1947 = vadd.f32 0.0, %v1946
      %v1948 = vpop.f32.mrb[0].mxu0
      %1949 = vmatprep.mubr.f32.mxu0 0.0
      %1950 = vmatmul.mubr.f32.gmra.mrb[0].mxu0 %v1743
      %v1951 = vpop.f32.mrb[0].mxu0
      %v1952 = vadd.f32 0.0, %v1951
      %v1953 = vpop.f32.mrb[0].mxu0
      %1954 = vmatprep.mubr.f32.mxu0 0.0
      %1955 = vmatmul.mubr.f32.gmra.mrb[0].mxu0 %v1746
      %v1956 = vpop.f32.mrb[0].mxu0
      %v1957 = vadd.f32 0.0, %v1956
      %v1958 = vpop.f32.mrb[0].mxu0
      %1959 = vmatprep.mubr.f32.mxu0 0.0
      %1960 = vmatmul.mubr.f32.gmra.mrb[0].mxu0 %v1749
      %v1961 = vpop.f32.mrb[0].mxu0
      %v1962 = vadd.f32 0.0, %v1961
      %v1963 = vpop.f32.mrb[0].mxu0
      %1964 = vmatprep.mubr.f32.mxu0 0.0
      %1965 = vmatmul.mubr.f32.gmra.mrb[0].mxu0 %v1752
      %v1966 = vpop.f32.mrb[0].mxu0
      %v1967 = vadd.f32 0.0, %v1966
      %v1968 = vpop.f32.mrb[0].mxu0
      %1969 = vmatprep.mubr.f32.mxu0 0.0
      %1970 = vmatmul.mubr.f32.gmra.mrb[0].mxu0 %v1755
      %v1971 = vpop.f32.mrb[0].mxu0
      %v1972 = vadd.f32 0.0, %v1971
      %v1973 = vpop.f32.mrb[0].mxu0
      %1974 = vmatprep.mubr.f32.mxu0 0.0
      %1975 = vmatmul.mubr.f32.gmra.mrb[0].mxu0 %v1758
      %v1976 = vpop.f32.mrb[0].mxu0
      %v1977 = vadd.f32 0.0, %v1976
      %v1978 = vpop.f32.mrb[0].mxu0
      %1979 = vmatprep.mubr.f32.mxu0 0.0
      %1980 = vmatmul.mubr.f32.gmra.mrb[0].mxu0 %v1761
      %v1981 = vpop.f32.mrb[0].mxu0
      %v1982 = vadd.f32 0.0, %v1981
      %v1983 = vpop.f32.mrb[0].mxu0
      %1984 = vmatprep.mubr.f32.mxu0 0.0
      %1985 = vmatmul.mubr.f32.gmra.mrb[0].mxu0 %v1764
      %v1986 = vpop.f32.mrb[0].mxu0
      %v1987 = vadd.f32 0.0, %v1986
      %v1988 = vpop.f32.mrb[0].mxu0
      %1989 = vmatprep.mubr.f32.mxu0 0.0
      %1990 = vmatmul.mubr.f32.gmra.mrb[0].mxu0 %v1767
      %v1991 = vpop.f32.mrb[0].mxu0
      %v1992 = vadd.f32 0.0, %v1991
      %v1993 = vpop.f32.mrb[0].mxu0
      %1994 = vmatprep.mubr.f32.mxu0 0.0
      %1995 = vmatmul.mubr.f32.gmra.mrb[0].mxu0 %v1770
      %v1996 = vpop.f32.mrb[0].mxu0
      %v1997 = vadd.f32 0.0, %v1996
      %v1998 = vpop.f32.mrb[0].mxu0
      %1999 = vdwg.mxu0
      %v2000 = vadd.f32 %v1610, %v1842
      %v2001 = vadd.f32 %v1611, %v1847
      %v2002 = vadd.f32 %v1612, %v1852
      %v2003 = vadd.f32 %v1613, %v1857
      %v2004 = vadd.f32 %v1614, %v1862
      %v2005 = vadd.f32 %v1615, %v1867
      %v2006 = vadd.f32 %v1616, %v1872
      %v2007 = vadd.f32 %v1617, %v1877
      %v2008 = vadd.f32 %v1618, %v1882
      %v2009 = vadd.f32 %v1619, %v1887
      %v2010 = vadd.f32 %v1620, %v1892
      %v2011 = vadd.f32 %v1621, %v1897
      %v2012 = vadd.f32 %v1622, %v1902
      %v2013 = vadd.f32 %v1623, %v1907
      %v2014 = vadd.f32 %v1624, %v1912
      %v2015 = vadd.f32 %v1625, %v1917
      %v2016 = vadd.f32 %v1626, %v1922
      %v2017 = vadd.f32 %v1627, %v1927
      %v2018 = vadd.f32 %v1628, %v1932
      %v2019 = vadd.f32 %v1629, %v1937
      %v2020 = vadd.f32 %v1630, %v1942
      %v2021 = vadd.f32 %v1631, %v1947
      %v2022 = vadd.f32 %v1632, %v1952
      %v2023 = vadd.f32 %v1633, %v1957
      %v2024 = vadd.f32 %v1634, %v1962
      %v2025 = vadd.f32 %v1635, %v1967
      %v2026 = vadd.f32 %v1636, %v1972
      %v2027 = vadd.f32 %v1637, %v1977
      %v2028 = vadd.f32 %v1638, %v1982
      %v2029 = vadd.f32 %v1639, %v1987
      %v2030 = vadd.f32 %v1640, %v1992
      %v2031 = vadd.f32 %v1641, %v1997
      %v2032 = vld [vmem:[%s1251 + $0x2] sm:$0xff]
      %v2033 = vld [vmem:[%s1251 + $0xa] sm:$0xff]
      %v2034 = vld [vmem:[%s1251 + $0x1a] sm:$0xff]
      %v2035 = vld [vmem:[%s1251 + $0x22] sm:$0xff]
      %v2036 = vld [vmem:[%s1251 + $0x32] sm:$0xff]
      %v2037 = vld [vmem:[%s1251 + $0x3a] sm:$0xff]
      %v2038 = vld [vmem:[%s1251 + $0x4a] sm:$0xff]
      %v2039 = vld [vmem:[%s1251 + $0x52] sm:$0xff]
      %v2040 = vld [vmem:[%s1251 + $0x62] sm:$0xff]
      %v2041 = vld [vmem:[%s1251 + $0x6a] sm:$0xff]
      %v2042 = vld [vmem:[%s1251 + $0x7a] sm:$0xff]
      %v2043 = vld [vmem:[%s1251 + $0x82] sm:$0xff]
      %v2044 = vld [vmem:[%s1251 + $0x92] sm:$0xff]
      %v2045 = vld [vmem:[%s1251 + $0x9a] sm:$0xff]
      %v2046 = vld [vmem:[%s1251 + $0xaa] sm:$0xff]
      %v2047 = vld [vmem:[%s1251 + $0xb2] sm:$0xff]
      %v2048 = vld [vmem:[%s1251 + $0xc2] sm:$0xff]
      %v2049 = vld [vmem:[%s1251 + $0xca] sm:$0xff]
      %v2050 = vld [vmem:[%s1251 + $0xda] sm:$0xff]
      %v2051 = vld [vmem:[%s1251 + $0xe2] sm:$0xff]
      %v2052 = vld [vmem:[%s1251 + $0xf2] sm:$0xff]
      %v2053 = vld [vmem:[%s1251 + $0xfa] sm:$0xff]
      %v2054 = vld [vmem:[%s1251 + $0x10a] sm:$0xff]
      %v2055 = vld [vmem:[%s1251 + $0x112] sm:$0xff]
      %v2056 = vld [vmem:[%s1251 + $0x122] sm:$0xff]
      %v2057 = vld [vmem:[%s1251 + $0x12a] sm:$0xff]
      %v2058 = vld [vmem:[%s1251 + $0x13a] sm:$0xff]
      %v2059 = vld [vmem:[%s1251 + $0x142] sm:$0xff]
      %v2060 = vld [vmem:[%s1251 + $0x152] sm:$0xff]
      %v2061 = vld [vmem:[%s1251 + $0x15a] sm:$0xff]
      %v2062 = vld [vmem:[%s1251 + $0x16a] sm:$0xff]
      %v2063 = vld [vmem:[%s1251 + $0x172] sm:$0xff]
      %s2064 = scalar_lea.vmem %s1, 20
      %v2065 = vld [vmem:[%s2064] sm:$0xf]
      %v2067 = vsel %vm211, %v2032, 0
      %v2070 = vsel %vm211, %v2033, 0
      %v2073 = vsel %vm211, %v2034, 0
      %v2076 = vsel %vm211, %v2035, 0
      %v2079 = vsel %vm211, %v2036, 0
      %v2082 = vsel %vm211, %v2037, 0
      %v2085 = vsel %vm211, %v2038, 0
      %v2088 = vsel %vm211, %v2039, 0
      %v2091 = vsel %vm211, %v2040, 0
      %v2094 = vsel %vm211, %v2041, 0
      %v2097 = vsel %vm211, %v2042, 0
      %v2100 = vsel %vm211, %v2043, 0
      %v2103 = vsel %vm211, %v2044, 0
      %v2106 = vsel %vm211, %v2045, 0
      %v2109 = vsel %vm211, %v2046, 0
      %v2112 = vsel %vm211, %v2047, 0
      %v2115 = vsel %vm211, %v2048, 0
      %v2118 = vsel %vm211, %v2049, 0
      %v2121 = vsel %vm211, %v2050, 0
      %v2124 = vsel %vm211, %v2051, 0
      %v2127 = vsel %vm211, %v2052, 0
      %v2130 = vsel %vm211, %v2053, 0
      %v2133 = vsel %vm211, %v2054, 0
      %v2136 = vsel %vm211, %v2055, 0
      %v2139 = vsel %vm211, %v2056, 0
      %v2142 = vsel %vm211, %v2057, 0
      %v2145 = vsel %vm211, %v2058, 0
      %v2148 = vsel %vm211, %v2059, 0
      %v2151 = vsel %vm211, %v2060, 0
      %v2154 = vsel %vm211, %v2061, 0
      %v2157 = vsel %vm211, %v2062, 0
      %v2160 = vsel %vm211, %v2063, 0
      %v2163 = vsel %vm308, %v2065, 0
      %2165 = vmatprep.subr.mxu0 0.0
      %2166 = vmatpush1.msra.mxu0 %v2163
      %2167 = vmatprep.subr.mxu0 0.0
      %2168 = vmatpush1.msra.mxu0 0.0
      %2169 = vmatprep.subr.mxu0 0.0
      %2170 = vmatpush1.msra.mxu0 0.0
      %2171 = vmatprep.subr.mxu0 0.0
      %2172 = vmatpush1.msra.mxu0 0.0
      %2173 = vmatprep.subr.mxu0 0.0
      %2174 = vmatpush1.msra.mxu0 0.0
      %2175 = vmatprep.subr.mxu0 0.0
      %2176 = vmatpush1.msra.mxu0 0.0
      %2177 = vmatprep.subr.mxu0 0.0
      %2178 = vmatpush1.msra.mxu0 0.0
      %2179 = vmatprep.subr.mxu0 0.0
      %2180 = vmatpush1.msra.mxu0 0.0
      %2181 = vmatprep.subr.mxu0 0.0
      %2182 = vmatpush1.msra.mxu0 0.0
      %2183 = vmatprep.subr.mxu0 0.0
      %2184 = vmatpush1.msra.mxu0 0.0
      %2185 = vmatprep.subr.mxu0 0.0
      %2186 = vmatpush1.msra.mxu0 0.0
      %2187 = vmatprep.subr.mxu0 0.0
      %2188 = vmatpush1.msra.mxu0 0.0
      %2189 = vmatprep.subr.mxu0 0.0
      %2190 = vmatpush1.msra.mxu0 0.0
      %2191 = vmatprep.subr.mxu0 0.0
      %2192 = vmatpush1.msra.mxu0 0.0
      %2193 = vmatprep.subr.mxu0 0.0
      %2194 = vmatpush1.msra.mxu0 0.0
      %2195 = vmatprep.subr.mxu0 0.0
      %2196 = vmatpush1.msra.mxu0 0.0
      %2197 = vmatprep.subr.mxu0 0.0
      %2198 = vmatpush1.msra.mxu0 0.0
      %2199 = vmatprep.subr.mxu0 0.0
      %2200 = vmatpush1.msra.mxu0 0.0
      %2201 = vmatprep.subr.mxu0 0.0
      %2202 = vmatpush1.msra.mxu0 0.0
      %2203 = vmatprep.subr.mxu0 0.0
      %2204 = vmatpush1.msra.mxu0 0.0
      %2205 = vmatprep.subr.mxu0 0.0
      %2206 = vmatpush1.msra.mxu0 0.0
      %2207 = vmatprep.subr.mxu0 0.0
      %2208 = vmatpush1.msra.mxu0 0.0
      %2209 = vmatprep.subr.mxu0 0.0
      %2210 = vmatpush1.msra.mxu0 0.0
      %2211 = vmatprep.subr.mxu0 0.0
      %2212 = vmatpush1.msra.mxu0 0.0
      %2213 = vmatprep.subr.mxu0 0.0
      %2214 = vmatpush1.msra.mxu0 0.0
      %2215 = vmatprep.subr.mxu0 0.0
      %2216 = vmatpush1.msra.mxu0 0.0
      %2217 = vmatprep.subr.mxu0 0.0
      %2218 = vmatpush1.msra.mxu0 0.0
      %2219 = vmatprep.subr.mxu0 0.0
      %2220 = vmatpush1.msra.mxu0 0.0
      %2221 = vmatprep.subr.mxu0 0.0
      %2222 = vmatpush1.msra.mxu0 0.0
      %2223 = vmatprep.subr.mxu0 0.0
      %2224 = vmatpush1.msra.mxu0 0.0
      %2225 = vmatprep.subr.mxu0 0.0
      %2226 = vmatpush1.msra.mxu0 0.0
      %2227 = vmatprep.subr.mxu0 0.0
      %2228 = vmatpush1.msra.mxu0 0.0
      %2229 = vmatprep.mubr.f32.mxu0 0.0
      %2230 = vmatmul.mubr.f32.gmra.mrb[0].mxu0 %v2067
      %v2231 = vpop.f32.mrb[0].mxu0
      %v2232 = vadd.f32 0.0, %v2231
      %v2233 = vpop.f32.mrb[0].mxu0
      %2234 = vmatprep.mubr.f32.mxu0 0.0
      %2235 = vmatmul.mubr.f32.gmra.mrb[0].mxu0 %v2070
      %v2236 = vpop.f32.mrb[0].mxu0
      %v2237 = vadd.f32 0.0, %v2236
      %v2238 = vpop.f32.mrb[0].mxu0
      %2239 = vmatprep.mubr.f32.mxu0 0.0
      %2240 = vmatmul.mubr.f32.gmra.mrb[0].mxu0 %v2073
      %v2241 = vpop.f32.mrb[0].mxu0
      %v2242 = vadd.f32 0.0, %v2241
      %v2243 = vpop.f32.mrb[0].mxu0
      %2244 = vmatprep.mubr.f32.mxu0 0.0
      %2245 = vmatmul.mubr.f32.gmra.mrb[0].mxu0 %v2076
      %v2246 = vpop.f32.mrb[0].mxu0
      %v2247 = vadd.f32 0.0, %v2246
      %v2248 = vpop.f32.mrb[0].mxu0
      %2249 = vmatprep.mubr.f32.mxu0 0.0
      %2250 = vmatmul.mubr.f32.gmra.mrb[0].mxu0 %v2079
      %v2251 = vpop.f32.mrb[0].mxu0
      %v2252 = vadd.f32 0.0, %v2251
      %v2253 = vpop.f32.mrb[0].mxu0
      %2254 = vmatprep.mubr.f32.mxu0 0.0
      %2255 = vmatmul.mubr.f32.gmra.mrb[0].mxu0 %v2082
      %v2256 = vpop.f32.mrb[0].mxu0
      %v2257 = vadd.f32 0.0, %v2256
      %v2258 = vpop.f32.mrb[0].mxu0
      %2259 = vmatprep.mubr.f32.mxu0 0.0
      %2260 = vmatmul.mubr.f32.gmra.mrb[0].mxu0 %v2085
      %v2261 = vpop.f32.mrb[0].mxu0
      %v2262 = vadd.f32 0.0, %v2261
      %v2263 = vpop.f32.mrb[0].mxu0
      %2264 = vmatprep.mubr.f32.mxu0 0.0
      %2265 = vmatmul.mubr.f32.gmra.mrb[0].mxu0 %v2088
      %v2266 = vpop.f32.mrb[0].mxu0
      %v2267 = vadd.f32 0.0, %v2266
      %v2268 = vpop.f32.mrb[0].mxu0
      %2269 = vmatprep.mubr.f32.mxu0 0.0
      %2270 = vmatmul.mubr.f32.gmra.mrb[0].mxu0 %v2091
      %v2271 = vpop.f32.mrb[0].mxu0
      %v2272 = vadd.f32 0.0, %v2271
      %v2273 = vpop.f32.mrb[0].mxu0
      %2274 = vmatprep.mubr.f32.mxu0 0.0
      %2275 = vmatmul.mubr.f32.gmra.mrb[0].mxu0 %v2094
      %v2276 = vpop.f32.mrb[0].mxu0
      %v2277 = vadd.f32 0.0, %v2276
      %v2278 = vpop.f32.mrb[0].mxu0
      %2279 = vmatprep.mubr.f32.mxu0 0.0
      %2280 = vmatmul.mubr.f32.gmra.mrb[0].mxu0 %v2097
      %v2281 = vpop.f32.mrb[0].mxu0
      %v2282 = vadd.f32 0.0, %v2281
      %v2283 = vpop.f32.mrb[0].mxu0
      %2284 = vmatprep.mubr.f32.mxu0 0.0
      %2285 = vmatmul.mubr.f32.gmra.mrb[0].mxu0 %v2100
      %v2286 = vpop.f32.mrb[0].mxu0
      %v2287 = vadd.f32 0.0, %v2286
      %v2288 = vpop.f32.mrb[0].mxu0
      %2289 = vmatprep.mubr.f32.mxu0 0.0
      %2290 = vmatmul.mubr.f32.gmra.mrb[0].mxu0 %v2103
      %v2291 = vpop.f32.mrb[0].mxu0
      %v2292 = vadd.f32 0.0, %v2291
      %v2293 = vpop.f32.mrb[0].mxu0
      %2294 = vmatprep.mubr.f32.mxu0 0.0
      %2295 = vmatmul.mubr.f32.gmra.mrb[0].mxu0 %v2106
      %v2296 = vpop.f32.mrb[0].mxu0
      %v2297 = vadd.f32 0.0, %v2296
      %v2298 = vpop.f32.mrb[0].mxu0
      %2299 = vmatprep.mubr.f32.mxu0 0.0
      %2300 = vmatmul.mubr.f32.gmra.mrb[0].mxu0 %v2109
      %v2301 = vpop.f32.mrb[0].mxu0
      %v2302 = vadd.f32 0.0, %v2301
      %v2303 = vpop.f32.mrb[0].mxu0
      %2304 = vmatprep.mubr.f32.mxu0 0.0
      %2305 = vmatmul.mubr.f32.gmra.mrb[0].mxu0 %v2112
      %v2306 = vpop.f32.mrb[0].mxu0
      %v2307 = vadd.f32 0.0, %v2306
      %v2308 = vpop.f32.mrb[0].mxu0
      %2309 = vmatprep.mubr.f32.mxu0 0.0
      %2310 = vmatmul.mubr.f32.gmra.mrb[0].mxu0 %v2115
      %v2311 = vpop.f32.mrb[0].mxu0
      %v2312 = vadd.f32 0.0, %v2311
      %v2313 = vpop.f32.mrb[0].mxu0
      %2314 = vmatprep.mubr.f32.mxu0 0.0
      %2315 = vmatmul.mubr.f32.gmra.mrb[0].mxu0 %v2118
      %v2316 = vpop.f32.mrb[0].mxu0
      %v2317 = vadd.f32 0.0, %v2316
      %v2318 = vpop.f32.mrb[0].mxu0
      %2319 = vmatprep.mubr.f32.mxu0 0.0
      %2320 = vmatmul.mubr.f32.gmra.mrb[0].mxu0 %v2121
      %v2321 = vpop.f32.mrb[0].mxu0
      %v2322 = vadd.f32 0.0, %v2321
      %v2323 = vpop.f32.mrb[0].mxu0
      %2324 = vmatprep.mubr.f32.mxu0 0.0
      %2325 = vmatmul.mubr.f32.gmra.mrb[0].mxu0 %v2124
      %v2326 = vpop.f32.mrb[0].mxu0
      %v2327 = vadd.f32 0.0, %v2326
      %v2328 = vpop.f32.mrb[0].mxu0
      %2329 = vmatprep.mubr.f32.mxu0 0.0
      %2330 = vmatmul.mubr.f32.gmra.mrb[0].mxu0 %v2127
      %v2331 = vpop.f32.mrb[0].mxu0
      %v2332 = vadd.f32 0.0, %v2331
      %v2333 = vpop.f32.mrb[0].mxu0
      %2334 = vmatprep.mubr.f32.mxu0 0.0
      %2335 = vmatmul.mubr.f32.gmra.mrb[0].mxu0 %v2130
      %v2336 = vpop.f32.mrb[0].mxu0
      %v2337 = vadd.f32 0.0, %v2336
      %v2338 = vpop.f32.mrb[0].mxu0
      %2339 = vmatprep.mubr.f32.mxu0 0.0
      %2340 = vmatmul.mubr.f32.gmra.mrb[0].mxu0 %v2133
      %v2341 = vpop.f32.mrb[0].mxu0
      %v2342 = vadd.f32 0.0, %v2341
      %v2343 = vpop.f32.mrb[0].mxu0
      %2344 = vmatprep.mubr.f32.mxu0 0.0
      %2345 = vmatmul.mubr.f32.gmra.mrb[0].mxu0 %v2136
      %v2346 = vpop.f32.mrb[0].mxu0
      %v2347 = vadd.f32 0.0, %v2346
      %v2348 = vpop.f32.mrb[0].mxu0
      %2349 = vmatprep.mubr.f32.mxu0 0.0
      %2350 = vmatmul.mubr.f32.gmra.mrb[0].mxu0 %v2139
      %v2351 = vpop.f32.mrb[0].mxu0
      %v2352 = vadd.f32 0.0, %v2351
      %v2353 = vpop.f32.mrb[0].mxu0
      %2354 = vmatprep.mubr.f32.mxu0 0.0
      %2355 = vmatmul.mubr.f32.gmra.mrb[0].mxu0 %v2142
      %v2356 = vpop.f32.mrb[0].mxu0
      %v2357 = vadd.f32 0.0, %v2356
      %v2358 = vpop.f32.mrb[0].mxu0
      %2359 = vmatprep.mubr.f32.mxu0 0.0
      %2360 = vmatmul.mubr.f32.gmra.mrb[0].mxu0 %v2145
      %v2361 = vpop.f32.mrb[0].mxu0
      %v2362 = vadd.f32 0.0, %v2361
      %v2363 = vpop.f32.mrb[0].mxu0
      %2364 = vmatprep.mubr.f32.mxu0 0.0
      %2365 = vmatmul.mubr.f32.gmra.mrb[0].mxu0 %v2148
      %v2366 = vpop.f32.mrb[0].mxu0
      %v2367 = vadd.f32 0.0, %v2366
      %v2368 = vpop.f32.mrb[0].mxu0
      %2369 = vmatprep.mubr.f32.mxu0 0.0
      %2370 = vmatmul.mubr.f32.gmra.mrb[0].mxu0 %v2151
      %v2371 = vpop.f32.mrb[0].mxu0
      %v2372 = vadd.f32 0.0, %v2371
      %v2373 = vpop.f32.mrb[0].mxu0
      %2374 = vmatprep.mubr.f32.mxu0 0.0
      %2375 = vmatmul.mubr.f32.gmra.mrb[0].mxu0 %v2154
      %v2376 = vpop.f32.mrb[0].mxu0
      %v2377 = vadd.f32 0.0, %v2376
      %v2378 = vpop.f32.mrb[0].mxu0
      %2379 = vmatprep.mubr.f32.mxu0 0.0
      %2380 = vmatmul.mubr.f32.gmra.mrb[0].mxu0 %v2157
      %v2381 = vpop.f32.mrb[0].mxu0
      %v2382 = vadd.f32 0.0, %v2381
      %v2383 = vpop.f32.mrb[0].mxu0
      %2384 = vmatprep.mubr.f32.mxu0 0.0
      %2385 = vmatmul.mubr.f32.gmra.mrb[0].mxu0 %v2160
      %v2386 = vpop.f32.mrb[0].mxu0
      %v2387 = vadd.f32 0.0, %v2386
      %v2388 = vpop.f32.mrb[0].mxu0
      %2389 = vdwg.mxu0
      %v2390 = vadd.f32 %v2000, %v2232
      %v2391 = vadd.f32 %v2001, %v2237
      %v2392 = vadd.f32 %v2002, %v2242
      %v2393 = vadd.f32 %v2003, %v2247
      %v2394 = vadd.f32 %v2004, %v2252
      %v2395 = vadd.f32 %v2005, %v2257
      %v2396 = vadd.f32 %v2006, %v2262
      %v2397 = vadd.f32 %v2007, %v2267
      %v2398 = vadd.f32 %v2008, %v2272
      %v2399 = vadd.f32 %v2009, %v2277
      %v2400 = vadd.f32 %v2010, %v2282
      %v2401 = vadd.f32 %v2011, %v2287
      %v2402 = vadd.f32 %v2012, %v2292
      %v2403 = vadd.f32 %v2013, %v2297
      %v2404 = vadd.f32 %v2014, %v2302
      %v2405 = vadd.f32 %v2015, %v2307
      %v2406 = vadd.f32 %v2016, %v2312
      %v2407 = vadd.f32 %v2017, %v2317
      %v2408 = vadd.f32 %v2018, %v2322
      %v2409 = vadd.f32 %v2019, %v2327
      %v2410 = vadd.f32 %v2020, %v2332
      %v2411 = vadd.f32 %v2021, %v2337
      %v2412 = vadd.f32 %v2022, %v2342
      %v2413 = vadd.f32 %v2023, %v2347
      %v2414 = vadd.f32 %v2024, %v2352
      %v2415 = vadd.f32 %v2025, %v2357
      %v2416 = vadd.f32 %v2026, %v2362
      %v2417 = vadd.f32 %v2027, %v2367
      %v2418 = vadd.f32 %v2028, %v2372
      %v2419 = vadd.f32 %v2029, %v2377
      %v2420 = vadd.f32 %v2030, %v2382
      %v2421 = vadd.f32 %v2031, %v2387
      %s2422 = scalar_lea.vmem %s138, 48
      %v2423 = vld [vmem:[%s2422] sm:$0xff]
      %v2424 = vld [vmem:[%s2422 + $0x8] sm:$0xff]
      %v2425 = vld [vmem:[%s2422 + $0x18] sm:$0xff]
      %v2426 = vld [vmem:[%s2422 + $0x20] sm:$0xff]
      %v2427 = vld [vmem:[%s2422 + $0x30] sm:$0xff]
      %v2428 = vld [vmem:[%s2422 + $0x38] sm:$0xff]
      %v2429 = vld [vmem:[%s2422 + $0x48] sm:$0xff]
      %v2430 = vld [vmem:[%s2422 + $0x50] sm:$0xff]
      %v2431 = vld [vmem:[%s2422 + $0x60] sm:$0xff]
      %v2432 = vld [vmem:[%s2422 + $0x68] sm:$0xff]
      %v2433 = vld [vmem:[%s2422 + $0x78] sm:$0xff]
      %v2434 = vld [vmem:[%s2422 + $0x80] sm:$0xff]
      %v2435 = vld [vmem:[%s2422 + $0x90] sm:$0xff]
      %v2436 = vld [vmem:[%s2422 + $0x98] sm:$0xff]
      %v2437 = vld [vmem:[%s2422 + $0xa8] sm:$0xff]
      %v2438 = vld [vmem:[%s2422 + $0xb0] sm:$0xff]
      %v2439 = vld [vmem:[%s2422 + $0xc0] sm:$0xff]
      %v2440 = vld [vmem:[%s2422 + $0xc8] sm:$0xff]
      %v2441 = vld [vmem:[%s2422 + $0xd8] sm:$0xff]
      %v2442 = vld [vmem:[%s2422 + $0xe0] sm:$0xff]
      %v2443 = vld [vmem:[%s2422 + $0xf0] sm:$0xff]
      %v2444 = vld [vmem:[%s2422 + $0xf8] sm:$0xff]
      %v2445 = vld [vmem:[%s2422 + $0x108] sm:$0xff]
      %v2446 = vld [vmem:[%s2422 + $0x110] sm:$0xff]
      %v2447 = vld [vmem:[%s2422 + $0x120] sm:$0xff]
      %v2448 = vld [vmem:[%s2422 + $0x128] sm:$0xff]
      %v2449 = vld [vmem:[%s2422 + $0x138] sm:$0xff]
      %v2450 = vld [vmem:[%s2422 + $0x140] sm:$0xff]
      %v2451 = vld [vmem:[%s2422 + $0x150] sm:$0xff]
      %v2452 = vld [vmem:[%s2422 + $0x158] sm:$0xff]
      %v2453 = vld [vmem:[%s2422 + $0x168] sm:$0xff]
      %v2454 = vld [vmem:[%s2422 + $0x170] sm:$0xff]
      %s2455 = scalar_lea.vmem %s1, 24
      %v2456 = vld [vmem:[%s2455] sm:$0xf]
      %v2458 = vsel %vm211, %v2423, 0
      %v2461 = vsel %vm211, %v2424, 0
      %v2464 = vsel %vm211, %v2425, 0
      %v2467 = vsel %vm211, %v2426, 0
      %v2470 = vsel %vm211, %v2427, 0
      %v2473 = vsel %vm211, %v2428, 0
      %v2476 = vsel %vm211, %v2429, 0
      %v2479 = vsel %vm211, %v2430, 0
      %v2482 = vsel %vm211, %v2431, 0
      %v2485 = vsel %vm211, %v2432, 0
      %v2488 = vsel %vm211, %v2433, 0
      %v2491 = vsel %vm211, %v2434, 0
      %v2494 = vsel %vm211, %v2435, 0
      %v2497 = vsel %vm211, %v2436, 0
      %v2500 = vsel %vm211, %v2437, 0
      %v2503 = vsel %vm211, %v2438, 0
      %v2506 = vsel %vm211, %v2439, 0
      %v2509 = vsel %vm211, %v2440, 0
      %v2512 = vsel %vm211, %v2441, 0
      %v2515 = vsel %vm211, %v2442, 0
      %v2518 = vsel %vm211, %v2443, 0
      %v2521 = vsel %vm211, %v2444, 0
      %v2524 = vsel %vm211, %v2445, 0
      %v2527 = vsel %vm211, %v2446, 0
      %v2530 = vsel %vm211, %v2447, 0
      %v2533 = vsel %vm211, %v2448, 0
      %v2536 = vsel %vm211, %v2449, 0
      %v2539 = vsel %vm211, %v2450, 0
      %v2542 = vsel %vm211, %v2451, 0
      %v2545 = vsel %vm211, %v2452, 0
      %v2548 = vsel %vm211, %v2453, 0
      %v2551 = vsel %vm211, %v2454, 0
      %v2554 = vsel %vm308, %v2456, 0
      %2556 = vmatprep.subr.mxu0 0.0
      %2557 = vmatpush1.msra.mxu0 %v2554
      %2558 = vmatprep.subr.mxu0 0.0
      %2559 = vmatpush1.msra.mxu0 0.0
      %2560 = vmatprep.subr.mxu0 0.0
      %2561 = vmatpush1.msra.mxu0 0.0
      %2562 = vmatprep.subr.mxu0 0.0
      %2563 = vmatpush1.msra.mxu0 0.0
      %2564 = vmatprep.subr.mxu0 0.0
      %2565 = vmatpush1.msra.mxu0 0.0
      %2566 = vmatprep.subr.mxu0 0.0
      %2567 = vmatpush1.msra.mxu0 0.0
      %2568 = vmatprep.subr.mxu0 0.0
      %2569 = vmatpush1.msra.mxu0 0.0
      %2570 = vmatprep.subr.mxu0 0.0
      %2571 = vmatpush1.msra.mxu0 0.0
      %2572 = vmatprep.subr.mxu0 0.0
      %2573 = vmatpush1.msra.mxu0 0.0
      %2574 = vmatprep.subr.mxu0 0.0
      %2575 = vmatpush1.msra.mxu0 0.0
      %2576 = vmatprep.subr.mxu0 0.0
      %2577 = vmatpush1.msra.mxu0 0.0
      %2578 = vmatprep.subr.mxu0 0.0
      %2579 = vmatpush1.msra.mxu0 0.0
      %2580 = vmatprep.subr.mxu0 0.0
      %2581 = vmatpush1.msra.mxu0 0.0
      %2582 = vmatprep.subr.mxu0 0.0
      %2583 = vmatpush1.msra.mxu0 0.0
      %2584 = vmatprep.subr.mxu0 0.0
      %2585 = vmatpush1.msra.mxu0 0.0
      %2586 = vmatprep.subr.mxu0 0.0
      %2587 = vmatpush1.msra.mxu0 0.0
      %2588 = vmatprep.subr.mxu0 0.0
      %2589 = vmatpush1.msra.mxu0 0.0
      %2590 = vmatprep.subr.mxu0 0.0
      %2591 = vmatpush1.msra.mxu0 0.0
      %2592 = vmatprep.subr.mxu0 0.0
      %2593 = vmatpush1.msra.mxu0 0.0
      %2594 = vmatprep.subr.mxu0 0.0
      %2595 = vmatpush1.msra.mxu0 0.0
      %2596 = vmatprep.subr.mxu0 0.0
      %2597 = vmatpush1.msra.mxu0 0.0
      %2598 = vmatprep.subr.mxu0 0.0
      %2599 = vmatpush1.msra.mxu0 0.0
      %2600 = vmatprep.subr.mxu0 0.0
      %2601 = vmatpush1.msra.mxu0 0.0
      %2602 = vmatprep.subr.mxu0 0.0
      %2603 = vmatpush1.msra.mxu0 0.0
      %2604 = vmatprep.subr.mxu0 0.0
      %2605 = vmatpush1.msra.mxu0 0.0
      %2606 = vmatprep.subr.mxu0 0.0
      %2607 = vmatpush1.msra.mxu0 0.0
      %2608 = vmatprep.subr.mxu0 0.0
      %2609 = vmatpush1.msra.mxu0 0.0
      %2610 = vmatprep.subr.mxu0 0.0
      %2611 = vmatpush1.msra.mxu0 0.0
      %2612 = vmatprep.subr.mxu0 0.0
      %2613 = vmatpush1.msra.mxu0 0.0
      %2614 = vmatprep.subr.mxu0 0.0
      %2615 = vmatpush1.msra.mxu0 0.0
      %2616 = vmatprep.subr.mxu0 0.0
      %2617 = vmatpush1.msra.mxu0 0.0
      %2618 = vmatprep.subr.mxu0 0.0
      %2619 = vmatpush1.msra.mxu0 0.0
      %2620 = vmatprep.mubr.f32.mxu0 0.0
      %2621 = vmatmul.mubr.f32.gmra.mrb[0].mxu0 %v2458
      %v2622 = vpop.f32.mrb[0].mxu0
      %v2623 = vadd.f32 0.0, %v2622
      %v2624 = vpop.f32.mrb[0].mxu0
      %2625 = vmatprep.mubr.f32.mxu0 0.0
      %2626 = vmatmul.mubr.f32.gmra.mrb[0].mxu0 %v2461
      %v2627 = vpop.f32.mrb[0].mxu0
      %v2628 = vadd.f32 0.0, %v2627
      %v2629 = vpop.f32.mrb[0].mxu0
      %2630 = vmatprep.mubr.f32.mxu0 0.0
      %2631 = vmatmul.mubr.f32.gmra.mrb[0].mxu0 %v2464
      %v2632 = vpop.f32.mrb[0].mxu0
      %v2633 = vadd.f32 0.0, %v2632
      %v2634 = vpop.f32.mrb[0].mxu0
      %2635 = vmatprep.mubr.f32.mxu0 0.0
      %2636 = vmatmul.mubr.f32.gmra.mrb[0].mxu0 %v2467
      %v2637 = vpop.f32.mrb[0].mxu0
      %v2638 = vadd.f32 0.0, %v2637
      %v2639 = vpop.f32.mrb[0].mxu0
      %2640 = vmatprep.mubr.f32.mxu0 0.0
      %2641 = vmatmul.mubr.f32.gmra.mrb[0].mxu0 %v2470
      %v2642 = vpop.f32.mrb[0].mxu0
      %v2643 = vadd.f32 0.0, %v2642
      %v2644 = vpop.f32.mrb[0].mxu0
      %2645 = vmatprep.mubr.f32.mxu0 0.0
      %2646 = vmatmul.mubr.f32.gmra.mrb[0].mxu0 %v2473
      %v2647 = vpop.f32.mrb[0].mxu0
      %v2648 = vadd.f32 0.0, %v2647
      %v2649 = vpop.f32.mrb[0].mxu0
      %2650 = vmatprep.mubr.f32.mxu0 0.0
      %2651 = vmatmul.mubr.f32.gmra.mrb[0].mxu0 %v2476
      %v2652 = vpop.f32.mrb[0].mxu0
      %v2653 = vadd.f32 0.0, %v2652
      %v2654 = vpop.f32.mrb[0].mxu0
      %2655 = vmatprep.mubr.f32.mxu0 0.0
      %2656 = vmatmul.mubr.f32.gmra.mrb[0].mxu0 %v2479
      %v2657 = vpop.f32.mrb[0].mxu0
      %v2658 = vadd.f32 0.0, %v2657
      %v2659 = vpop.f32.mrb[0].mxu0
      %2660 = vmatprep.mubr.f32.mxu0 0.0
      %2661 = vmatmul.mubr.f32.gmra.mrb[0].mxu0 %v2482
      %v2662 = vpop.f32.mrb[0].mxu0
      %v2663 = vadd.f32 0.0, %v2662
      %v2664 = vpop.f32.mrb[0].mxu0
      %2665 = vmatprep.mubr.f32.mxu0 0.0
      %2666 = vmatmul.mubr.f32.gmra.mrb[0].mxu0 %v2485
      %v2667 = vpop.f32.mrb[0].mxu0
      %v2668 = vadd.f32 0.0, %v2667
      %v2669 = vpop.f32.mrb[0].mxu0
      %2670 = vmatprep.mubr.f32.mxu0 0.0
      %2671 = vmatmul.mubr.f32.gmra.mrb[0].mxu0 %v2488
      %v2672 = vpop.f32.mrb[0].mxu0
      %v2673 = vadd.f32 0.0, %v2672
      %v2674 = vpop.f32.mrb[0].mxu0
      %2675 = vmatprep.mubr.f32.mxu0 0.0
      %2676 = vmatmul.mubr.f32.gmra.mrb[0].mxu0 %v2491
      %v2677 = vpop.f32.mrb[0].mxu0
      %v2678 = vadd.f32 0.0, %v2677
      %v2679 = vpop.f32.mrb[0].mxu0
      %2680 = vmatprep.mubr.f32.mxu0 0.0
      %2681 = vmatmul.mubr.f32.gmra.mrb[0].mxu0 %v2494
      %v2682 = vpop.f32.mrb[0].mxu0
      %v2683 = vadd.f32 0.0, %v2682
      %v2684 = vpop.f32.mrb[0].mxu0
      %2685 = vmatprep.mubr.f32.mxu0 0.0
      %2686 = vmatmul.mubr.f32.gmra.mrb[0].mxu0 %v2497
      %v2687 = vpop.f32.mrb[0].mxu0
      %v2688 = vadd.f32 0.0, %v2687
      %v2689 = vpop.f32.mrb[0].mxu0
      %2690 = vmatprep.mubr.f32.mxu0 0.0
      %2691 = vmatmul.mubr.f32.gmra.mrb[0].mxu0 %v2500
      %v2692 = vpop.f32.mrb[0].mxu0
      %v2693 = vadd.f32 0.0, %v2692
      %v2694 = vpop.f32.mrb[0].mxu0
      %2695 = vmatprep.mubr.f32.mxu0 0.0
      %2696 = vmatmul.mubr.f32.gmra.mrb[0].mxu0 %v2503
      %v2697 = vpop.f32.mrb[0].mxu0
      %v2698 = vadd.f32 0.0, %v2697
      %v2699 = vpop.f32.mrb[0].mxu0
      %2700 = vmatprep.mubr.f32.mxu0 0.0
      %2701 = vmatmul.mubr.f32.gmra.mrb[0].mxu0 %v2506
      %v2702 = vpop.f32.mrb[0].mxu0
      %v2703 = vadd.f32 0.0, %v2702
      %v2704 = vpop.f32.mrb[0].mxu0
      %2705 = vmatprep.mubr.f32.mxu0 0.0
      %2706 = vmatmul.mubr.f32.gmra.mrb[0].mxu0 %v2509
      %v2707 = vpop.f32.mrb[0].mxu0
      %v2708 = vadd.f32 0.0, %v2707
      %v2709 = vpop.f32.mrb[0].mxu0
      %2710 = vmatprep.mubr.f32.mxu0 0.0
      %2711 = vmatmul.mubr.f32.gmra.mrb[0].mxu0 %v2512
      %v2712 = vpop.f32.mrb[0].mxu0
      %v2713 = vadd.f32 0.0, %v2712
      %v2714 = vpop.f32.mrb[0].mxu0
      %2715 = vmatprep.mubr.f32.mxu0 0.0
      %2716 = vmatmul.mubr.f32.gmra.mrb[0].mxu0 %v2515
      %v2717 = vpop.f32.mrb[0].mxu0
      %v2718 = vadd.f32 0.0, %v2717
      %v2719 = vpop.f32.mrb[0].mxu0
      %2720 = vmatprep.mubr.f32.mxu0 0.0
      %2721 = vmatmul.mubr.f32.gmra.mrb[0].mxu0 %v2518
      %v2722 = vpop.f32.mrb[0].mxu0
      %v2723 = vadd.f32 0.0, %v2722
      %v2724 = vpop.f32.mrb[0].mxu0
      %2725 = vmatprep.mubr.f32.mxu0 0.0
      %2726 = vmatmul.mubr.f32.gmra.mrb[0].mxu0 %v2521
      %v2727 = vpop.f32.mrb[0].mxu0
      %v2728 = vadd.f32 0.0, %v2727
      %v2729 = vpop.f32.mrb[0].mxu0
      %2730 = vmatprep.mubr.f32.mxu0 0.0
      %2731 = vmatmul.mubr.f32.gmra.mrb[0].mxu0 %v2524
      %v2732 = vpop.f32.mrb[0].mxu0
      %v2733 = vadd.f32 0.0, %v2732
      %v2734 = vpop.f32.mrb[0].mxu0
      %2735 = vmatprep.mubr.f32.mxu0 0.0
      %2736 = vmatmul.mubr.f32.gmra.mrb[0].mxu0 %v2527
      %v2737 = vpop.f32.mrb[0].mxu0
      %v2738 = vadd.f32 0.0, %v2737
      %v2739 = vpop.f32.mrb[0].mxu0
      %2740 = vmatprep.mubr.f32.mxu0 0.0
      %2741 = vmatmul.mubr.f32.gmra.mrb[0].mxu0 %v2530
      %v2742 = vpop.f32.mrb[0].mxu0
      %v2743 = vadd.f32 0.0, %v2742
      %v2744 = vpop.f32.mrb[0].mxu0
      %2745 = vmatprep.mubr.f32.mxu0 0.0
      %2746 = vmatmul.mubr.f32.gmra.mrb[0].mxu0 %v2533
      %v2747 = vpop.f32.mrb[0].mxu0
      %v2748 = vadd.f32 0.0, %v2747
      %v2749 = vpop.f32.mrb[0].mxu0
      %2750 = vmatprep.mubr.f32.mxu0 0.0
      %2751 = vmatmul.mubr.f32.gmra.mrb[0].mxu0 %v2536
      %v2752 = vpop.f32.mrb[0].mxu0
      %v2753 = vadd.f32 0.0, %v2752
      %v2754 = vpop.f32.mrb[0].mxu0
      %2755 = vmatprep.mubr.f32.mxu0 0.0
      %2756 = vmatmul.mubr.f32.gmra.mrb[0].mxu0 %v2539
      %v2757 = vpop.f32.mrb[0].mxu0
      %v2758 = vadd.f32 0.0, %v2757
      %v2759 = vpop.f32.mrb[0].mxu0
      %2760 = vmatprep.mubr.f32.mxu0 0.0
      %2761 = vmatmul.mubr.f32.gmra.mrb[0].mxu0 %v2542
      %v2762 = vpop.f32.mrb[0].mxu0
      %v2763 = vadd.f32 0.0, %v2762
      %v2764 = vpop.f32.mrb[0].mxu0
      %2765 = vmatprep.mubr.f32.mxu0 0.0
      %2766 = vmatmul.mubr.f32.gmra.mrb[0].mxu0 %v2545
      %v2767 = vpop.f32.mrb[0].mxu0
      %v2768 = vadd.f32 0.0, %v2767
      %v2769 = vpop.f32.mrb[0].mxu0
      %2770 = vmatprep.mubr.f32.mxu0 0.0
      %2771 = vmatmul.mubr.f32.gmra.mrb[0].mxu0 %v2548
      %v2772 = vpop.f32.mrb[0].mxu0
      %v2773 = vadd.f32 0.0, %v2772
      %v2774 = vpop.f32.mrb[0].mxu0
      %2775 = vmatprep.mubr.f32.mxu0 0.0
      %2776 = vmatmul.mubr.f32.gmra.mrb[0].mxu0 %v2551
      %v2777 = vpop.f32.mrb[0].mxu0
      %v2778 = vadd.f32 0.0, %v2777
      %v2779 = vpop.f32.mrb[0].mxu0
      %2780 = vdwg.mxu0
      %v2781 = vadd.f32 %v2390, %v2623
      %v2782 = vadd.f32 %v2391, %v2628
      %v2783 = vadd.f32 %v2392, %v2633
      %v2784 = vadd.f32 %v2393, %v2638
      %v2785 = vadd.f32 %v2394, %v2643
      %v2786 = vadd.f32 %v2395, %v2648
      %v2787 = vadd.f32 %v2396, %v2653
      %v2788 = vadd.f32 %v2397, %v2658
      %v2789 = vadd.f32 %v2398, %v2663
      %v2790 = vadd.f32 %v2399, %v2668
      %v2791 = vadd.f32 %v2400, %v2673
      %v2792 = vadd.f32 %v2401, %v2678
      %v2793 = vadd.f32 %v2402, %v2683
      %v2794 = vadd.f32 %v2403, %v2688
      %v2795 = vadd.f32 %v2404, %v2693
      %v2796 = vadd.f32 %v2405, %v2698
      %v2797 = vadd.f32 %v2406, %v2703
      %v2798 = vadd.f32 %v2407, %v2708
      %v2799 = vadd.f32 %v2408, %v2713
      %v2800 = vadd.f32 %v2409, %v2718
      %v2801 = vadd.f32 %v2410, %v2723
      %v2802 = vadd.f32 %v2411, %v2728
      %v2803 = vadd.f32 %v2412, %v2733
      %v2804 = vadd.f32 %v2413, %v2738
      %v2805 = vadd.f32 %v2414, %v2743
      %v2806 = vadd.f32 %v2415, %v2748
      %v2807 = vadd.f32 %v2416, %v2753
      %v2808 = vadd.f32 %v2417, %v2758
      %v2809 = vadd.f32 %v2418, %v2763
      %v2810 = vadd.f32 %v2419, %v2768
      %v2811 = vadd.f32 %v2420, %v2773
      %v2812 = vadd.f32 %v2421, %v2778
      %v2813 = vld [vmem:[%s2422 + $0x1] sm:$0xff]
      %v2814 = vld [vmem:[%s2422 + $0x9] sm:$0xff]
      %v2815 = vld [vmem:[%s2422 + $0x19] sm:$0xff]
      %v2816 = vld [vmem:[%s2422 + $0x21] sm:$0xff]
      %v2817 = vld [vmem:[%s2422 + $0x31] sm:$0xff]
      %v2818 = vld [vmem:[%s2422 + $0x39] sm:$0xff]
      %v2819 = vld [vmem:[%s2422 + $0x49] sm:$0xff]
      %v2820 = vld [vmem:[%s2422 + $0x51] sm:$0xff]
      %v2821 = vld [vmem:[%s2422 + $0x61] sm:$0xff]
      %v2822 = vld [vmem:[%s2422 + $0x69] sm:$0xff]
      %v2823 = vld [vmem:[%s2422 + $0x79] sm:$0xff]
      %v2824 = vld [vmem:[%s2422 + $0x81] sm:$0xff]
      %v2825 = vld [vmem:[%s2422 + $0x91] sm:$0xff]
      %v2826 = vld [vmem:[%s2422 + $0x99] sm:$0xff]
      %v2827 = vld [vmem:[%s2422 + $0xa9] sm:$0xff]
      %v2828 = vld [vmem:[%s2422 + $0xb1] sm:$0xff]
      %v2829 = vld [vmem:[%s2422 + $0xc1] sm:$0xff]
      %v2830 = vld [vmem:[%s2422 + $0xc9] sm:$0xff]
      %v2831 = vld [vmem:[%s2422 + $0xd9] sm:$0xff]
      %v2832 = vld [vmem:[%s2422 + $0xe1] sm:$0xff]
      %v2833 = vld [vmem:[%s2422 + $0xf1] sm:$0xff]
      %v2834 = vld [vmem:[%s2422 + $0xf9] sm:$0xff]
      %v2835 = vld [vmem:[%s2422 + $0x109] sm:$0xff]
      %v2836 = vld [vmem:[%s2422 + $0x111] sm:$0xff]
      %v2837 = vld [vmem:[%s2422 + $0x121] sm:$0xff]
      %v2838 = vld [vmem:[%s2422 + $0x129] sm:$0xff]
      %v2839 = vld [vmem:[%s2422 + $0x139] sm:$0xff]
      %v2840 = vld [vmem:[%s2422 + $0x141] sm:$0xff]
      %v2841 = vld [vmem:[%s2422 + $0x151] sm:$0xff]
      %v2842 = vld [vmem:[%s2422 + $0x159] sm:$0xff]
      %v2843 = vld [vmem:[%s2422 + $0x169] sm:$0xff]
      %v2844 = vld [vmem:[%s2422 + $0x171] sm:$0xff]
      %s2845 = scalar_lea.vmem %s1, 28
      %v2846 = vld [vmem:[%s2845] sm:$0xf]
      %v2848 = vsel %vm211, %v2813, 0
      %v2851 = vsel %vm211, %v2814, 0
      %v2854 = vsel %vm211, %v2815, 0
      %v2857 = vsel %vm211, %v2816, 0
      %v2860 = vsel %vm211, %v2817, 0
      %v2863 = vsel %vm211, %v2818, 0
      %v2866 = vsel %vm211, %v2819, 0
      %v2869 = vsel %vm211, %v2820, 0
      %v2872 = vsel %vm211, %v2821, 0
      %v2875 = vsel %vm211, %v2822, 0
      %v2878 = vsel %vm211, %v2823, 0
      %v2881 = vsel %vm211, %v2824, 0
      %v2884 = vsel %vm211, %v2825, 0
      %v2887 = vsel %vm211, %v2826, 0
      %v2890 = vsel %vm211, %v2827, 0
      %v2893 = vsel %vm211, %v2828, 0
      %v2896 = vsel %vm211, %v2829, 0
      %v2899 = vsel %vm211, %v2830, 0
      %v2902 = vsel %vm211, %v2831, 0
      %v2905 = vsel %vm211, %v2832, 0
      %v2908 = vsel %vm211, %v2833, 0
      %v2911 = vsel %vm211, %v2834, 0
      %v2914 = vsel %vm211, %v2835, 0
      %v2917 = vsel %vm211, %v2836, 0
      %v2920 = vsel %vm211, %v2837, 0
      %v2923 = vsel %vm211, %v2838, 0
      %v2926 = vsel %vm211, %v2839, 0
      %v2929 = vsel %vm211, %v2840, 0
      %v2932 = vsel %vm211, %v2841, 0
      %v2935 = vsel %vm211, %v2842, 0
      %v2938 = vsel %vm211, %v2843, 0
      %v2941 = vsel %vm211, %v2844, 0
      %v2944 = vsel %vm308, %v2846, 0
      %2946 = vmatprep.subr.mxu0 0.0
      %2947 = vmatpush1.msra.mxu0 %v2944
      %2948 = vmatprep.subr.mxu0 0.0
      %2949 = vmatpush1.msra.mxu0 0.0
      %2950 = vmatprep.subr.mxu0 0.0
      %2951 = vmatpush1.msra.mxu0 0.0
      %2952 = vmatprep.subr.mxu0 0.0
      %2953 = vmatpush1.msra.mxu0 0.0
      %2954 = vmatprep.subr.mxu0 0.0
      %2955 = vmatpush1.msra.mxu0 0.0
      %2956 = vmatprep.subr.mxu0 0.0
      %2957 = vmatpush1.msra.mxu0 0.0
      %2958 = vmatprep.subr.mxu0 0.0
      %2959 = vmatpush1.msra.mxu0 0.0
      %2960 = vmatprep.subr.mxu0 0.0
      %2961 = vmatpush1.msra.mxu0 0.0
      %2962 = vmatprep.subr.mxu0 0.0
      %2963 = vmatpush1.msra.mxu0 0.0
      %2964 = vmatprep.subr.mxu0 0.0
      %2965 = vmatpush1.msra.mxu0 0.0
      %2966 = vmatprep.subr.mxu0 0.0
      %2967 = vmatpush1.msra.mxu0 0.0
      %2968 = vmatprep.subr.mxu0 0.0
      %2969 = vmatpush1.msra.mxu0 0.0
      %2970 = vmatprep.subr.mxu0 0.0
      %2971 = vmatpush1.msra.mxu0 0.0
      %2972 = vmatprep.subr.mxu0 0.0
      %2973 = vmatpush1.msra.mxu0 0.0
      %2974 = vmatprep.subr.mxu0 0.0
      %2975 = vmatpush1.msra.mxu0 0.0
      %2976 = vmatprep.subr.mxu0 0.0
      %2977 = vmatpush1.msra.mxu0 0.0
      %2978 = vmatprep.subr.mxu0 0.0
      %2979 = vmatpush1.msra.mxu0 0.0
      %2980 = vmatprep.subr.mxu0 0.0
      %2981 = vmatpush1.msra.mxu0 0.0
      %2982 = vmatprep.subr.mxu0 0.0
      %2983 = vmatpush1.msra.mxu0 0.0
      %2984 = vmatprep.subr.mxu0 0.0
      %2985 = vmatpush1.msra.mxu0 0.0
      %2986 = vmatprep.subr.mxu0 0.0
      %2987 = vmatpush1.msra.mxu0 0.0
      %2988 = vmatprep.subr.mxu0 0.0
      %2989 = vmatpush1.msra.mxu0 0.0
      %2990 = vmatprep.subr.mxu0 0.0
      %2991 = vmatpush1.msra.mxu0 0.0
      %2992 = vmatprep.subr.mxu0 0.0
      %2993 = vmatpush1.msra.mxu0 0.0
      %2994 = vmatprep.subr.mxu0 0.0
      %2995 = vmatpush1.msra.mxu0 0.0
      %2996 = vmatprep.subr.mxu0 0.0
      %2997 = vmatpush1.msra.mxu0 0.0
      %2998 = vmatprep.subr.mxu0 0.0
      %2999 = vmatpush1.msra.mxu0 0.0
      %3000 = vmatprep.subr.mxu0 0.0
      %3001 = vmatpush1.msra.mxu0 0.0
      %3002 = vmatprep.subr.mxu0 0.0
      %3003 = vmatpush1.msra.mxu0 0.0
      %3004 = vmatprep.subr.mxu0 0.0
      %3005 = vmatpush1.msra.mxu0 0.0
      %3006 = vmatprep.subr.mxu0 0.0
      %3007 = vmatpush1.msra.mxu0 0.0
      %3008 = vmatprep.subr.mxu0 0.0
      %3009 = vmatpush1.msra.mxu0 0.0
      %3010 = vmatprep.mubr.f32.mxu0 0.0
      %3011 = vmatmul.mubr.f32.gmra.mrb[0].mxu0 %v2848
      %v3012 = vpop.f32.mrb[0].mxu0
      %v3013 = vadd.f32 0.0, %v3012
      %v3014 = vpop.f32.mrb[0].mxu0
      %3015 = vmatprep.mubr.f32.mxu0 0.0
      %3016 = vmatmul.mubr.f32.gmra.mrb[0].mxu0 %v2851
      %v3017 = vpop.f32.mrb[0].mxu0
      %v3018 = vadd.f32 0.0, %v3017
      %v3019 = vpop.f32.mrb[0].mxu0
      %3020 = vmatprep.mubr.f32.mxu0 0.0
      %3021 = vmatmul.mubr.f32.gmra.mrb[0].mxu0 %v2854
      %v3022 = vpop.f32.mrb[0].mxu0
      %v3023 = vadd.f32 0.0, %v3022
      %v3024 = vpop.f32.mrb[0].mxu0
      %3025 = vmatprep.mubr.f32.mxu0 0.0
      %3026 = vmatmul.mubr.f32.gmra.mrb[0].mxu0 %v2857
      %v3027 = vpop.f32.mrb[0].mxu0
      %v3028 = vadd.f32 0.0, %v3027
      %v3029 = vpop.f32.mrb[0].mxu0
      %3030 = vmatprep.mubr.f32.mxu0 0.0
      %3031 = vmatmul.mubr.f32.gmra.mrb[0].mxu0 %v2860
      %v3032 = vpop.f32.mrb[0].mxu0
      %v3033 = vadd.f32 0.0, %v3032
      %v3034 = vpop.f32.mrb[0].mxu0
      %3035 = vmatprep.mubr.f32.mxu0 0.0
      %3036 = vmatmul.mubr.f32.gmra.mrb[0].mxu0 %v2863
      %v3037 = vpop.f32.mrb[0].mxu0
      %v3038 = vadd.f32 0.0, %v3037
      %v3039 = vpop.f32.mrb[0].mxu0
      %3040 = vmatprep.mubr.f32.mxu0 0.0
      %3041 = vmatmul.mubr.f32.gmra.mrb[0].mxu0 %v2866
      %v3042 = vpop.f32.mrb[0].mxu0
      %v3043 = vadd.f32 0.0, %v3042
      %v3044 = vpop.f32.mrb[0].mxu0
      %3045 = vmatprep.mubr.f32.mxu0 0.0
      %3046 = vmatmul.mubr.f32.gmra.mrb[0].mxu0 %v2869
      %v3047 = vpop.f32.mrb[0].mxu0
      %v3048 = vadd.f32 0.0, %v3047
      %v3049 = vpop.f32.mrb[0].mxu0
      %3050 = vmatprep.mubr.f32.mxu0 0.0
      %3051 = vmatmul.mubr.f32.gmra.mrb[0].mxu0 %v2872
      %v3052 = vpop.f32.mrb[0].mxu0
      %v3053 = vadd.f32 0.0, %v3052
      %v3054 = vpop.f32.mrb[0].mxu0
      %3055 = vmatprep.mubr.f32.mxu0 0.0
      %3056 = vmatmul.mubr.f32.gmra.mrb[0].mxu0 %v2875
      %v3057 = vpop.f32.mrb[0].mxu0
      %v3058 = vadd.f32 0.0, %v3057
      %v3059 = vpop.f32.mrb[0].mxu0
      %3060 = vmatprep.mubr.f32.mxu0 0.0
      %3061 = vmatmul.mubr.f32.gmra.mrb[0].mxu0 %v2878
      %v3062 = vpop.f32.mrb[0].mxu0
      %v3063 = vadd.f32 0.0, %v3062
      %v3064 = vpop.f32.mrb[0].mxu0
      %3065 = vmatprep.mubr.f32.mxu0 0.0
      %3066 = vmatmul.mubr.f32.gmra.mrb[0].mxu0 %v2881
      %v3067 = vpop.f32.mrb[0].mxu0
      %v3068 = vadd.f32 0.0, %v3067
      %v3069 = vpop.f32.mrb[0].mxu0
      %3070 = vmatprep.mubr.f32.mxu0 0.0
      %3071 = vmatmul.mubr.f32.gmra.mrb[0].mxu0 %v2884
      %v3072 = vpop.f32.mrb[0].mxu0
      %v3073 = vadd.f32 0.0, %v3072
      %v3074 = vpop.f32.mrb[0].mxu0
      %3075 = vmatprep.mubr.f32.mxu0 0.0
      %3076 = vmatmul.mubr.f32.gmra.mrb[0].mxu0 %v2887
      %v3077 = vpop.f32.mrb[0].mxu0
      %v3078 = vadd.f32 0.0, %v3077
      %v3079 = vpop.f32.mrb[0].mxu0
      %3080 = vmatprep.mubr.f32.mxu0 0.0
      %3081 = vmatmul.mubr.f32.gmra.mrb[0].mxu0 %v2890
      %v3082 = vpop.f32.mrb[0].mxu0
      %v3083 = vadd.f32 0.0, %v3082
      %v3084 = vpop.f32.mrb[0].mxu0
      %3085 = vmatprep.mubr.f32.mxu0 0.0
      %3086 = vmatmul.mubr.f32.gmra.mrb[0].mxu0 %v2893
      %v3087 = vpop.f32.mrb[0].mxu0
      %v3088 = vadd.f32 0.0, %v3087
      %v3089 = vpop.f32.mrb[0].mxu0
      %3090 = vmatprep.mubr.f32.mxu0 0.0
      %3091 = vmatmul.mubr.f32.gmra.mrb[0].mxu0 %v2896
      %v3092 = vpop.f32.mrb[0].mxu0
      %v3093 = vadd.f32 0.0, %v3092
      %v3094 = vpop.f32.mrb[0].mxu0
      %3095 = vmatprep.mubr.f32.mxu0 0.0
      %3096 = vmatmul.mubr.f32.gmra.mrb[0].mxu0 %v2899
      %v3097 = vpop.f32.mrb[0].mxu0
      %v3098 = vadd.f32 0.0, %v3097
      %v3099 = vpop.f32.mrb[0].mxu0
      %3100 = vmatprep.mubr.f32.mxu0 0.0
      %3101 = vmatmul.mubr.f32.gmra.mrb[0].mxu0 %v2902
      %v3102 = vpop.f32.mrb[0].mxu0
      %v3103 = vadd.f32 0.0, %v3102
      %v3104 = vpop.f32.mrb[0].mxu0
      %3105 = vmatprep.mubr.f32.mxu0 0.0
      %3106 = vmatmul.mubr.f32.gmra.mrb[0].mxu0 %v2905
      %v3107 = vpop.f32.mrb[0].mxu0
      %v3108 = vadd.f32 0.0, %v3107
      %v3109 = vpop.f32.mrb[0].mxu0
      %3110 = vmatprep.mubr.f32.mxu0 0.0
      %3111 = vmatmul.mubr.f32.gmra.mrb[0].mxu0 %v2908
      %v3112 = vpop.f32.mrb[0].mxu0
      %v3113 = vadd.f32 0.0, %v3112
      %v3114 = vpop.f32.mrb[0].mxu0
      %3115 = vmatprep.mubr.f32.mxu0 0.0
      %3116 = vmatmul.mubr.f32.gmra.mrb[0].mxu0 %v2911
      %v3117 = vpop.f32.mrb[0].mxu0
      %v3118 = vadd.f32 0.0, %v3117
      %v3119 = vpop.f32.mrb[0].mxu0
      %3120 = vmatprep.mubr.f32.mxu0 0.0
      %3121 = vmatmul.mubr.f32.gmra.mrb[0].mxu0 %v2914
      %v3122 = vpop.f32.mrb[0].mxu0
      %v3123 = vadd.f32 0.0, %v3122
      %v3124 = vpop.f32.mrb[0].mxu0
      %3125 = vmatprep.mubr.f32.mxu0 0.0
      %3126 = vmatmul.mubr.f32.gmra.mrb[0].mxu0 %v2917
      %v3127 = vpop.f32.mrb[0].mxu0
      %v3128 = vadd.f32 0.0, %v3127
      %v3129 = vpop.f32.mrb[0].mxu0
      %3130 = vmatprep.mubr.f32.mxu0 0.0
      %3131 = vmatmul.mubr.f32.gmra.mrb[0].mxu0 %v2920
      %v3132 = vpop.f32.mrb[0].mxu0
      %v3133 = vadd.f32 0.0, %v3132
      %v3134 = vpop.f32.mrb[0].mxu0
      %3135 = vmatprep.mubr.f32.mxu0 0.0
      %3136 = vmatmul.mubr.f32.gmra.mrb[0].mxu0 %v2923
      %v3137 = vpop.f32.mrb[0].mxu0
      %v3138 = vadd.f32 0.0, %v3137
      %v3139 = vpop.f32.mrb[0].mxu0
      %3140 = vmatprep.mubr.f32.mxu0 0.0
      %3141 = vmatmul.mubr.f32.gmra.mrb[0].mxu0 %v2926
      %v3142 = vpop.f32.mrb[0].mxu0
      %v3143 = vadd.f32 0.0, %v3142
      %v3144 = vpop.f32.mrb[0].mxu0
      %3145 = vmatprep.mubr.f32.mxu0 0.0
      %3146 = vmatmul.mubr.f32.gmra.mrb[0].mxu0 %v2929
      %v3147 = vpop.f32.mrb[0].mxu0
      %v3148 = vadd.f32 0.0, %v3147
      %v3149 = vpop.f32.mrb[0].mxu0
      %3150 = vmatprep.mubr.f32.mxu0 0.0
      %3151 = vmatmul.mubr.f32.gmra.mrb[0].mxu0 %v2932
      %v3152 = vpop.f32.mrb[0].mxu0
      %v3153 = vadd.f32 0.0, %v3152
      %v3154 = vpop.f32.mrb[0].mxu0
      %3155 = vmatprep.mubr.f32.mxu0 0.0
      %3156 = vmatmul.mubr.f32.gmra.mrb[0].mxu0 %v2935
      %v3157 = vpop.f32.mrb[0].mxu0
      %v3158 = vadd.f32 0.0, %v3157
      %v3159 = vpop.f32.mrb[0].mxu0
      %3160 = vmatprep.mubr.f32.mxu0 0.0
      %3161 = vmatmul.mubr.f32.gmra.mrb[0].mxu0 %v2938
      %v3162 = vpop.f32.mrb[0].mxu0
      %v3163 = vadd.f32 0.0, %v3162
      %v3164 = vpop.f32.mrb[0].mxu0
      %3165 = vmatprep.mubr.f32.mxu0 0.0
      %3166 = vmatmul.mubr.f32.gmra.mrb[0].mxu0 %v2941
      %v3167 = vpop.f32.mrb[0].mxu0
      %v3168 = vadd.f32 0.0, %v3167
      %v3169 = vpop.f32.mrb[0].mxu0
      %3170 = vdwg.mxu0
      %v3171 = vadd.f32 %v2781, %v3013
      %v3172 = vadd.f32 %v2782, %v3018
      %v3173 = vadd.f32 %v2783, %v3023
      %v3174 = vadd.f32 %v2784, %v3028
      %v3175 = vadd.f32 %v2785, %v3033
      %v3176 = vadd.f32 %v2786, %v3038
      %v3177 = vadd.f32 %v2787, %v3043
      %v3178 = vadd.f32 %v2788, %v3048
      %v3179 = vadd.f32 %v2789, %v3053
      %v3180 = vadd.f32 %v2790, %v3058
      %v3181 = vadd.f32 %v2791, %v3063
      %v3182 = vadd.f32 %v2792, %v3068
      %v3183 = vadd.f32 %v2793, %v3073
      %v3184 = vadd.f32 %v2794, %v3078
      %v3185 = vadd.f32 %v2795, %v3083
      %v3186 = vadd.f32 %v2796, %v3088
      %v3187 = vadd.f32 %v2797, %v3093
      %v3188 = vadd.f32 %v2798, %v3098
      %v3189 = vadd.f32 %v2799, %v3103
      %v3190 = vadd.f32 %v2800, %v3108
      %v3191 = vadd.f32 %v2801, %v3113
      %v3192 = vadd.f32 %v2802, %v3118
      %v3193 = vadd.f32 %v2803, %v3123
      %v3194 = vadd.f32 %v2804, %v3128
      %v3195 = vadd.f32 %v2805, %v3133
      %v3196 = vadd.f32 %v2806, %v3138
      %v3197 = vadd.f32 %v2807, %v3143
      %v3198 = vadd.f32 %v2808, %v3148
      %v3199 = vadd.f32 %v2809, %v3153
      %v3200 = vadd.f32 %v2810, %v3158
      %v3201 = vadd.f32 %v2811, %v3163
      %v3202 = vadd.f32 %v2812, %v3168
      %v3203 = vld [vmem:[%s2422 + $0x2] sm:$0xff]
      %v3204 = vld [vmem:[%s2422 + $0xa] sm:$0xff]
      %v3205 = vld [vmem:[%s2422 + $0x1a] sm:$0xff]
      %v3206 = vld [vmem:[%s2422 + $0x22] sm:$0xff]
      %v3207 = vld [vmem:[%s2422 + $0x32] sm:$0xff]
      %v3208 = vld [vmem:[%s2422 + $0x3a] sm:$0xff]
      %v3209 = vld [vmem:[%s2422 + $0x4a] sm:$0xff]
      %v3210 = vld [vmem:[%s2422 + $0x52] sm:$0xff]
      %v3211 = vld [vmem:[%s2422 + $0x62] sm:$0xff]
      %v3212 = vld [vmem:[%s2422 + $0x6a] sm:$0xff]
      %v3213 = vld [vmem:[%s2422 + $0x7a] sm:$0xff]
      %v3214 = vld [vmem:[%s2422 + $0x82] sm:$0xff]
      %v3215 = vld [vmem:[%s2422 + $0x92] sm:$0xff]
      %v3216 = vld [vmem:[%s2422 + $0x9a] sm:$0xff]
      %v3217 = vld [vmem:[%s2422 + $0xaa] sm:$0xff]
      %v3218 = vld [vmem:[%s2422 + $0xb2] sm:$0xff]
      %v3219 = vld [vmem:[%s2422 + $0xc2] sm:$0xff]
      %v3220 = vld [vmem:[%s2422 + $0xca] sm:$0xff]
      %v3221 = vld [vmem:[%s2422 + $0xda] sm:$0xff]
      %v3222 = vld [vmem:[%s2422 + $0xe2] sm:$0xff]
      %v3223 = vld [vmem:[%s2422 + $0xf2] sm:$0xff]
      %v3224 = vld [vmem:[%s2422 + $0xfa] sm:$0xff]
      %v3225 = vld [vmem:[%s2422 + $0x10a] sm:$0xff]
      %v3226 = vld [vmem:[%s2422 + $0x112] sm:$0xff]
      %v3227 = vld [vmem:[%s2422 + $0x122] sm:$0xff]
      %v3228 = vld [vmem:[%s2422 + $0x12a] sm:$0xff]
      %v3229 = vld [vmem:[%s2422 + $0x13a] sm:$0xff]
      %v3230 = vld [vmem:[%s2422 + $0x142] sm:$0xff]
      %v3231 = vld [vmem:[%s2422 + $0x152] sm:$0xff]
      %v3232 = vld [vmem:[%s2422 + $0x15a] sm:$0xff]
      %v3233 = vld [vmem:[%s2422 + $0x16a] sm:$0xff]
      %v3234 = vld [vmem:[%s2422 + $0x172] sm:$0xff]
      %s3235 = scalar_lea.vmem %s1, 32
      %v3236 = vld [vmem:[%s3235] sm:$0xf]
      %v3238 = vsel %vm211, %v3203, 0
      %v3241 = vsel %vm211, %v3204, 0
      %v3244 = vsel %vm211, %v3205, 0
      %v3247 = vsel %vm211, %v3206, 0
      %v3250 = vsel %vm211, %v3207, 0
      %v3253 = vsel %vm211, %v3208, 0
      %v3256 = vsel %vm211, %v3209, 0
      %v3259 = vsel %vm211, %v3210, 0
      %v3262 = vsel %vm211, %v3211, 0
      %v3265 = vsel %vm211, %v3212, 0
      %v3268 = vsel %vm211, %v3213, 0
      %v3271 = vsel %vm211, %v3214, 0
      %v3274 = vsel %vm211, %v3215, 0
      %v3277 = vsel %vm211, %v3216, 0
      %v3280 = vsel %vm211, %v3217, 0
      %v3283 = vsel %vm211, %v3218, 0
      %v3286 = vsel %vm211, %v3219, 0
      %v3289 = vsel %vm211, %v3220, 0
      %v3292 = vsel %vm211, %v3221, 0
      %v3295 = vsel %vm211, %v3222, 0
      %v3298 = vsel %vm211, %v3223, 0
      %v3301 = vsel %vm211, %v3224, 0
      %v3304 = vsel %vm211, %v3225, 0
      %v3307 = vsel %vm211, %v3226, 0
      %v3310 = vsel %vm211, %v3227, 0
      %v3313 = vsel %vm211, %v3228, 0
      %v3316 = vsel %vm211, %v3229, 0
      %v3319 = vsel %vm211, %v3230, 0
      %v3322 = vsel %vm211, %v3231, 0
      %v3325 = vsel %vm211, %v3232, 0
      %v3328 = vsel %vm211, %v3233, 0
      %v3331 = vsel %vm211, %v3234, 0
      %v3334 = vsel %vm308, %v3236, 0
      %3336 = vmatprep.subr.mxu0 0.0
      %3337 = vmatpush1.msra.mxu0 %v3334
      %3338 = vmatprep.subr.mxu0 0.0
      %3339 = vmatpush1.msra.mxu0 0.0
      %3340 = vmatprep.subr.mxu0 0.0
      %3341 = vmatpush1.msra.mxu0 0.0
      %3342 = vmatprep.subr.mxu0 0.0
      %3343 = vmatpush1.msra.mxu0 0.0
      %3344 = vmatprep.subr.mxu0 0.0
      %3345 = vmatpush1.msra.mxu0 0.0
      %3346 = vmatprep.subr.mxu0 0.0
      %3347 = vmatpush1.msra.mxu0 0.0
      %3348 = vmatprep.subr.mxu0 0.0
      %3349 = vmatpush1.msra.mxu0 0.0
      %3350 = vmatprep.subr.mxu0 0.0
      %3351 = vmatpush1.msra.mxu0 0.0
      %3352 = vmatprep.subr.mxu0 0.0
      %3353 = vmatpush1.msra.mxu0 0.0
      %3354 = vmatprep.subr.mxu0 0.0
      %3355 = vmatpush1.msra.mxu0 0.0
      %3356 = vmatprep.subr.mxu0 0.0
      %3357 = vmatpush1.msra.mxu0 0.0
      %3358 = vmatprep.subr.mxu0 0.0
      %3359 = vmatpush1.msra.mxu0 0.0
      %3360 = vmatprep.subr.mxu0 0.0
      %3361 = vmatpush1.msra.mxu0 0.0
      %3362 = vmatprep.subr.mxu0 0.0
      %3363 = vmatpush1.msra.mxu0 0.0
      %3364 = vmatprep.subr.mxu0 0.0
      %3365 = vmatpush1.msra.mxu0 0.0
      %3366 = vmatprep.subr.mxu0 0.0
      %3367 = vmatpush1.msra.mxu0 0.0
      %3368 = vmatprep.subr.mxu0 0.0
      %3369 = vmatpush1.msra.mxu0 0.0
      %3370 = vmatprep.subr.mxu0 0.0
      %3371 = vmatpush1.msra.mxu0 0.0
      %3372 = vmatprep.subr.mxu0 0.0
      %3373 = vmatpush1.msra.mxu0 0.0
      %3374 = vmatprep.subr.mxu0 0.0
      %3375 = vmatpush1.msra.mxu0 0.0
      %3376 = vmatprep.subr.mxu0 0.0
      %3377 = vmatpush1.msra.mxu0 0.0
      %3378 = vmatprep.subr.mxu0 0.0
      %3379 = vmatpush1.msra.mxu0 0.0
      %3380 = vmatprep.subr.mxu0 0.0
      %3381 = vmatpush1.msra.mxu0 0.0
      %3382 = vmatprep.subr.mxu0 0.0
      %3383 = vmatpush1.msra.mxu0 0.0
      %3384 = vmatprep.subr.mxu0 0.0
      %3385 = vmatpush1.msra.mxu0 0.0
      %3386 = vmatprep.subr.mxu0 0.0
      %3387 = vmatpush1.msra.mxu0 0.0
      %3388 = vmatprep.subr.mxu0 0.0
      %3389 = vmatpush1.msra.mxu0 0.0
      %3390 = vmatprep.subr.mxu0 0.0
      %3391 = vmatpush1.msra.mxu0 0.0
      %3392 = vmatprep.subr.mxu0 0.0
      %3393 = vmatpush1.msra.mxu0 0.0
      %3394 = vmatprep.subr.mxu0 0.0
      %3395 = vmatpush1.msra.mxu0 0.0
      %3396 = vmatprep.subr.mxu0 0.0
      %3397 = vmatpush1.msra.mxu0 0.0
      %3398 = vmatprep.subr.mxu0 0.0
      %3399 = vmatpush1.msra.mxu0 0.0
      %3400 = vmatprep.mubr.f32.mxu0 0.0
      %3401 = vmatmul.mubr.f32.gmra.mrb[0].mxu0 %v3238
      %v3402 = vpop.f32.mrb[0].mxu0
      %v3403 = vadd.f32 0.0, %v3402
      %v3404 = vpop.f32.mrb[0].mxu0
      %3405 = vmatprep.mubr.f32.mxu0 0.0
      %3406 = vmatmul.mubr.f32.gmra.mrb[0].mxu0 %v3241
      %v3407 = vpop.f32.mrb[0].mxu0
      %v3408 = vadd.f32 0.0, %v3407
      %v3409 = vpop.f32.mrb[0].mxu0
      %3410 = vmatprep.mubr.f32.mxu0 0.0
      %3411 = vmatmul.mubr.f32.gmra.mrb[0].mxu0 %v3244
      %v3412 = vpop.f32.mrb[0].mxu0
      %v3413 = vadd.f32 0.0, %v3412
      %v3414 = vpop.f32.mrb[0].mxu0
      %3415 = vmatprep.mubr.f32.mxu0 0.0
      %3416 = vmatmul.mubr.f32.gmra.mrb[0].mxu0 %v3247
      %v3417 = vpop.f32.mrb[0].mxu0
      %v3418 = vadd.f32 0.0, %v3417
      %v3419 = vpop.f32.mrb[0].mxu0
      %3420 = vmatprep.mubr.f32.mxu0 0.0
      %3421 = vmatmul.mubr.f32.gmra.mrb[0].mxu0 %v3250
      %v3422 = vpop.f32.mrb[0].mxu0
      %v3423 = vadd.f32 0.0, %v3422
      %v3424 = vpop.f32.mrb[0].mxu0
      %3425 = vmatprep.mubr.f32.mxu0 0.0
      %3426 = vmatmul.mubr.f32.gmra.mrb[0].mxu0 %v3253
      %v3427 = vpop.f32.mrb[0].mxu0
      %v3428 = vadd.f32 0.0, %v3427
      %v3429 = vpop.f32.mrb[0].mxu0
      %3430 = vmatprep.mubr.f32.mxu0 0.0
      %3431 = vmatmul.mubr.f32.gmra.mrb[0].mxu0 %v3256
      %v3432 = vpop.f32.mrb[0].mxu0
      %v3433 = vadd.f32 0.0, %v3432
      %v3434 = vpop.f32.mrb[0].mxu0
      %3435 = vmatprep.mubr.f32.mxu0 0.0
      %3436 = vmatmul.mubr.f32.gmra.mrb[0].mxu0 %v3259
      %v3437 = vpop.f32.mrb[0].mxu0
      %v3438 = vadd.f32 0.0, %v3437
      %v3439 = vpop.f32.mrb[0].mxu0
      %3440 = vmatprep.mubr.f32.mxu0 0.0
      %3441 = vmatmul.mubr.f32.gmra.mrb[0].mxu0 %v3262
      %v3442 = vpop.f32.mrb[0].mxu0
      %v3443 = vadd.f32 0.0, %v3442
      %v3444 = vpop.f32.mrb[0].mxu0
      %3445 = vmatprep.mubr.f32.mxu0 0.0
      %3446 = vmatmul.mubr.f32.gmra.mrb[0].mxu0 %v3265
      %v3447 = vpop.f32.mrb[0].mxu0
      %v3448 = vadd.f32 0.0, %v3447
      %v3449 = vpop.f32.mrb[0].mxu0
      %3450 = vmatprep.mubr.f32.mxu0 0.0
      %3451 = vmatmul.mubr.f32.gmra.mrb[0].mxu0 %v3268
      %v3452 = vpop.f32.mrb[0].mxu0
      %v3453 = vadd.f32 0.0, %v3452
      %v3454 = vpop.f32.mrb[0].mxu0
      %3455 = vmatprep.mubr.f32.mxu0 0.0
      %3456 = vmatmul.mubr.f32.gmra.mrb[0].mxu0 %v3271
      %v3457 = vpop.f32.mrb[0].mxu0
      %v3458 = vadd.f32 0.0, %v3457
      %v3459 = vpop.f32.mrb[0].mxu0
      %3460 = vmatprep.mubr.f32.mxu0 0.0
      %3461 = vmatmul.mubr.f32.gmra.mrb[0].mxu0 %v3274
      %v3462 = vpop.f32.mrb[0].mxu0
      %v3463 = vadd.f32 0.0, %v3462
      %v3464 = vpop.f32.mrb[0].mxu0
      %3465 = vmatprep.mubr.f32.mxu0 0.0
      %3466 = vmatmul.mubr.f32.gmra.mrb[0].mxu0 %v3277
      %v3467 = vpop.f32.mrb[0].mxu0
      %v3468 = vadd.f32 0.0, %v3467
      %v3469 = vpop.f32.mrb[0].mxu0
      %3470 = vmatprep.mubr.f32.mxu0 0.0
      %3471 = vmatmul.mubr.f32.gmra.mrb[0].mxu0 %v3280
      %v3472 = vpop.f32.mrb[0].mxu0
      %v3473 = vadd.f32 0.0, %v3472
      %v3474 = vpop.f32.mrb[0].mxu0
      %3475 = vmatprep.mubr.f32.mxu0 0.0
      %3476 = vmatmul.mubr.f32.gmra.mrb[0].mxu0 %v3283
      %v3477 = vpop.f32.mrb[0].mxu0
      %v3478 = vadd.f32 0.0, %v3477
      %v3479 = vpop.f32.mrb[0].mxu0
      %3480 = vmatprep.mubr.f32.mxu0 0.0
      %3481 = vmatmul.mubr.f32.gmra.mrb[0].mxu0 %v3286
      %v3482 = vpop.f32.mrb[0].mxu0
      %v3483 = vadd.f32 0.0, %v3482
      %v3484 = vpop.f32.mrb[0].mxu0
      %3485 = vmatprep.mubr.f32.mxu0 0.0
      %3486 = vmatmul.mubr.f32.gmra.mrb[0].mxu0 %v3289
      %v3487 = vpop.f32.mrb[0].mxu0
      %v3488 = vadd.f32 0.0, %v3487
      %v3489 = vpop.f32.mrb[0].mxu0
      %3490 = vmatprep.mubr.f32.mxu0 0.0
      %3491 = vmatmul.mubr.f32.gmra.mrb[0].mxu0 %v3292
      %v3492 = vpop.f32.mrb[0].mxu0
      %v3493 = vadd.f32 0.0, %v3492
      %v3494 = vpop.f32.mrb[0].mxu0
      %3495 = vmatprep.mubr.f32.mxu0 0.0
      %3496 = vmatmul.mubr.f32.gmra.mrb[0].mxu0 %v3295
      %v3497 = vpop.f32.mrb[0].mxu0
      %v3498 = vadd.f32 0.0, %v3497
      %v3499 = vpop.f32.mrb[0].mxu0
      %3500 = vmatprep.mubr.f32.mxu0 0.0
      %3501 = vmatmul.mubr.f32.gmra.mrb[0].mxu0 %v3298
      %v3502 = vpop.f32.mrb[0].mxu0
      %v3503 = vadd.f32 0.0, %v3502
      %v3504 = vpop.f32.mrb[0].mxu0
      %3505 = vmatprep.mubr.f32.mxu0 0.0
      %3506 = vmatmul.mubr.f32.gmra.mrb[0].mxu0 %v3301
      %v3507 = vpop.f32.mrb[0].mxu0
      %v3508 = vadd.f32 0.0, %v3507
      %v3509 = vpop.f32.mrb[0].mxu0
      %3510 = vmatprep.mubr.f32.mxu0 0.0
      %3511 = vmatmul.mubr.f32.gmra.mrb[0].mxu0 %v3304
      %v3512 = vpop.f32.mrb[0].mxu0
      %v3513 = vadd.f32 0.0, %v3512
      %v3514 = vpop.f32.mrb[0].mxu0
      %3515 = vmatprep.mubr.f32.mxu0 0.0
      %3516 = vmatmul.mubr.f32.gmra.mrb[0].mxu0 %v3307
      %v3517 = vpop.f32.mrb[0].mxu0
      %v3518 = vadd.f32 0.0, %v3517
      %v3519 = vpop.f32.mrb[0].mxu0
      %3520 = vmatprep.mubr.f32.mxu0 0.0
      %3521 = vmatmul.mubr.f32.gmra.mrb[0].mxu0 %v3310
      %v3522 = vpop.f32.mrb[0].mxu0
      %v3523 = vadd.f32 0.0, %v3522
      %v3524 = vpop.f32.mrb[0].mxu0
      %3525 = vmatprep.mubr.f32.mxu0 0.0
      %3526 = vmatmul.mubr.f32.gmra.mrb[0].mxu0 %v3313
      %v3527 = vpop.f32.mrb[0].mxu0
      %v3528 = vadd.f32 0.0, %v3527
      %v3529 = vpop.f32.mrb[0].mxu0
      %3530 = vmatprep.mubr.f32.mxu0 0.0
      %3531 = vmatmul.mubr.f32.gmra.mrb[0].mxu0 %v3316
      %v3532 = vpop.f32.mrb[0].mxu0
      %v3533 = vadd.f32 0.0, %v3532
      %v3534 = vpop.f32.mrb[0].mxu0
      %3535 = vmatprep.mubr.f32.mxu0 0.0
      %3536 = vmatmul.mubr.f32.gmra.mrb[0].mxu0 %v3319
      %v3537 = vpop.f32.mrb[0].mxu0
      %v3538 = vadd.f32 0.0, %v3537
      %v3539 = vpop.f32.mrb[0].mxu0
      %3540 = vmatprep.mubr.f32.mxu0 0.0
      %3541 = vmatmul.mubr.f32.gmra.mrb[0].mxu0 %v3322
      %v3542 = vpop.f32.mrb[0].mxu0
      %v3543 = vadd.f32 0.0, %v3542
      %v3544 = vpop.f32.mrb[0].mxu0
      %3545 = vmatprep.mubr.f32.mxu0 0.0
      %3546 = vmatmul.mubr.f32.gmra.mrb[0].mxu0 %v3325
      %v3547 = vpop.f32.mrb[0].mxu0
      %v3548 = vadd.f32 0.0, %v3547
      %v3549 = vpop.f32.mrb[0].mxu0
      %3550 = vmatprep.mubr.f32.mxu0 0.0
      %3551 = vmatmul.mubr.f32.gmra.mrb[0].mxu0 %v3328
      %v3552 = vpop.f32.mrb[0].mxu0
      %v3553 = vadd.f32 0.0, %v3552
      %v3554 = vpop.f32.mrb[0].mxu0
      %3555 = vmatprep.mubr.f32.mxu0 0.0
      %3556 = vmatmul.mubr.f32.gmra.mrb[0].mxu0 %v3331
      %v3557 = vpop.f32.mrb[0].mxu0
      %v3558 = vadd.f32 0.0, %v3557
      %v3559 = vpop.f32.mrb[0].mxu0
      %3560 = vdwg.mxu0
      %v3561 = vadd.f32 %v3171, %v3403
      %v3562 = vadd.f32 %v3172, %v3408
      %v3563 = vadd.f32 %v3173, %v3413
      %v3564 = vadd.f32 %v3174, %v3418
      %v3565 = vadd.f32 %v3175, %v3423
      %v3566 = vadd.f32 %v3176, %v3428
      %v3567 = vadd.f32 %v3177, %v3433
      %v3568 = vadd.f32 %v3178, %v3438
      %v3569 = vadd.f32 %v3179, %v3443
      %v3570 = vadd.f32 %v3180, %v3448
      %v3571 = vadd.f32 %v3181, %v3453
      %v3572 = vadd.f32 %v3182, %v3458
      %v3573 = vadd.f32 %v3183, %v3463
      %v3574 = vadd.f32 %v3184, %v3468
      %v3575 = vadd.f32 %v3185, %v3473
      %v3576 = vadd.f32 %v3186, %v3478
      %v3577 = vadd.f32 %v3187, %v3483
      %v3578 = vadd.f32 %v3188, %v3488
      %v3579 = vadd.f32 %v3189, %v3493
      %v3580 = vadd.f32 %v3190, %v3498
      %v3581 = vadd.f32 %v3191, %v3503
      %v3582 = vadd.f32 %v3192, %v3508
      %v3583 = vadd.f32 %v3193, %v3513
      %v3584 = vadd.f32 %v3194, %v3518
      %v3585 = vadd.f32 %v3195, %v3523
      %v3586 = vadd.f32 %v3196, %v3528
      %v3587 = vadd.f32 %v3197, %v3533
      %v3588 = vadd.f32 %v3198, %v3538
      %v3589 = vadd.f32 %v3199, %v3543
      %v3590 = vadd.f32 %v3200, %v3548
      %v3591 = vadd.f32 %v3201, %v3553
      %v3592 = vadd.f32 %v3202, %v3558
      %vm3593 = vcmask 64512
      %3594 = vst.msk [vmem:[%s143] sm:$0xff] %vm3593, %v3561
      %3595 = vst.msk [vmem:[%s143 + $0x8] sm:$0xff] %vm3593, %v3562
      %3596 = vst.msk [vmem:[%s143 + $0x10] sm:$0xff] %vm3593, %v3563
      %3597 = vst.msk [vmem:[%s143 + $0x18] sm:$0xff] %vm3593, %v3564
      %3598 = vst.msk [vmem:[%s143 + $0x20] sm:$0xff] %vm3593, %v3565
      %3599 = vst.msk [vmem:[%s143 + $0x28] sm:$0xff] %vm3593, %v3566
      %3600 = vst.msk [vmem:[%s143 + $0x30] sm:$0xff] %vm3593, %v3567
      %3601 = vst.msk [vmem:[%s143 + $0x38] sm:$0xff] %vm3593, %v3568
      %3602 = vst.msk [vmem:[%s143 + $0x40] sm:$0xff] %vm3593, %v3569
      %3603 = vst.msk [vmem:[%s143 + $0x48] sm:$0xff] %vm3593, %v3570
      %3604 = vst.msk [vmem:[%s143 + $0x50] sm:$0xff] %vm3593, %v3571
      %3605 = vst.msk [vmem:[%s143 + $0x58] sm:$0xff] %vm3593, %v3572
      %3606 = vst.msk [vmem:[%s143 + $0x60] sm:$0xff] %vm3593, %v3573
      %3607 = vst.msk [vmem:[%s143 + $0x68] sm:$0xff] %vm3593, %v3574
      %3608 = vst.msk [vmem:[%s143 + $0x70] sm:$0xff] %vm3593, %v3575
      %3609 = vst.msk [vmem:[%s143 + $0x78] sm:$0xff] %vm3593, %v3576
      %3610 = vst.msk [vmem:[%s143 + $0x80] sm:$0xff] %vm3593, %v3577
      %3611 = vst.msk [vmem:[%s143 + $0x88] sm:$0xff] %vm3593, %v3578
      %3612 = vst.msk [vmem:[%s143 + $0x90] sm:$0xff] %vm3593, %v3579
      %3613 = vst.msk [vmem:[%s143 + $0x98] sm:$0xff] %vm3593, %v3580
      %3614 = vst.msk [vmem:[%s143 + $0xa0] sm:$0xff] %vm3593, %v3581
      %3615 = vst.msk [vmem:[%s143 + $0xa8] sm:$0xff] %vm3593, %v3582
      %3616 = vst.msk [vmem:[%s143 + $0xb0] sm:$0xff] %vm3593, %v3583
      %3617 = vst.msk [vmem:[%s143 + $0xb8] sm:$0xff] %vm3593, %v3584
      %3618 = vst.msk [vmem:[%s143 + $0xc0] sm:$0xff] %vm3593, %v3585
      %3619 = vst.msk [vmem:[%s143 + $0xc8] sm:$0xff] %vm3593, %v3586
      %3620 = vst.msk [vmem:[%s143 + $0xd0] sm:$0xff] %vm3593, %v3587
      %3621 = vst.msk [vmem:[%s143 + $0xd8] sm:$0xff] %vm3593, %v3588
      %3622 = vst.msk [vmem:[%s143 + $0xe0] sm:$0xff] %vm3593, %v3589
      %3623 = vst.msk [vmem:[%s143 + $0xe8] sm:$0xff] %vm3593, %v3590
      %3624 = vst.msk [vmem:[%s143 + $0xf0] sm:$0xff] %vm3593, %v3591
      %3625 = vst.msk [vmem:[%s143 + $0xf8] sm:$0xff] %vm3593, %v3592
      %p3626 = scmp.lt.s32.totalorder %s13, 1
      %s3627 = scalar_select %p3626, %s13, 1
      %s3628 = smul.addr %s3627, 32
      %s3629 = smul.addr %s3628, 8
      %s3630 = scalar_lea.vmem %s2, %s3629
      // Predicated region
      $region29: #{tpu_custom_call.1} parent=27 // pred_check
        %p3631 = pneg %p78
      $region30: #{tpu_custom_call.1} parent=27 // pred_check_branch
        %3633 = sbr.rel (%p3631) target = $region32
      $region31: #{tpu_custom_call.1} parent=27 // pred_region
        _
      $region32: #{tpu_custom_call.1} parent=27 // pred_fallthru
        _
    $region28: #{tpu_custom_call.1} parent=5 // pred_fallthru
      _
    %p3634 = scmp.le.s32.totalorder 2, %s8
    // Predicated region
    $region33: #{tpu_custom_call.1} parent=5 // pred_check
      %p3635 = pneg %p3634
    $region34: #{tpu_custom_call.1} parent=5 // pred_check_branch
      %3637 = sbr.rel (%p3635) target = $region36
    $region35: #{tpu_custom_call.1} parent=5 // pred_region
      %s3638 = ssub.s32 %s8, 2
      // Predicated region
      $region37: #{tpu_custom_call.1} parent=35 // pred_check
        %p3639 = pneg %p84
      $region38: #{tpu_custom_call.1} parent=35 // pred_check_branch
        %3641 = sbr.rel (%p3639) target = $region40
      $region39: #{tpu_custom_call.1} parent=35 // pred_region
        %p3642 = scmp.lt.s32.totalorder %s14, 1
        %s3643 = scalar_select %p3642, %s14, 1
        %s3644 = smul.addr %s3643, 32
        %s3645 = smul.addr %s3644, 8
        %s3646 = scalar_lea.vmem %s2, %s3645
      $region40: #{tpu_custom_call.1} parent=35 // pred_fallthru
        _
    $region36: #{tpu_custom_call.1} parent=5 // pred_fallthru
      _
  $region6: #{tpu_custom_call.1} parent=0 // loop_footer
    %s12 = sadd.s32 1, %s8
  $region7: #{tpu_custom_call.1} parent=0 // loop_footer_branch
    %7 = sbr.rel target = $region3
  $region8: #{tpu_custom_call.1} parent=0 // loop_exit
    _

</llo_original>
